<compile_context>
chip_gen: v6e
topology: v6e:2x2x1
jax: 0.10.0
libtpu: 0.0.40
codegen_flags: <defaults>
</compile_context>

<pallas_src>
import math
from functools import partial

import jax
import jax.numpy as jnp
from jax.experimental import pallas as pl
from jax.experimental.pallas import tpu as pltpu


def _layer_norm(x, w, b, eps=1e-5):
    # x: (N, E), w/b: (1, E) -- all f32
    mu = jnp.mean(x, axis=-1, keepdims=True)
    var = jnp.mean(jnp.square(x - mu), axis=-1, keepdims=True)
    return (x - mu) * jax.lax.rsqrt(var + eps) * w + b


def _gelu_exact(x):
    # matches torch.nn.GELU() default (erf-based, approximate='none')
    return 0.5 * x * (1.0 + jax.lax.erf(x * (1.0 / math.sqrt(2.0))))


def _attention_block_kernel(x_ref, wqkv_ref, bqkv_ref, wmats_ref, vecs_ref,
                            o_ref, *, num_heads):
    bb, E, T = x_ref.shape                       # bb samples per grid step
    hd = E // num_heads
    HB = bb * num_heads
    scale = 1.0 / math.sqrt(hd)

    # (bb, E, T) -> (bb, T, E) -> (N, E): in-VMEM minor-dim transpose (cheap XLU),
    # replaces the old wrapper-side XLA transpose + extra HBM round trip.
    x = jnp.swapaxes(x_ref[...], 1, 2).reshape(bb * T, E)

    vecs = vecs_ref[...]                         # packed (8, E) f32 vector params
    ln1_w, ln1_b = vecs[0:1], vecs[1:2]
    bo, ln2_w, ln2_b = vecs[2:3], vecs[3:4], vecs[4:5]
    b1, b2 = vecs[5:6], vecs[6:7]
    wmats = wmats_ref[...]                       # packed (3, E, E) bf16 weights
    wo_t, w1_t, w2_t = wmats[0], wmats[1], wmats[2]

    # --- pre-LN (f32) + fused QKV projection: one (N,E)x(E,3E) bf16 MXU pass ---
    x_ln = _layer_norm(x, ln1_w, ln1_b)
    qkv = jnp.dot(x_ln.astype(jnp.bfloat16), wqkv_ref[...],
                  preferred_element_type=jnp.float32)
    qkv = qkv + bqkv_ref[...]                    # (N, 3E) f32

    # --- head-major layout via one batched minor-dim transpose ---
    # (bb, T, 3E) -> (bb, 3E, T); rows [0:E)=Q^T, [E:2E)=K^T, [2E:3E)=V^T.
    # Remaining reshapes only split/merge leading & sublane dims (free).
    qkv_t = jnp.swapaxes(qkv.reshape(bb, T, 3 * E), 1, 2)
    q_t = qkv_t[:, 0 * E:1 * E, :].reshape(HB, hd, T).astype(jnp.bfloat16)
    k_t = qkv_t[:, 1 * E:2 * E, :].reshape(HB, hd, T).astype(jnp.bfloat16)
    v_t = qkv_t[:, 2 * E:3 * E, :].reshape(HB, hd, T).astype(jnp.bfloat16)

    # --- batched scaled-dot-product attention (samples x heads as batch) ---
    # Transposed-LHS contraction: s[b,t,t'] = sum_d q_t[b,d,t] * k_t[b,d,t']
    # (no extra Q transpose; the MXU takes the transposed LHS natively).
    s = jax.lax.dot_general(q_t, k_t, (((1,), (1,)), ((0,), (0,))),
                            preferred_element_type=jnp.float32) * scale
    s = s - jnp.max(s, axis=-1, keepdims=True)          # f32 softmax statistics
    p = jnp.exp(s)
    p = p * pl.reciprocal(jnp.sum(p, axis=-1, keepdims=True), approx=True)

    # o_t[b,d,t] = sum_s v_t[b,d,s] * p[b,t,s]  -> (HB, hd, T)
    o_t = jax.lax.dot_general(v_t, p.astype(jnp.bfloat16),
                              (((2,), (2,)), ((0,), (0,))),
                              preferred_element_type=jnp.float32)
    # TODO(synk): if bundle dumps show the HB tiny (hd x T) matmuls saturating
    # the vector-extended/XLU slots, move s/o_t to VPU broadcast-multiply+reduce.
    attn = jnp.swapaxes(o_t.reshape(bb, E, T), 1, 2).reshape(bb * T, E)

    # --- output projection + residual 1 ---
    attn = jnp.dot(attn.astype(jnp.bfloat16), wo_t,
                   preferred_element_type=jnp.float32) + bo
    attn = attn + x

    # --- feed-forward (LN -> Linear -> GELU -> Linear) + residual 2 ---
    h = _layer_norm(attn, ln2_w, ln2_b)
    h = jnp.dot(h.astype(jnp.bfloat16), w1_t,
                preferred_element_type=jnp.float32) + b1
    h = _gelu_exact(h)
    h = jnp.dot(h.astype(jnp.bfloat16), w2_t,
                preferred_element_type=jnp.float32) + b2
    out = h + attn

    # store in caller layout (bb, E, T): wrapper reshape to (B,C,M,T) is free
    o_ref[...] = jnp.swapaxes(out.reshape(bb, T, E), 1, 2).astype(o_ref.dtype)


def make_params(key, channels, mel_size):
    """Deterministic synthetic parameters mirroring the PyTorch module shapes."""
    E = channels * mel_size
    ks = jax.random.split(key, 8)
    w = lambda k, shape, s=0.05: (s * jax.random.normal(k, shape)).astype(jnp.float32)
    return dict(
        ln1_w=jnp.ones((E,), jnp.float32),
        ln1_b=jnp.zeros((E,), jnp.float32),
        in_proj_w=w(ks[0], (3 * E, E)),          # nn.MultiheadAttention.in_proj_weight
        in_proj_b=w(ks[1], (3 * E,)),
        out_proj_w=w(ks[2], (E, E)),             # out_proj.weight
        out_proj_b=w(ks[3], (E,)),
        ln2_w=jnp.ones((E,), jnp.float32),
        ln2_b=jnp.zeros((E,), jnp.float32),
        w1=w(ks[4], (E, E)), b1=w(ks[5], (E,)),
        w2=w(ks[6], (E, E)), b2=w(ks[7], (E,)),
    )


def _num_tensorcores_per_chip():
    """v7x exposes 2 TensorCores per chip; v5e/v6e expose 1."""
    try:
        kind = jax.devices()[0].device_kind.lower()
    except Exception:
        return 1
    return 2 if ("v7" in kind or "7x" in kind) else 1


def self_attention_forward(x, params, channels, mel_size, time_size,
                           num_heads=8, grid_blocks=None):
    B = x.shape[0]
    E = channels * mel_size
    T = time_size
    hd = E // num_heads

    # Single-TC chips (v5e/v6e): one fat block (the grid is a serial loop there,
    # so splitting only adds per-step overhead and underfills the MXU).
    # Dual-TC v7x: 2-wide "parallel" grid over batch halves, one per core.
    if grid_blocks is None:
        grid_blocks = 2 if (_num_tensorcores_per_chip() == 2
                            and B >= 2 and B % 2 == 0) else 1
    # TODO(synk): on v7x with B == 1 / odd B, shard the grid over the head-batch
    # (bb*num_heads) or over T query blocks instead so both TensorCores get work.
    assert B % grid_blocks == 0
    bb = B // grid_blocks

    xs = x.reshape(B, E, T)                      # pure view; no wrapper transpose

    # fused / packed parameters; square weights in bf16 (MXU operands + 2x less DMA)
    wqkv_t = params["in_proj_w"].T.astype(jnp.bfloat16)           # (E, 3E)
    bqkv = params["in_proj_b"].reshape(1, 3 * E)                  # (1, 3E) f32
    wmats = jnp.stack([params["out_proj_w"].T, params["w1"].T,
                       params["w2"].T]).astype(jnp.bfloat16)      # (3, E, E)
    vecs = jnp.stack([params["ln1_w"], params["ln1_b"], params["out_proj_b"],
                      params["ln2_w"], params["ln2_b"], params["b1"],
                      params["b2"], jnp.zeros((E,), jnp.float32)])  # (8, E) f32

    flops = (2 * B * T * E * 3 * E                       # fused QKV
             + 2 * 2 * B * num_heads * T * T * hd        # scores + P@V
             + 3 * 2 * B * T * E * E)                    # out-proj + 2x FFN
    transcendentals = B * num_heads * T * T + B * T * E  # softmax exp + gelu erf
    bytes_accessed = (4 * 2 * B * T * E                  # f32 activations in/out
                      + 2 * (int(wqkv_t.size) + int(wmats.size))   # bf16 weights
                      + 4 * (int(bqkv.size) + int(vecs.size)))     # f32 vectors

    # Explicit VMEM budget: double-buffered activation blocks + resident packed
    # weights + generous slack for in-kernel temporaries. Capped under the
    # per-generation physical VMEM (64 MiB on v7x, 128 MiB on v5e/v6e).
    act_block = bb * T * E * 4
    weight_bytes = 2 * (int(wqkv_t.size) + int(wmats.size)) \
        + 4 * (int(bqkv.size) + int(vecs.size))
    temp_bytes = 24 * act_block + 12 * bb * num_heads * T * T * 4
    est = 2 * (2 * act_block) + 2 * weight_bytes + temp_bytes
    vmem_cap = (56 << 20) if _num_tensorcores_per_chip() == 2 else (112 << 20)
    vmem_limit = int(min(vmem_cap, max(32 << 20, 2 * est)))
    # NOTE(perf): for production E on v7x, additionally single-buffer the
    # grid-invariant weight specs (pipeline_mode=pl.Buffered(1)) to halve their
    # resident VMEM footprint; their block index never changes so no DMA cost.

    out = pl.pallas_call(
        partial(_attention_block_kernel, num_heads=num_heads),
        out_shape=jax.ShapeDtypeStruct((B, E, T), jnp.float32),
        grid=(grid_blocks,),
        in_specs=[
            pl.BlockSpec((bb, E, T), lambda g: (g, 0, 0)),     # activations
            pl.BlockSpec((E, 3 * E), lambda g: (0, 0)),        # fused QKV weight
            pl.BlockSpec((1, 3 * E), lambda g: (0, 0)),        # fused QKV bias
            pl.BlockSpec((3, E, E), lambda g: (0, 0, 0)),      # wo/w1/w2 (pre-T)
            pl.BlockSpec((8, E), lambda g: (0, 0)),            # packed vectors
        ],
        out_specs=pl.BlockSpec((bb, E, T), lambda g: (g, 0, 0)),
        compiler_params=pltpu.CompilerParams(
            dimension_semantics=("parallel",),
            vmem_limit_bytes=vmem_limit),
        cost_estimate=pl.CostEstimate(flops=flops,
                                      transcendentals=transcendentals,
                                      bytes_accessed=bytes_accessed),
    )(xs, wqkv_t, bqkv, wmats, vecs)

    # (B, E, T) -> (B, C, M, T): pure reshape, no transpose needed.
    return out.reshape(B, channels, mel_size, time_size)


def reference_forward(x, params, channels, mel_size, time_size, num_heads=8):
    """Pure-JAX f32 reference matching the PyTorch forward semantics."""
    B = x.shape[0]
    E = channels * mel_size
    T = time_size
    xs = x.reshape(B, E, T).swapaxes(1, 2)       # (B, T, E)

    def ln(z, w, b, eps=1e-5):
        mu = z.mean(-1, keepdims=True)
        var = ((z - mu) ** 2).mean(-1, keepdims=True)
        return (z - mu) / jnp.sqrt(var + eps) * w + b

    x_ln = ln(xs, params["ln1_w"], params["ln1_b"])
    Wq, Wk, Wv = (params["in_proj_w"][:E], params["in_proj_w"][E:2 * E],
                  params["in_proj_w"][2 * E:])
    bq, bk, bv = (params["in_proj_b"][:E], params["in_proj_b"][E:2 * E],
                  params["in_proj_b"][2 * E:])
    q = x_ln @ Wq.T + bq
    k = x_ln @ Wk.T + bk
    v = x_ln @ Wv.T + bv
    hd = E // num_heads
    qh = q.reshape(B, T, num_heads, hd).transpose(0, 2, 1, 3)
    kh = k.reshape(B, T, num_heads, hd).transpose(0, 2, 1, 3)
    vh = v.reshape(B, T, num_heads, hd).transpose(0, 2, 1, 3)
    s = (qh @ kh.transpose(0, 1, 3, 2)) / math.sqrt(hd)
    p = jax.nn.softmax(s, axis=-1)
    o = (p @ vh).transpose(0, 2, 1, 3).reshape(B, T, E)
    attn = o @ params["out_proj_w"].T + params["out_proj_b"] + xs
    h = ln(attn, params["ln2_w"], params["ln2_b"])
    h = jax.nn.gelu(h @ params["w1"].T + params["b1"], approximate=False)
    h = h @ params["w2"].T + params["b2"]
    out = h + attn
    return out.swapaxes(1, 2).reshape(B, channels, mel_size, time_size)


if __name__ == "__main__":
    B, C, M, T = 2, 4, 16, 16       # embed_dim = C*M = 64, num_heads = 8 -> head_dim 8
    key = jax.random.PRNGKey(0)
    kx, kp = jax.random.split(key)
    x = jax.random.normal(kx, (B, C, M, T), dtype=jnp.float32)
    params = make_params(kp, C, M)

    out = self_attention_forward(x, params, C, M, T, num_heads=8)
    out = jax.block_until_ready(out)

    ref = reference_forward(x, params, C, M, T, num_heads=8)
    assert out.shape == (B, C, M, T)
    err = float(jnp.max(jnp.abs(out - ref)))
    # bf16 MXU operands (f32 accumulation, f32 LN/softmax/GELU) vs. the f32
    # reference: tolerance widened accordingly (per perf-review correctness note).
    assert jnp.allclose(out, ref, atol=1e-2, rtol=1e-2), f"max err {err}"
    print("KERNEL_OK")
</pallas_src>

<mosaic_0001>
module attributes {stable_mosaic.version = 11 : i64} {
  func.func @_attention_block_kernel(%arg0: i32, %arg1: memref<2x64x16xf32, #tpu.memory_space<vmem>>, %arg2: memref<64x192xbf16, #tpu.memory_space<vmem>>, %arg3: memref<1x192xf32, #tpu.memory_space<vmem>>, %arg4: memref<3x64x64xbf16, #tpu.memory_space<vmem>>, %arg5: memref<8x64xf32, #tpu.memory_space<vmem>>, %arg6: memref<2x64x16xf32, #tpu.memory_space<vmem>>) attributes {dimension_semantics = [#tpu.dimension_semantics<parallel>], iteration_bounds = array<i64: 1>, scalar_prefetch = 0 : i64, scratch_operands = 0 : i64, tpu.core_type = #tpu.core_type<tc>, window_params = [{transform_indices = @transform_0, window_bounds = array<i64: 2, 64, 16>}, {pipeline_mode = #tpu.pipeline_mode<synchronous>, transform_indices = @transform_1, window_bounds = array<i64: 64, 192>}, {pipeline_mode = #tpu.pipeline_mode<synchronous>, transform_indices = @transform_2, window_bounds = array<i64: 1, 192>}, {pipeline_mode = #tpu.pipeline_mode<synchronous>, transform_indices = @transform_3, window_bounds = array<i64: 3, 64, 64>}, {pipeline_mode = #tpu.pipeline_mode<synchronous>, transform_indices = @transform_4, window_bounds = array<i64: 8, 64>}, {transform_indices = @transform_5, window_bounds = array<i64: 2, 64, 16>}]} {
    %c0 = arith.constant 0 : index
    %c0_0 = arith.constant 0 : index
    %c0_1 = arith.constant 0 : index
    %0 = vector.load %arg1[%c0, %c0_0, %c0_1] : memref<2x64x16xf32, #tpu.memory_space<vmem>>, vector<2x64x16xf32>
    %1 = tpu.transpose %0, [0, 2, 1] : vector<2x64x16xf32> -> vector<2x16x64xf32>
    %2 = vector.shape_cast %1 : vector<2x16x64xf32> to vector<32x64xf32>
    %c0_2 = arith.constant 0 : index
    %c0_3 = arith.constant 0 : index
    %3 = vector.load %arg5[%c0_2, %c0_3] : memref<8x64xf32, #tpu.memory_space<vmem>>, vector<8x64xf32>
    %4 = vector.extract_strided_slice %3 {offsets = [0, 0], sizes = [1, 64], strides = [1, 1]} : vector<8x64xf32> to vector<1x64xf32>
    %5 = vector.extract_strided_slice %3 {offsets = [1, 0], sizes = [1, 64], strides = [1, 1]} : vector<8x64xf32> to vector<1x64xf32>
    %6 = vector.extract_strided_slice %3 {offsets = [2, 0], sizes = [1, 64], strides = [1, 1]} : vector<8x64xf32> to vector<1x64xf32>
    %7 = vector.extract_strided_slice %3 {offsets = [3, 0], sizes = [1, 64], strides = [1, 1]} : vector<8x64xf32> to vector<1x64xf32>
    %8 = vector.extract_strided_slice %3 {offsets = [4, 0], sizes = [1, 64], strides = [1, 1]} : vector<8x64xf32> to vector<1x64xf32>
    %9 = vector.extract_strided_slice %3 {offsets = [5, 0], sizes = [1, 64], strides = [1, 1]} : vector<8x64xf32> to vector<1x64xf32>
    %10 = vector.extract_strided_slice %3 {offsets = [6, 0], sizes = [1, 64], strides = [1, 1]} : vector<8x64xf32> to vector<1x64xf32>
    %c0_4 = arith.constant 0 : index
    %c0_5 = arith.constant 0 : index
    %c0_6 = arith.constant 0 : index
    %11 = vector.load %arg4[%c0_4, %c0_5, %c0_6] : memref<3x64x64xbf16, #tpu.memory_space<vmem>>, vector<3x64x64xbf16>
    %12 = vector.extract_strided_slice %11 {offsets = [0, 0, 0], sizes = [1, 64, 64], strides = [1, 1, 1]} : vector<3x64x64xbf16> to vector<1x64x64xbf16>
    %13 = vector.shape_cast %12 : vector<1x64x64xbf16> to vector<64x64xbf16>
    %14 = vector.extract_strided_slice %11 {offsets = [1, 0, 0], sizes = [1, 64, 64], strides = [1, 1, 1]} : vector<3x64x64xbf16> to vector<1x64x64xbf16>
    %15 = vector.shape_cast %14 : vector<1x64x64xbf16> to vector<64x64xbf16>
    %16 = vector.extract_strided_slice %11 {offsets = [2, 0, 0], sizes = [1, 64, 64], strides = [1, 1, 1]} : vector<3x64x64xbf16> to vector<1x64x64xbf16>
    %17 = vector.shape_cast %16 : vector<1x64x64xbf16> to vector<64x64xbf16>
    %cst = arith.constant dense<0.000000e+00> : vector<32xf32>
    %18 = vector.multi_reduction <add>, %2, %cst [1] : vector<32x64xf32> to vector<32xf32>
    %19 = vector.shape_cast %18 : vector<32xf32> to vector<32x1xf32>
    %cst_7 = arith.constant 6.400000e+01 : f32
    %20 = vector.broadcast %cst_7 : f32 to vector<32x1xf32>
    %21 = arith.divf %19, %20 : vector<32x1xf32>
    %22 = vector.broadcast %21 : vector<32x1xf32> to vector<32x64xf32>
    %23 = arith.subf %2, %22 : vector<32x64xf32>
    %24 = arith.mulf %23, %23 : vector<32x64xf32>
    %cst_8 = arith.constant dense<0.000000e+00> : vector<32xf32>
    %25 = vector.multi_reduction <add>, %24, %cst_8 [1] : vector<32x64xf32> to vector<32xf32>
    %26 = vector.shape_cast %25 : vector<32xf32> to vector<32x1xf32>
    %cst_9 = arith.constant 6.400000e+01 : f32
    %27 = vector.broadcast %cst_9 : f32 to vector<32x1xf32>
    %28 = arith.divf %26, %27 : vector<32x1xf32>
    %29 = vector.broadcast %21 : vector<32x1xf32> to vector<32x64xf32>
    %30 = arith.subf %2, %29 : vector<32x64xf32>
    %cst_10 = arith.constant 9.99999974E-6 : f32
    %31 = vector.broadcast %cst_10 : f32 to vector<32x1xf32>
    %32 = arith.addf %28, %31 : vector<32x1xf32>
    %33 = math.rsqrt %32 : vector<32x1xf32>
    %34 = vector.broadcast %33 : vector<32x1xf32> to vector<32x64xf32>
    %35 = arith.mulf %30, %34 : vector<32x64xf32>
    %36 = vector.broadcast %4 : vector<1x64xf32> to vector<32x64xf32>
    %37 = arith.mulf %35, %36 : vector<32x64xf32>
    %38 = vector.broadcast %5 : vector<1x64xf32> to vector<32x64xf32>
    %39 = arith.addf %37, %38 : vector<32x64xf32>
    %40 = arith.truncf %39 : vector<32x64xf32> to vector<32x64xbf16>
    %c0_11 = arith.constant 0 : index
    %c0_12 = arith.constant 0 : index
    %41 = vector.load %arg2[%c0_11, %c0_12] : memref<64x192xbf16, #tpu.memory_space<vmem>>, vector<64x192xbf16>
    %cst_13 = arith.constant dense<0.000000e+00> : vector<32x192xf32>
    %42 = tpu.matmul %40, %41, %cst_13 {dimension_numbers = #tpu.dot_dimension_numbers<[1], [0], [0], [1], [0, 0, 1, 1], [], []>} : vector<32x64xbf16>, vector<64x192xbf16>, vector<32x192xf32> -> vector<32x192xf32>
    %c0_14 = arith.constant 0 : index
    %c0_15 = arith.constant 0 : index
    %43 = vector.load %arg3[%c0_14, %c0_15] : memref<1x192xf32, #tpu.memory_space<vmem>>, vector<1x192xf32>
    %44 = vector.broadcast %43 : vector<1x192xf32> to vector<32x192xf32>
    %45 = arith.addf %42, %44 : vector<32x192xf32>
    %46 = vector.shape_cast %45 : vector<32x192xf32> to vector<2x16x192xf32>
    %47 = tpu.transpose %46, [0, 2, 1] : vector<2x16x192xf32> -> vector<2x192x16xf32>
    %48 = vector.extract_strided_slice %47 {offsets = [0, 0, 0], sizes = [2, 64, 16], strides = [1, 1, 1]} : vector<2x192x16xf32> to vector<2x64x16xf32>
    %49 = vector.shape_cast %48 : vector<2x64x16xf32> to vector<16x8x16xf32>
    %50 = arith.truncf %49 : vector<16x8x16xf32> to vector<16x8x16xbf16>
    %51 = vector.extract_strided_slice %47 {offsets = [0, 64, 0], sizes = [2, 64, 16], strides = [1, 1, 1]} : vector<2x192x16xf32> to vector<2x64x16xf32>
    %52 = vector.shape_cast %51 : vector<2x64x16xf32> to vector<16x8x16xf32>
    %53 = arith.truncf %52 : vector<16x8x16xf32> to vector<16x8x16xbf16>
    %54 = vector.extract_strided_slice %47 {offsets = [0, 128, 0], sizes = [2, 64, 16], strides = [1, 1, 1]} : vector<2x192x16xf32> to vector<2x64x16xf32>
    %55 = vector.shape_cast %54 : vector<2x64x16xf32> to vector<16x8x16xf32>
    %56 = arith.truncf %55 : vector<16x8x16xf32> to vector<16x8x16xbf16>
    %cst_16 = arith.constant dense<0.000000e+00> : vector<16x16x16xf32>
    %57 = tpu.matmul %50, %53, %cst_16 {dimension_numbers = #tpu.dot_dimension_numbers<[1], [1], [2], [2], [0, 0, 0, 2, 1, 2], [0], [0]>} : vector<16x8x16xbf16>, vector<16x8x16xbf16>, vector<16x16x16xf32> -> vector<16x16x16xf32>
    %cst_17 = arith.constant 0.353553385 : f32
    %58 = vector.broadcast %cst_17 : f32 to vector<16x16x16xf32>
    %59 = arith.mulf %57, %58 : vector<16x16x16xf32>
    %cst_18 = arith.constant dense<0xFF800000> : vector<16x16xf32>
    %60 = vector.multi_reduction <maximumf>, %59, %cst_18 [2] : vector<16x16x16xf32> to vector<16x16xf32>
    %61 = vector.shape_cast %60 : vector<16x16xf32> to vector<16x16x1xf32>
    %62 = vector.broadcast %61 : vector<16x16x1xf32> to vector<16x16x16xf32>
    %63 = arith.subf %59, %62 : vector<16x16x16xf32>
    %64 = math.exp %63 : vector<16x16x16xf32>
    %cst_19 = arith.constant dense<0.000000e+00> : vector<16x16xf32>
    %65 = vector.multi_reduction <add>, %64, %cst_19 [2] : vector<16x16x16xf32> to vector<16x16xf32>
    %66 = vector.shape_cast %65 : vector<16x16xf32> to vector<16x16x1xf32>
    %67 = tpu.reciprocal %66 {approx = true} : vector<16x16x1xf32> -> vector<16x16x1xf32>
    %68 = vector.broadcast %67 : vector<16x16x1xf32> to vector<16x16x16xf32>
    %69 = arith.mulf %64, %68 : vector<16x16x16xf32>
    %70 = arith.truncf %69 : vector<16x16x16xf32> to vector<16x16x16xbf16>
    %cst_20 = arith.constant dense<0.000000e+00> : vector<16x8x16xf32>
    %71 = tpu.matmul %56, %70, %cst_20 {dimension_numbers = #tpu.dot_dimension_numbers<[2], [2], [1], [1], [0, 0, 0, 1, 1, 1], [0], [0]>} : vector<16x8x16xbf16>, vector<16x16x16xbf16>, vector<16x8x16xf32> -> vector<16x8x16xf32>
    %72 = vector.shape_cast %71 : vector<16x8x16xf32> to vector<2x64x16xf32>
    %73 = tpu.transpose %72, [0, 2, 1] : vector<2x64x16xf32> -> vector<2x16x64xf32>
    %74 = vector.shape_cast %73 : vector<2x16x64xf32> to vector<32x64xf32>
    %75 = arith.truncf %74 : vector<32x64xf32> to vector<32x64xbf16>
    %cst_21 = arith.constant dense<0.000000e+00> : vector<32x64xf32>
    %76 = tpu.matmul %75, %13, %cst_21 {dimension_numbers = #tpu.dot_dimension_numbers<[1], [0], [0], [1], [0, 0, 1, 1], [], []>} : vector<32x64xbf16>, vector<64x64xbf16>, vector<32x64xf32> -> vector<32x64xf32>
    %77 = vector.broadcast %6 : vector<1x64xf32> to vector<32x64xf32>
    %78 = arith.addf %76, %77 : vector<32x64xf32>
    %79 = arith.addf %78, %2 : vector<32x64xf32>
    %cst_22 = arith.constant dense<0.000000e+00> : vector<32xf32>
    %80 = vector.multi_reduction <add>, %79, %cst_22 [1] : vector<32x64xf32> to vector<32xf32>
    %81 = vector.shape_cast %80 : vector<32xf32> to vector<32x1xf32>
    %cst_23 = arith.constant 6.400000e+01 : f32
    %82 = vector.broadcast %cst_23 : f32 to vector<32x1xf32>
    %83 = arith.divf %81, %82 : vector<32x1xf32>
    %84 = vector.broadcast %83 : vector<32x1xf32> to vector<32x64xf32>
    %85 = arith.subf %79, %84 : vector<32x64xf32>
    %86 = arith.mulf %85, %85 : vector<32x64xf32>
    %cst_24 = arith.constant dense<0.000000e+00> : vector<32xf32>
    %87 = vector.multi_reduction <add>, %86, %cst_24 [1] : vector<32x64xf32> to vector<32xf32>
    %88 = vector.shape_cast %87 : vector<32xf32> to vector<32x1xf32>
    %cst_25 = arith.constant 6.400000e+01 : f32
    %89 = vector.broadcast %cst_25 : f32 to vector<32x1xf32>
    %90 = arith.divf %88, %89 : vector<32x1xf32>
    %91 = vector.broadcast %83 : vector<32x1xf32> to vector<32x64xf32>
    %92 = arith.subf %79, %91 : vector<32x64xf32>
    %cst_26 = arith.constant 9.99999974E-6 : f32
    %93 = vector.broadcast %cst_26 : f32 to vector<32x1xf32>
    %94 = arith.addf %90, %93 : vector<32x1xf32>
    %95 = math.rsqrt %94 : vector<32x1xf32>
    %96 = vector.broadcast %95 : vector<32x1xf32> to vector<32x64xf32>
    %97 = arith.mulf %92, %96 : vector<32x64xf32>
    %98 = vector.broadcast %7 : vector<1x64xf32> to vector<32x64xf32>
    %99 = arith.mulf %97, %98 : vector<32x64xf32>
    %100 = vector.broadcast %8 : vector<1x64xf32> to vector<32x64xf32>
    %101 = arith.addf %99, %100 : vector<32x64xf32>
    %102 = arith.truncf %101 : vector<32x64xf32> to vector<32x64xbf16>
    %cst_27 = arith.constant dense<0.000000e+00> : vector<32x64xf32>
    %103 = tpu.matmul %102, %15, %cst_27 {dimension_numbers = #tpu.dot_dimension_numbers<[1], [0], [0], [1], [0, 0, 1, 1], [], []>} : vector<32x64xbf16>, vector<64x64xbf16>, vector<32x64xf32> -> vector<32x64xf32>
    %104 = vector.broadcast %9 : vector<1x64xf32> to vector<32x64xf32>
    %105 = arith.addf %103, %104 : vector<32x64xf32>
    %cst_28 = arith.constant 5.000000e-01 : f32
    %106 = vector.broadcast %cst_28 : f32 to vector<32x64xf32>
    %107 = arith.mulf %106, %105 : vector<32x64xf32>
    %cst_29 = arith.constant 0.707106769 : f32
    %108 = vector.broadcast %cst_29 : f32 to vector<32x64xf32>
    %109 = arith.mulf %105, %108 : vector<32x64xf32>
    %110 = math.erf %109 : vector<32x64xf32>
    %cst_30 = arith.constant 1.000000e+00 : f32
    %111 = vector.broadcast %cst_30 : f32 to vector<32x64xf32>
    %112 = arith.addf %111, %110 : vector<32x64xf32>
    %113 = arith.mulf %107, %112 : vector<32x64xf32>
    %114 = arith.truncf %113 : vector<32x64xf32> to vector<32x64xbf16>
    %cst_31 = arith.constant dense<0.000000e+00> : vector<32x64xf32>
    %115 = tpu.matmul %114, %17, %cst_31 {dimension_numbers = #tpu.dot_dimension_numbers<[1], [0], [0], [1], [0, 0, 1, 1], [], []>} : vector<32x64xbf16>, vector<64x64xbf16>, vector<32x64xf32> -> vector<32x64xf32>
    %116 = vector.broadcast %10 : vector<1x64xf32> to vector<32x64xf32>
    %117 = arith.addf %115, %116 : vector<32x64xf32>
    %118 = arith.addf %117, %79 : vector<32x64xf32>
    %119 = vector.shape_cast %118 : vector<32x64xf32> to vector<2x16x64xf32>
    %120 = tpu.transpose %119, [0, 2, 1] : vector<2x16x64xf32> -> vector<2x64x16xf32>
    %c0_32 = arith.constant 0 : index
    %c0_33 = arith.constant 0 : index
    %c0_34 = arith.constant 0 : index
    %121 = vector.load %arg6[%c0_32, %c0_33, %c0_34] : memref<2x64x16xf32, #tpu.memory_space<vmem>>, vector<2x64x16xf32>
    tpu.vector_store %arg6[%c0_32, %c0_33, %c0_34], %120 {strides = array<i32>} : memref<2x64x16xf32, #tpu.memory_space<vmem>>, vector<2x64x16xf32>,
    return
  }
  func.func @transform_0(%arg0: i32) -> (i32, i32, i32) {
    %c0_i32 = arith.constant 0 : i32
    %c0_i32_0 = arith.constant 0 : i32
    %c0_i32_1 = arith.constant 0 : i32
    return %arg0, %c0_i32, %c0_i32_0 : i32, i32, i32
  }
  func.func @transform_1(%arg0: i32) -> (i32, i32) {
    %c0_i32 = arith.constant 0 : i32
    %c0_i32_0 = arith.constant 0 : i32
    %c0_i32_1 = arith.constant 0 : i32
    return %c0_i32, %c0_i32_0 : i32, i32
  }
  func.func @transform_2(%arg0: i32) -> (i32, i32) {
    %c0_i32 = arith.constant 0 : i32
    %c0_i32_0 = arith.constant 0 : i32
    %c0_i32_1 = arith.constant 0 : i32
    return %c0_i32, %c0_i32_0 : i32, i32
  }
  func.func @transform_3(%arg0: i32) -> (i32, i32, i32) {
    %c0_i32 = arith.constant 0 : i32
    %c0_i32_0 = arith.constant 0 : i32
    %c0_i32_1 = arith.constant 0 : i32
    %c0_i32_2 = arith.constant 0 : i32
    return %c0_i32, %c0_i32_0, %c0_i32_1 : i32, i32, i32
  }
  func.func @transform_4(%arg0: i32) -> (i32, i32) {
    %c0_i32 = arith.constant 0 : i32
    %c0_i32_0 = arith.constant 0 : i32
    %c0_i32_1 = arith.constant 0 : i32
    return %c0_i32, %c0_i32_0 : i32, i32
  }
  func.func @transform_5(%arg0: i32) -> (i32, i32, i32) {
    %c0_i32 = arith.constant 0 : i32
    %c0_i32_0 = arith.constant 0 : i32
    %c0_i32_1 = arith.constant 0 : i32
    return %arg0, %c0_i32, %c0_i32_0 : i32, i32, i32
  }
}

</mosaic_0001>

<llo_original>
// kernel: tpu_custom_call.1
$region0: #{tpu_custom_call.1}
  #allocation0 [shape = 'u32[]', space=smem, size = 0x4, offset = 0x4, fixed_abs, tag = 'smem constant byte address 0x4 - core index']
  #allocation1 [shape = 'u32[144,128]{1,0:T(1,128)}', space=vmem, size = 0x12000, scoped, tag = 'internal scratch']
  %s0 = inlined_call_operand.vmem [shape: f32[2,64,16], index: 0, kind: input, shape index: {}]
  %s1 = inlined_call_operand.vmem [shape: bf16[64,192], index: 1, kind: input, shape index: {}]
  %s2 = inlined_call_operand.vmem [shape: f32[1,192], index: 2, kind: input, shape index: {}]
  %s3 = inlined_call_operand.vmem [shape: bf16[3,64,64], index: 3, kind: input, shape index: {}]
  %s4 = inlined_call_operand.hbm [shape: f32[8,64], index: 4, kind: input, shape index: {}]
  %s5 = inlined_call_operand.vmem [shape: f32[2,64,16], index: 5, kind: output, shape index: {}]
  %s6 = sld [smem:[#allocation0]]
  $region34: #{tpu_custom_call.1} parent=0
    _
  %s8 = ssub.s32 1, %s6
  %s9 = scalar_select 0, %s8, %s6
  $region1: #{tpu_custom_call.1} parent=0
    #allocation2 [shape = 'u8[4096]{0}', space=vmem, size = 0x1000, scoped, tag = 'input window, operand 4, single buffered']
    #allocation3 [shape = 's32[1]{0}', space=sflag, size = 0x4, scoped, tag = 'scoped memory for tpu_custom_call.1']
    %10 = vsyncpa [#allocation3], 0
    // Predicated region
    $region2: #{tpu_custom_call.1} parent=1 // pred_check
      _
    $region3: #{tpu_custom_call.1} parent=1 // pred_check_branch
      %12 = sbr.rel (0) target = $region5
    $region4: #{tpu_custom_call.1} parent=1 // pred_region
      _
    $region5: #{tpu_custom_call.1} parent=1 // pred_fallthru
      _
    // Predicated region
    $region6: #{tpu_custom_call.1} parent=1 // pred_check
      _
    $region7: #{tpu_custom_call.1} parent=1 // pred_check_branch
      %14 = sbr.rel (0) target = $region9
    $region8: #{tpu_custom_call.1} parent=1 // pred_region
      _
    $region9: #{tpu_custom_call.1} parent=1 // pred_fallthru
      _
    // Predicated region
    $region10: #{tpu_custom_call.1} parent=1 // pred_check
      _
    $region11: #{tpu_custom_call.1} parent=1 // pred_check_branch
      %16 = sbr.rel (0) target = $region13
    $region12: #{tpu_custom_call.1} parent=1 // pred_region
      _
    $region13: #{tpu_custom_call.1} parent=1 // pred_fallthru
      _
    // Predicated region
    $region14: #{tpu_custom_call.1} parent=1 // pred_check
      _
    $region15: #{tpu_custom_call.1} parent=1 // pred_check_branch
      %18 = sbr.rel (0) target = $region17
    $region16: #{tpu_custom_call.1} parent=1 // pred_region
      _
    $region17: #{tpu_custom_call.1} parent=1 // pred_fallthru
      _
    // Predicated region
    $region18: #{tpu_custom_call.1} parent=1 // pred_check
      _
    $region19: #{tpu_custom_call.1} parent=1 // pred_check_branch
      %20 = sbr.rel (0) target = $region21
    $region20: #{tpu_custom_call.1} parent=1 // pred_region
      %s22 = ssub.s32 128, 128
      %23 = vsyncadd [#allocation3], %s22
      %s25 = sshll.u32 [#allocation2], 4
      %s26 = int_to_ptr.vmem [resolvable:$true] %s25
      %28 = dma.hbm_to_vmem [thread:$0]  %s4, 128, %s26, [#allocation3]
    $region21: #{tpu_custom_call.1} parent=1 // pred_fallthru
      _
    // Predicated region
    $region22: #{tpu_custom_call.1} parent=1 // pred_check
      _
    $region23: #{tpu_custom_call.1} parent=1 // pred_check_branch
      %30 = sbr.rel (0) target = $region25
    $region24: #{tpu_custom_call.1} parent=1 // pred_region
      %31 = dma.done [#allocation3], 128
    $region25: #{tpu_custom_call.1} parent=1 // pred_fallthru
      _
    %v33 = vld [vmem:[%s0] sm:$0xff]
    %v34 = vld [vmem:[%s0 + $0x8] sm:$0xff]
    %v35 = vld [vmem:[%s0 + $0x10] sm:$0xff]
    %v36 = vld [vmem:[%s0 + $0x18] sm:$0xff]
    %v37 = vld [vmem:[%s0 + $0x20] sm:$0xff]
    %v38 = vld [vmem:[%s0 + $0x28] sm:$0xff]
    %v39 = vld [vmem:[%s0 + $0x30] sm:$0xff]
    %v40 = vld [vmem:[%s0 + $0x38] sm:$0xff]
    %v41 = vld [vmem:[%s0 + $0x40] sm:$0xff]
    %v42 = vld [vmem:[%s0 + $0x48] sm:$0xff]
    %v43 = vld [vmem:[%s0 + $0x50] sm:$0xff]
    %v44 = vld [vmem:[%s0 + $0x58] sm:$0xff]
    %v45 = vld [vmem:[%s0 + $0x60] sm:$0xff]
    %v46 = vld [vmem:[%s0 + $0x68] sm:$0xff]
    %v47 = vld [vmem:[%s0 + $0x70] sm:$0xff]
    %v48 = vld [vmem:[%s0 + $0x78] sm:$0xff]
    %49 = vxpose.xlu0.b32.start [1/16] %v33, 128
    %50 = vxpose.xlu0.b32.cont [2/16] %v34, 128
    %51 = vxpose.xlu0.b32.cont [3/16] %v35, 128
    %52 = vxpose.xlu0.b32.cont [4/16] %v36, 128
    %53 = vxpose.xlu0.b32.cont [5/16] %v37, 128
    %54 = vxpose.xlu0.b32.cont [6/16] %v38, 128
    %55 = vxpose.xlu0.b32.cont [7/16] %v39, 128
    %56 = vxpose.xlu0.b32.cont [8/16] %v40, 128
    %57 = vxpose.xlu0.b32.cont [9/16] 0.0, 128
    %58 = vxpose.xlu0.b32.cont [10/16] 0.0, 128
    %59 = vxpose.xlu0.b32.cont [11/16] 0.0, 128
    %60 = vxpose.xlu0.b32.cont [12/16] 0.0, 128
    %61 = vxpose.xlu0.b32.cont [13/16] 0.0, 128
    %62 = vxpose.xlu0.b32.cont [14/16] 0.0, 128
    %63 = vxpose.xlu0.b32.cont [15/16] 0.0, 128
    %64 = vxpose.xlu0.b32.end [16/16] 0.0, 128
    %v65 = vpop.trf.xlu0
    %v66 = vpop.trf.xlu0
    %v67 = vpop.trf.xlu0
    %v68 = vpop.trf.xlu0
    %v69 = vpop.trf.xlu0
    %v70 = vpop.trf.xlu0
    %v71 = vpop.trf.xlu0
    %v72 = vpop.trf.xlu0
    %v73 = vpop.trf.xlu0
    %v74 = vpop.trf.xlu0
    %v75 = vpop.trf.xlu0
    %v76 = vpop.trf.xlu0
    %v77 = vpop.trf.xlu0
    %v78 = vpop.trf.xlu0
    %v79 = vpop.trf.xlu0
    %v80 = vpop.trf.xlu0
    %81 = vxpose.xlu0.b32.start [1/16] %v41, 128
    %82 = vxpose.xlu0.b32.cont [2/16] %v42, 128
    %83 = vxpose.xlu0.b32.cont [3/16] %v43, 128
    %84 = vxpose.xlu0.b32.cont [4/16] %v44, 128
    %85 = vxpose.xlu0.b32.cont [5/16] %v45, 128
    %86 = vxpose.xlu0.b32.cont [6/16] %v46, 128
    %87 = vxpose.xlu0.b32.cont [7/16] %v47, 128
    %88 = vxpose.xlu0.b32.cont [8/16] %v48, 128
    %89 = vxpose.xlu0.b32.cont [9/16] 0.0, 128
    %90 = vxpose.xlu0.b32.cont [10/16] 0.0, 128
    %91 = vxpose.xlu0.b32.cont [11/16] 0.0, 128
    %92 = vxpose.xlu0.b32.cont [12/16] 0.0, 128
    %93 = vxpose.xlu0.b32.cont [13/16] 0.0, 128
    %94 = vxpose.xlu0.b32.cont [14/16] 0.0, 128
    %95 = vxpose.xlu0.b32.cont [15/16] 0.0, 128
    %96 = vxpose.xlu0.b32.end [16/16] 0.0, 128
    %v97 = vpop.trf.xlu0
    %v98 = vpop.trf.xlu0
    %v99 = vpop.trf.xlu0
    %v100 = vpop.trf.xlu0
    %v101 = vpop.trf.xlu0
    %v102 = vpop.trf.xlu0
    %v103 = vpop.trf.xlu0
    %v104 = vpop.trf.xlu0
    %v105 = vpop.trf.xlu0
    %v106 = vpop.trf.xlu0
    %v107 = vpop.trf.xlu0
    %v108 = vpop.trf.xlu0
    %v109 = vpop.trf.xlu0
    %v110 = vpop.trf.xlu0
    %v111 = vpop.trf.xlu0
    %v112 = vpop.trf.xlu0
    %v113 = vld [vmem:[#allocation2] sm:$0xff]
    %v114 = vld [vmem:[%s3] sm:$0xf]
    %v115 = vld [vmem:[%s3 + $0x4] sm:$0xf]
    %v116 = vld [vmem:[%s3 + $0x8] sm:$0xf]
    %v117 = vld [vmem:[%s3 + $0xc] sm:$0xf]
    %v118 = vld [vmem:[%s3 + $0x10] sm:$0xf]
    %v119 = vld [vmem:[%s3 + $0x14] sm:$0xf]
    %v120 = vld [vmem:[%s3 + $0x18] sm:$0xf]
    %v121 = vld [vmem:[%s3 + $0x1c] sm:$0xf]
    %v122 = vld [vmem:[%s3 + $0x20] sm:$0xf]
    %v123 = vld [vmem:[%s3 + $0x24] sm:$0xf]
    %v124 = vld [vmem:[%s3 + $0x28] sm:$0xf]
    %v125 = vld [vmem:[%s3 + $0x2c] sm:$0xf]
    %v126 = vld [vmem:[%s3 + $0x30] sm:$0xf]
    %v127 = vld [vmem:[%s3 + $0x34] sm:$0xf]
    %v128 = vld [vmem:[%s3 + $0x38] sm:$0xf]
    %v129 = vld [vmem:[%s3 + $0x3c] sm:$0xf]
    %v130 = vld [vmem:[%s3 + $0x40] sm:$0xf]
    %v131 = vld [vmem:[%s3 + $0x44] sm:$0xf]
    %v132 = vld [vmem:[%s3 + $0x48] sm:$0xf]
    %v133 = vld [vmem:[%s3 + $0x4c] sm:$0xf]
    %v134 = vld [vmem:[%s3 + $0x50] sm:$0xf]
    %v135 = vld [vmem:[%s3 + $0x54] sm:$0xf]
    %v136 = vld [vmem:[%s3 + $0x58] sm:$0xf]
    %v137 = vld [vmem:[%s3 + $0x5c] sm:$0xf]
    %vm138 = vcmask 523264
    %v139 = vsel %vm138, %v65, 0.0
    %140 = vadd.xlane.f32.xlu0 %v139
    %v141 = vpop.xlane.xlu0 %140
    %v142 = vsel %vm138, %v66, 0.0
    %143 = vadd.xlane.f32.xlu0 %v142
    %v144 = vpop.xlane.xlu0 %143
    %v145 = vsel %vm138, %v97, 0.0
    %146 = vadd.xlane.f32.xlu0 %v145
    %v147 = vpop.xlane.xlu0 %146
    %v148 = vsel %vm138, %v98, 0.0
    %149 = vadd.xlane.f32.xlu0 %v148
    %v150 = vpop.xlane.xlu0 %149
    %v151 = vrcp.pop 64.0
    %v152 = vmul.f32 %v141, %v151
    %v153 = vmul.f32 %v144, %v151
    %v154 = vmul.f32 %v147, %v151
    %v155 = vmul.f32 %v150, %v151
    %v156 = vsub.f32 %v65, %v152
    %v157 = vsub.f32 %v66, %v153
    %v158 = vsub.f32 %v97, %v154
    %v159 = vsub.f32 %v98, %v155
    %v160 = vmul.f32 %v156, %v156
    %v161 = vmul.f32 %v157, %v157
    %v162 = vmul.f32 %v158, %v158
    %v163 = vmul.f32 %v159, %v159
    %v164 = vsel %vm138, %v160, 0.0
    %165 = vadd.xlane.f32.xlu0 %v164
    %v166 = vpop.xlane.xlu0 %165
    %v167 = vsel %vm138, %v161, 0.0
    %168 = vadd.xlane.f32.xlu0 %v167
    %v169 = vpop.xlane.xlu0 %168
    %v170 = vsel %vm138, %v162, 0.0
    %171 = vadd.xlane.f32.xlu0 %v170
    %v172 = vpop.xlane.xlu0 %171
    %v173 = vsel %vm138, %v163, 0.0
    %174 = vadd.xlane.f32.xlu0 %v173
    %v175 = vpop.xlane.xlu0 %174
    %v176 = vmul.f32 %v166, %v151
    %v177 = vmul.f32 %v169, %v151
    %v178 = vmul.f32 %v172, %v151
    %v179 = vmul.f32 %v175, %v151
    %v180 = vadd.f32 %v176, 1e-05
    %v181 = vadd.f32 %v177, 1e-05
    %v182 = vadd.f32 %v178, 1e-05
    %v183 = vadd.f32 %v179, 1e-05
    %v184 = vrsqrt.pop %v180
    %v185 = vrsqrt.pop %v181
    %v186 = vrsqrt.pop %v182
    %v187 = vrsqrt.pop %v183
    %v188 = vmul.f32 %v156, %v184
    %v189 = vmul.f32 %v157, %v185
    %v190 = vmul.f32 %v158, %v186
    %v191 = vmul.f32 %v159, %v187
    %v192 = vlaneseq
    %v193 = vshrl.u32 %v192, 7
    %v194 = vsub.s32 0, %v193
    %v195 = vrot.slane %v113, %v194
    %v196 = vmul.f32 %v188, %v195
    %v197 = vmul.f32 %v189, %v195
    %v198 = vmul.f32 %v190, %v195
    %v199 = vmul.f32 %v191, %v195
    %v200 = vlaneseq
    %v201 = vshrl.u32 %v200, 7
    %v202 = vsub.s32 1, %v201
    %v203 = vrot.slane %v113, %v202
    %v204 = vadd.f32 %v196, %v203
    %v205 = vadd.f32 %v197, %v203
    %v206 = vadd.f32 %v198, %v203
    %v207 = vadd.f32 %v199, %v203
    %v208 = vpack.c.bf16 %v205, %v204
    %v209 = vpack.c.bf16 %v207, %v206
    %v210 = vld [vmem:[%s1] sm:$0xff]
    %v211 = vld [vmem:[%s1 + $0x8] sm:$0xff]
    %v212 = vld [vmem:[%s1 + $0x10] sm:$0xff]
    %v213 = vld [vmem:[%s1 + $0x18] sm:$0xff]
    %v214 = vld [vmem:[%s1 + $0x20] sm:$0xff]
    %v215 = vld [vmem:[%s1 + $0x28] sm:$0xff]
    %v216 = vld [vmem:[%s1 + $0x30] sm:$0xff]
    %v217 = vld [vmem:[%s1 + $0x38] sm:$0xff]
    %v218 = vld [vmem:[%s2] sm:$0x3]
    %v220 = vlaneseq
    %v221 = vshrl.u32 %v220, 7
    %v222 = vsub.s32 0, %v221
    %v223 = vrot.slane %v218, %v222
    %v224 = vlaneseq
    %v225 = vshrl.u32 %v224, 7
    %v226 = vsub.s32 1, %v225
    %v227 = vrot.slane %v218, %v226
    %v238 = vunpack.c.l.b16 %v210
    %v239 = vunpack.c.h.b16 %v210
    %v240 = vunpack.c.l.b16 %v211
    %v241 = vunpack.c.h.b16 %v211
    %v242 = vunpack.c.l.b16 %v212
    %v243 = vunpack.c.h.b16 %v212
    %v244 = vunpack.c.l.b16 %v213
    %v245 = vunpack.c.h.b16 %v213
    %v246 = vunpack.c.l.b16 %v214
    %v247 = vunpack.c.h.b16 %v214
    %v248 = vunpack.c.l.b16 %v215
    %v249 = vunpack.c.h.b16 %v215
    %v250 = vunpack.c.l.b16 %v216
    %v251 = vunpack.c.h.b16 %v216
    %v252 = vunpack.c.l.b16 %v217
    %v253 = vunpack.c.h.b16 %v217
    %v254 = vpack.c.b16 %v240, %v238
    %v255 = vpack.c.b16 %v241, %v239
    %v256 = vpack.c.b16 %v244, %v242
    %v257 = vpack.c.b16 %v245, %v243
    %v258 = vpack.c.b16 %v248, %v246
    %v259 = vpack.c.b16 %v249, %v247
    %v260 = vpack.c.b16 %v252, %v250
    %v261 = vpack.c.b16 %v253, %v251
    %v271 = vsel %vm138, %v208, 0
    %v274 = vsel %vm138, %v209, 0
    %276 = vmatprep.subr.bf16.mxu0 0
    %277 = vmatpush1.bf16.msra.mxu0 0
    %278 = vmatprep.subr.bf16.mxu0 0
    %279 = vmatpush1.bf16.msra.mxu0 0
    %280 = vmatprep.subr.bf16.mxu0 0
    %281 = vmatpush1.bf16.msra.mxu0 0
    %282 = vmatprep.subr.bf16.mxu0 0
    %283 = vmatpush1.bf16.msra.mxu0 0
    %284 = vmatprep.subr.bf16.mxu0 %v261
    %285 = vmatpush1.bf16.msra.mxu0 %v260
    %286 = vmatprep.subr.bf16.mxu0 %v259
    %287 = vmatpush1.bf16.msra.mxu0 %v258
    %288 = vmatprep.subr.bf16.mxu0 %v257
    %289 = vmatpush1.bf16.msra.mxu0 %v256
    %290 = vmatprep.subr.bf16.mxu0 %v255
    %291 = vmatpush1.bf16.msra.mxu0 %v254
    %292 = vmatprep.subr.bf16.mxu0 0
    %293 = vmatpush2.bf16.msra.mxu0 0
    %294 = vmatprep.subr.bf16.mxu0 0
    %295 = vmatpush2.bf16.msra.mxu0 0
    %296 = vmatprep.subr.bf16.mxu0 0
    %297 = vmatpush2.bf16.msra.mxu0 0
    %298 = vmatprep.subr.bf16.mxu0 0
    %299 = vmatpush2.bf16.msra.mxu0 0
    %300 = vmatprep.subr.bf16.mxu0 0
    %301 = vmatpush2.bf16.msra.mxu0 0
    %302 = vmatprep.subr.bf16.mxu0 0
    %303 = vmatpush2.bf16.msra.mxu0 0
    %304 = vmatprep.subr.bf16.mxu0 0
    %305 = vmatpush2.bf16.msra.mxu0 0
    %306 = vmatprep.subr.bf16.mxu0 0
    %307 = vmatpush2.bf16.msra.mxu0 0
    %308 = vmatprep.mubr.bf16.mxu0 0
    %309 = vmatmul.mubr.bf16.gmra.mxu0 %v271
    %v310 = vpop.f32.mrf.mxu0
    %v311 = vadd.f32 %v223, %v310
    %v312 = vpop.f32.mrf.mxu0
    %v313 = vadd.f32 %v227, %v312
    %v314 = vpop.f32.mrf.mxu0
    %v315 = vadd.f32 %v223, %v314
    %v316 = vpop.f32.mrf.mxu0
    %v317 = vadd.f32 %v227, %v316
    %318 = vmatprep.mubr.bf16.mxu0 0
    %319 = vmatmul.mubr.bf16.gmra.mxu0 %v274
    %v320 = vpop.f32.mrf.mxu0
    %v321 = vadd.f32 %v223, %v320
    %v322 = vpop.f32.mrf.mxu0
    %v323 = vadd.f32 %v227, %v322
    %v324 = vpop.f32.mrf.mxu0
    %v325 = vadd.f32 %v223, %v324
    %v326 = vpop.f32.mrf.mxu0
    %v327 = vadd.f32 %v227, %v326
    %328 = vdwg.mxu0
    %329 = vxpose.xlu0.b32.start [1/16] %v311, 128
    %330 = vxpose.xlu0.b32.cont [2/16] %v315, 128
    %331 = vxpose.xlu0.b32.cont [3/16] 0.0, 128
    %332 = vxpose.xlu0.b32.cont [4/16] 0.0, 128
    %333 = vxpose.xlu0.b32.cont [5/16] 0.0, 128
    %334 = vxpose.xlu0.b32.cont [6/16] 0.0, 128
    %335 = vxpose.xlu0.b32.cont [7/16] 0.0, 128
    %336 = vxpose.xlu0.b32.cont [8/16] 0.0, 128
    %337 = vxpose.xlu0.b32.cont [9/16] 0.0, 128
    %338 = vxpose.xlu0.b32.cont [10/16] 0.0, 128
    %339 = vxpose.xlu0.b32.cont [11/16] 0.0, 128
    %340 = vxpose.xlu0.b32.cont [12/16] 0.0, 128
    %341 = vxpose.xlu0.b32.cont [13/16] 0.0, 128
    %342 = vxpose.xlu0.b32.cont [14/16] 0.0, 128
    %343 = vxpose.xlu0.b32.cont [15/16] 0.0, 128
    %344 = vxpose.xlu0.b32.end [16/16] 0.0, 128
    %v345 = vpop.trf.xlu0
    %v346 = vpop.trf.xlu0
    %v347 = vpop.trf.xlu0
    %v348 = vpop.trf.xlu0
    %v349 = vpop.trf.xlu0
    %v350 = vpop.trf.xlu0
    %v351 = vpop.trf.xlu0
    %v352 = vpop.trf.xlu0
    %v353 = vpop.trf.xlu0
    %v354 = vpop.trf.xlu0
    %v355 = vpop.trf.xlu0
    %v356 = vpop.trf.xlu0
    %v357 = vpop.trf.xlu0
    %v358 = vpop.trf.xlu0
    %v359 = vpop.trf.xlu0
    %v360 = vpop.trf.xlu0
    %361 = vxpose.xlu0.b32.start [1/16] %v313, 128
    %362 = vxpose.xlu0.b32.cont [2/16] %v317, 128
    %363 = vxpose.xlu0.b32.cont [3/16] 0.0, 128
    %364 = vxpose.xlu0.b32.cont [4/16] 0.0, 128
    %365 = vxpose.xlu0.b32.cont [5/16] 0.0, 128
    %366 = vxpose.xlu0.b32.cont [6/16] 0.0, 128
    %367 = vxpose.xlu0.b32.cont [7/16] 0.0, 128
    %368 = vxpose.xlu0.b32.cont [8/16] 0.0, 128
    %369 = vxpose.xlu0.b32.cont [9/16] 0.0, 128
    %370 = vxpose.xlu0.b32.cont [10/16] 0.0, 128
    %371 = vxpose.xlu0.b32.cont [11/16] 0.0, 128
    %372 = vxpose.xlu0.b32.cont [12/16] 0.0, 128
    %373 = vxpose.xlu0.b32.cont [13/16] 0.0, 128
    %374 = vxpose.xlu0.b32.cont [14/16] 0.0, 128
    %375 = vxpose.xlu0.b32.cont [15/16] 0.0, 128
    %376 = vxpose.xlu0.b32.end [16/16] 0.0, 128
    %v377 = vpop.trf.xlu0
    %v378 = vpop.trf.xlu0
    %v379 = vpop.trf.xlu0
    %v380 = vpop.trf.xlu0
    %v381 = vpop.trf.xlu0
    %v382 = vpop.trf.xlu0
    %v383 = vpop.trf.xlu0
    %v384 = vpop.trf.xlu0
    %v385 = vpop.trf.xlu0
    %v386 = vpop.trf.xlu0
    %v387 = vpop.trf.xlu0
    %v388 = vpop.trf.xlu0
    %v389 = vpop.trf.xlu0
    %v390 = vpop.trf.xlu0
    %v391 = vpop.trf.xlu0
    %v392 = vpop.trf.xlu0
    %393 = vxpose.xlu0.b32.start [1/16] %v321, 128
    %394 = vxpose.xlu0.b32.cont [2/16] %v325, 128
    %395 = vxpose.xlu0.b32.cont [3/16] 0.0, 128
    %396 = vxpose.xlu0.b32.cont [4/16] 0.0, 128
    %397 = vxpose.xlu0.b32.cont [5/16] 0.0, 128
    %398 = vxpose.xlu0.b32.cont [6/16] 0.0, 128
    %399 = vxpose.xlu0.b32.cont [7/16] 0.0, 128
    %400 = vxpose.xlu0.b32.cont [8/16] 0.0, 128
    %401 = vxpose.xlu0.b32.cont [9/16] 0.0, 128
    %402 = vxpose.xlu0.b32.cont [10/16] 0.0, 128
    %403 = vxpose.xlu0.b32.cont [11/16] 0.0, 128
    %404 = vxpose.xlu0.b32.cont [12/16] 0.0, 128
    %405 = vxpose.xlu0.b32.cont [13/16] 0.0, 128
    %406 = vxpose.xlu0.b32.cont [14/16] 0.0, 128
    %407 = vxpose.xlu0.b32.cont [15/16] 0.0, 128
    %408 = vxpose.xlu0.b32.end [16/16] 0.0, 128
    %v409 = vpop.trf.xlu0
    %v410 = vpop.trf.xlu0
    %v411 = vpop.trf.xlu0
    %v412 = vpop.trf.xlu0
    %v413 = vpop.trf.xlu0
    %v414 = vpop.trf.xlu0
    %v415 = vpop.trf.xlu0
    %v416 = vpop.trf.xlu0
    %v417 = vpop.trf.xlu0
    %v418 = vpop.trf.xlu0
    %v419 = vpop.trf.xlu0
    %v420 = vpop.trf.xlu0
    %v421 = vpop.trf.xlu0
    %v422 = vpop.trf.xlu0
    %v423 = vpop.trf.xlu0
    %v424 = vpop.trf.xlu0
    %425 = vxpose.xlu0.b32.start [1/16] %v323, 128
    %426 = vxpose.xlu0.b32.cont [2/16] %v327, 128
    %427 = vxpose.xlu0.b32.cont [3/16] 0.0, 128
    %428 = vxpose.xlu0.b32.cont [4/16] 0.0, 128
    %429 = vxpose.xlu0.b32.cont [5/16] 0.0, 128
    %430 = vxpose.xlu0.b32.cont [6/16] 0.0, 128
    %431 = vxpose.xlu0.b32.cont [7/16] 0.0, 128
    %432 = vxpose.xlu0.b32.cont [8/16] 0.0, 128
    %433 = vxpose.xlu0.b32.cont [9/16] 0.0, 128
    %434 = vxpose.xlu0.b32.cont [10/16] 0.0, 128
    %435 = vxpose.xlu0.b32.cont [11/16] 0.0, 128
    %436 = vxpose.xlu0.b32.cont [12/16] 0.0, 128
    %437 = vxpose.xlu0.b32.cont [13/16] 0.0, 128
    %438 = vxpose.xlu0.b32.cont [14/16] 0.0, 128
    %439 = vxpose.xlu0.b32.cont [15/16] 0.0, 128
    %440 = vxpose.xlu0.b32.end [16/16] 0.0, 128
    %v441 = vpop.trf.xlu0
    %v442 = vpop.trf.xlu0
    %v443 = vpop.trf.xlu0
    %v444 = vpop.trf.xlu0
    %v445 = vpop.trf.xlu0
    %v446 = vpop.trf.xlu0
    %v447 = vpop.trf.xlu0
    %v448 = vpop.trf.xlu0
    %v449 = vpop.trf.xlu0
    %v450 = vpop.trf.xlu0
    %v451 = vpop.trf.xlu0
    %v452 = vpop.trf.xlu0
    %v453 = vpop.trf.xlu0
    %v454 = vpop.trf.xlu0
    %v455 = vpop.trf.xlu0
    %v456 = vpop.trf.xlu0
    %v457 = vpack.c.bf16 %v345, %v345
    %v458 = vpack.c.bf16 %v346, %v346
    %v459 = vpack.c.bf16 %v347, %v347
    %v460 = vpack.c.bf16 %v348, %v348
    %v461 = vpack.c.bf16 %v349, %v349
    %v462 = vpack.c.bf16 %v350, %v350
    %v463 = vpack.c.bf16 %v351, %v351
    %v464 = vpack.c.bf16 %v352, %v352
    %v465 = vpack.c.bf16 %v409, %v409
    %v466 = vpack.c.bf16 %v410, %v410
    %v467 = vpack.c.bf16 %v411, %v411
    %v468 = vpack.c.bf16 %v412, %v412
    %v469 = vpack.c.bf16 %v413, %v413
    %v470 = vpack.c.bf16 %v414, %v414
    %v471 = vpack.c.bf16 %v415, %v415
    %v472 = vpack.c.bf16 %v416, %v416
    %v473 = vpack.c.bf16 %v353, %v353
    %v474 = vpack.c.bf16 %v354, %v354
    %v475 = vpack.c.bf16 %v355, %v355
    %v476 = vpack.c.bf16 %v356, %v356
    %v477 = vpack.c.bf16 %v357, %v357
    %v478 = vpack.c.bf16 %v358, %v358
    %v479 = vpack.c.bf16 %v359, %v359
    %v480 = vpack.c.bf16 %v360, %v360
    %v481 = vpack.c.bf16 %v417, %v417
    %v482 = vpack.c.bf16 %v418, %v418
    %v483 = vpack.c.bf16 %v419, %v419
    %v484 = vpack.c.bf16 %v420, %v420
    %v485 = vpack.c.bf16 %v421, %v421
    %v486 = vpack.c.bf16 %v422, %v422
    %v487 = vpack.c.bf16 %v423, %v423
    %v488 = vpack.c.bf16 %v424, %v424
    %v489 = vpack.c.bf16 %v377, %v377
    %v490 = vpack.c.bf16 %v378, %v378
    %v491 = vpack.c.bf16 %v379, %v379
    %v492 = vpack.c.bf16 %v380, %v380
    %v493 = vpack.c.bf16 %v381, %v381
    %v494 = vpack.c.bf16 %v382, %v382
    %v495 = vpack.c.bf16 %v383, %v383
    %v496 = vpack.c.bf16 %v384, %v384
    %v497 = vpack.c.bf16 %v441, %v441
    %v498 = vpack.c.bf16 %v442, %v442
    %v499 = vpack.c.bf16 %v443, %v443
    %v500 = vpack.c.bf16 %v444, %v444
    %v501 = vpack.c.bf16 %v445, %v445
    %v502 = vpack.c.bf16 %v446, %v446
    %v503 = vpack.c.bf16 %v447, %v447
    %v504 = vpack.c.bf16 %v448, %v448
    %505 = vxpose.xlu0.c.b16.start [1/8] %v457, 128
    %506 = vxpose.xlu0.c.b16.cont [2/8] 0, 128
    %507 = vxpose.xlu0.c.b16.cont [3/8] 0, 128
    %508 = vxpose.xlu0.c.b16.cont [4/8] 0, 128
    %509 = vxpose.xlu0.c.b16.cont [5/8] 0, 128
    %510 = vxpose.xlu0.c.b16.cont [6/8] 0, 128
    %511 = vxpose.xlu0.c.b16.cont [7/8] 0, 128
    %512 = vxpose.xlu0.c.b16.end [8/8] 0, 128
    %v513 = vpop.trf.xlu0
    %v514 = vpop.trf.xlu0
    %v515 = vpop.trf.xlu0
    %v516 = vpop.trf.xlu0
    %v517 = vpop.trf.xlu0
    %v518 = vpop.trf.xlu0
    %v519 = vpop.trf.xlu0
    %v520 = vpop.trf.xlu0
    %vm521 = vcmask 64512
    %v523 = vsel %vm521, %v513, 0
    %vm525 = vcmask 1043456
    %v527 = vsel %vm525, %v473, 0
    %529 = vmatprep.subr.bf16.mxu0 0
    %530 = vmatpush1.bf16.msra.mxu0 0
    %531 = vmatprep.subr.bf16.mxu0 0
    %532 = vmatpush1.bf16.msra.mxu0 0
    %533 = vmatprep.subr.bf16.mxu0 0
    %534 = vmatpush1.bf16.msra.mxu0 0
    %535 = vmatprep.subr.bf16.mxu0 0
    %536 = vmatpush1.bf16.msra.mxu0 0
    %537 = vmatprep.subr.bf16.mxu0 0
    %538 = vmatpush1.bf16.msra.mxu0 0
    %539 = vmatprep.subr.bf16.mxu0 0
    %540 = vmatpush1.bf16.msra.mxu0 0
    %541 = vmatprep.subr.bf16.mxu0 0
    %542 = vmatpush1.bf16.msra.mxu0 0
    %543 = vmatprep.subr.bf16.mxu0 0
    %544 = vmatpush1.bf16.msra.mxu0 %v527
    %545 = vmatprep.subr.bf16.mxu0 0
    %546 = vmatpush2.bf16.msra.mxu0 0
    %547 = vmatprep.subr.bf16.mxu0 0
    %548 = vmatpush2.bf16.msra.mxu0 0
    %549 = vmatprep.subr.bf16.mxu0 0
    %550 = vmatpush2.bf16.msra.mxu0 0
    %551 = vmatprep.subr.bf16.mxu0 0
    %552 = vmatpush2.bf16.msra.mxu0 0
    %553 = vmatprep.subr.bf16.mxu0 0
    %554 = vmatpush2.bf16.msra.mxu0 0
    %555 = vmatprep.subr.bf16.mxu0 0
    %556 = vmatpush2.bf16.msra.mxu0 0
    %557 = vmatprep.subr.bf16.mxu0 0
    %558 = vmatpush2.bf16.msra.mxu0 0
    %559 = vmatprep.subr.bf16.mxu0 0
    %560 = vmatpush2.bf16.msra.mxu0 0
    %561 = vmatprep.mubr.bf16.mxu0 0
    %562 = vmatmul.mubr.bf16.gmra.mxu0 %v523
    %v563 = vpop.f32.mrf.mxu0
    %v564 = vadd.f32 0.0, %v563
    %v565 = vpop.f32.mrf.mxu0
    %v566 = vpop.f32.mrf.mxu0
    %v567 = vadd.f32 0.0, %v566
    %v568 = vpop.f32.mrf.mxu0
    %569 = vdwg.mxu0
    %570 = vxpose.xlu0.c.b16.start [1/8] %v458, 128
    %571 = vxpose.xlu0.c.b16.cont [2/8] 0, 128
    %572 = vxpose.xlu0.c.b16.cont [3/8] 0, 128
    %573 = vxpose.xlu0.c.b16.cont [4/8] 0, 128
    %574 = vxpose.xlu0.c.b16.cont [5/8] 0, 128
    %575 = vxpose.xlu0.c.b16.cont [6/8] 0, 128
    %576 = vxpose.xlu0.c.b16.cont [7/8] 0, 128
    %577 = vxpose.xlu0.c.b16.end [8/8] 0, 128
    %v578 = vpop.trf.xlu0
    %v579 = vpop.trf.xlu0
    %v580 = vpop.trf.xlu0
    %v581 = vpop.trf.xlu0
    %v582 = vpop.trf.xlu0
    %v583 = vpop.trf.xlu0
    %v584 = vpop.trf.xlu0
    %v585 = vpop.trf.xlu0
    %v587 = vsel %vm521, %v578, 0
    %v590 = vsel %vm525, %v474, 0
    %592 = vmatprep.subr.bf16.mxu0 0
    %593 = vmatpush1.bf16.msra.mxu0 0
    %594 = vmatprep.subr.bf16.mxu0 0
    %595 = vmatpush1.bf16.msra.mxu0 0
    %596 = vmatprep.subr.bf16.mxu0 0
    %597 = vmatpush1.bf16.msra.mxu0 0
    %598 = vmatprep.subr.bf16.mxu0 0
    %599 = vmatpush1.bf16.msra.mxu0 0
    %600 = vmatprep.subr.bf16.mxu0 0
    %601 = vmatpush1.bf16.msra.mxu0 0
    %602 = vmatprep.subr.bf16.mxu0 0
    %603 = vmatpush1.bf16.msra.mxu0 0
    %604 = vmatprep.subr.bf16.mxu0 0
    %605 = vmatpush1.bf16.msra.mxu0 0
    %606 = vmatprep.subr.bf16.mxu0 0
    %607 = vmatpush1.bf16.msra.mxu0 %v590
    %608 = vmatprep.subr.bf16.mxu0 0
    %609 = vmatpush2.bf16.msra.mxu0 0
    %610 = vmatprep.subr.bf16.mxu0 0
    %611 = vmatpush2.bf16.msra.mxu0 0
    %612 = vmatprep.subr.bf16.mxu0 0
    %613 = vmatpush2.bf16.msra.mxu0 0
    %614 = vmatprep.subr.bf16.mxu0 0
    %615 = vmatpush2.bf16.msra.mxu0 0
    %616 = vmatprep.subr.bf16.mxu0 0
    %617 = vmatpush2.bf16.msra.mxu0 0
    %618 = vmatprep.subr.bf16.mxu0 0
    %619 = vmatpush2.bf16.msra.mxu0 0
    %620 = vmatprep.subr.bf16.mxu0 0
    %621 = vmatpush2.bf16.msra.mxu0 0
    %622 = vmatprep.subr.bf16.mxu0 0
    %623 = vmatpush2.bf16.msra.mxu0 0
    %624 = vmatprep.mubr.bf16.mxu0 0
    %625 = vmatmul.mubr.bf16.gmra.mxu0 %v587
    %v626 = vpop.f32.mrf.mxu0
    %v627 = vadd.f32 0.0, %v626
    %v628 = vpop.f32.mrf.mxu0
    %v629 = vpop.f32.mrf.mxu0
    %v630 = vadd.f32 0.0, %v629
    %v631 = vpop.f32.mrf.mxu0
    %632 = vdwg.mxu0
    %633 = vxpose.xlu0.c.b16.start [1/8] %v459, 128
    %634 = vxpose.xlu0.c.b16.cont [2/8] 0, 128
    %635 = vxpose.xlu0.c.b16.cont [3/8] 0, 128
    %636 = vxpose.xlu0.c.b16.cont [4/8] 0, 128
    %637 = vxpose.xlu0.c.b16.cont [5/8] 0, 128
    %638 = vxpose.xlu0.c.b16.cont [6/8] 0, 128
    %639 = vxpose.xlu0.c.b16.cont [7/8] 0, 128
    %640 = vxpose.xlu0.c.b16.end [8/8] 0, 128
    %v641 = vpop.trf.xlu0
    %v642 = vpop.trf.xlu0
    %v643 = vpop.trf.xlu0
    %v644 = vpop.trf.xlu0
    %v645 = vpop.trf.xlu0
    %v646 = vpop.trf.xlu0
    %v647 = vpop.trf.xlu0
    %v648 = vpop.trf.xlu0
    %v650 = vsel %vm521, %v641, 0
    %v653 = vsel %vm525, %v475, 0
    %655 = vmatprep.subr.bf16.mxu0 0
    %656 = vmatpush1.bf16.msra.mxu0 0
    %657 = vmatprep.subr.bf16.mxu0 0
    %658 = vmatpush1.bf16.msra.mxu0 0
    %659 = vmatprep.subr.bf16.mxu0 0
    %660 = vmatpush1.bf16.msra.mxu0 0
    %661 = vmatprep.subr.bf16.mxu0 0
    %662 = vmatpush1.bf16.msra.mxu0 0
    %663 = vmatprep.subr.bf16.mxu0 0
    %664 = vmatpush1.bf16.msra.mxu0 0
    %665 = vmatprep.subr.bf16.mxu0 0
    %666 = vmatpush1.bf16.msra.mxu0 0
    %667 = vmatprep.subr.bf16.mxu0 0
    %668 = vmatpush1.bf16.msra.mxu0 0
    %669 = vmatprep.subr.bf16.mxu0 0
    %670 = vmatpush1.bf16.msra.mxu0 %v653
    %671 = vmatprep.subr.bf16.mxu0 0
    %672 = vmatpush2.bf16.msra.mxu0 0
    %673 = vmatprep.subr.bf16.mxu0 0
    %674 = vmatpush2.bf16.msra.mxu0 0
    %675 = vmatprep.subr.bf16.mxu0 0
    %676 = vmatpush2.bf16.msra.mxu0 0
    %677 = vmatprep.subr.bf16.mxu0 0
    %678 = vmatpush2.bf16.msra.mxu0 0
    %679 = vmatprep.subr.bf16.mxu0 0
    %680 = vmatpush2.bf16.msra.mxu0 0
    %681 = vmatprep.subr.bf16.mxu0 0
    %682 = vmatpush2.bf16.msra.mxu0 0
    %683 = vmatprep.subr.bf16.mxu0 0
    %684 = vmatpush2.bf16.msra.mxu0 0
    %685 = vmatprep.subr.bf16.mxu0 0
    %686 = vmatpush2.bf16.msra.mxu0 0
    %687 = vmatprep.mubr.bf16.mxu0 0
    %688 = vmatmul.mubr.bf16.gmra.mxu0 %v650
    %v689 = vpop.f32.mrf.mxu0
    %v690 = vadd.f32 0.0, %v689
    %v691 = vpop.f32.mrf.mxu0
    %v692 = vpop.f32.mrf.mxu0
    %v693 = vadd.f32 0.0, %v692
    %v694 = vpop.f32.mrf.mxu0
    %695 = vdwg.mxu0
    %696 = vxpose.xlu0.c.b16.start [1/8] %v460, 128
    %697 = vxpose.xlu0.c.b16.cont [2/8] 0, 128
    %698 = vxpose.xlu0.c.b16.cont [3/8] 0, 128
    %699 = vxpose.xlu0.c.b16.cont [4/8] 0, 128
    %700 = vxpose.xlu0.c.b16.cont [5/8] 0, 128
    %701 = vxpose.xlu0.c.b16.cont [6/8] 0, 128
    %702 = vxpose.xlu0.c.b16.cont [7/8] 0, 128
    %703 = vxpose.xlu0.c.b16.end [8/8] 0, 128
    %v704 = vpop.trf.xlu0
    %v705 = vpop.trf.xlu0
    %v706 = vpop.trf.xlu0
    %v707 = vpop.trf.xlu0
    %v708 = vpop.trf.xlu0
    %v709 = vpop.trf.xlu0
    %v710 = vpop.trf.xlu0
    %v711 = vpop.trf.xlu0
    %v713 = vsel %vm521, %v704, 0
    %v716 = vsel %vm525, %v476, 0
    %718 = vmatprep.subr.bf16.mxu0 0
    %719 = vmatpush1.bf16.msra.mxu0 0
    %720 = vmatprep.subr.bf16.mxu0 0
    %721 = vmatpush1.bf16.msra.mxu0 0
    %722 = vmatprep.subr.bf16.mxu0 0
    %723 = vmatpush1.bf16.msra.mxu0 0
    %724 = vmatprep.subr.bf16.mxu0 0
    %725 = vmatpush1.bf16.msra.mxu0 0
    %726 = vmatprep.subr.bf16.mxu0 0
    %727 = vmatpush1.bf16.msra.mxu0 0
    %728 = vmatprep.subr.bf16.mxu0 0
    %729 = vmatpush1.bf16.msra.mxu0 0
    %730 = vmatprep.subr.bf16.mxu0 0
    %731 = vmatpush1.bf16.msra.mxu0 0
    %732 = vmatprep.subr.bf16.mxu0 0
    %733 = vmatpush1.bf16.msra.mxu0 %v716
    %734 = vmatprep.subr.bf16.mxu0 0
    %735 = vmatpush2.bf16.msra.mxu0 0
    %736 = vmatprep.subr.bf16.mxu0 0
    %737 = vmatpush2.bf16.msra.mxu0 0
    %738 = vmatprep.subr.bf16.mxu0 0
    %739 = vmatpush2.bf16.msra.mxu0 0
    %740 = vmatprep.subr.bf16.mxu0 0
    %741 = vmatpush2.bf16.msra.mxu0 0
    %742 = vmatprep.subr.bf16.mxu0 0
    %743 = vmatpush2.bf16.msra.mxu0 0
    %744 = vmatprep.subr.bf16.mxu0 0
    %745 = vmatpush2.bf16.msra.mxu0 0
    %746 = vmatprep.subr.bf16.mxu0 0
    %747 = vmatpush2.bf16.msra.mxu0 0
    %748 = vmatprep.subr.bf16.mxu0 0
    %749 = vmatpush2.bf16.msra.mxu0 0
    %750 = vmatprep.mubr.bf16.mxu0 0
    %751 = vmatmul.mubr.bf16.gmra.mxu0 %v713
    %v752 = vpop.f32.mrf.mxu0
    %v753 = vadd.f32 0.0, %v752
    %v754 = vpop.f32.mrf.mxu0
    %v755 = vpop.f32.mrf.mxu0
    %v756 = vadd.f32 0.0, %v755
    %v757 = vpop.f32.mrf.mxu0
    %758 = vdwg.mxu0
    %759 = vxpose.xlu0.c.b16.start [1/8] %v461, 128
    %760 = vxpose.xlu0.c.b16.cont [2/8] 0, 128
    %761 = vxpose.xlu0.c.b16.cont [3/8] 0, 128
    %762 = vxpose.xlu0.c.b16.cont [4/8] 0, 128
    %763 = vxpose.xlu0.c.b16.cont [5/8] 0, 128
    %764 = vxpose.xlu0.c.b16.cont [6/8] 0, 128
    %765 = vxpose.xlu0.c.b16.cont [7/8] 0, 128
    %766 = vxpose.xlu0.c.b16.end [8/8] 0, 128
    %v767 = vpop.trf.xlu0
    %v768 = vpop.trf.xlu0
    %v769 = vpop.trf.xlu0
    %v770 = vpop.trf.xlu0
    %v771 = vpop.trf.xlu0
    %v772 = vpop.trf.xlu0
    %v773 = vpop.trf.xlu0
    %v774 = vpop.trf.xlu0
    %v776 = vsel %vm521, %v767, 0
    %v779 = vsel %vm525, %v477, 0
    %781 = vmatprep.subr.bf16.mxu0 0
    %782 = vmatpush1.bf16.msra.mxu0 0
    %783 = vmatprep.subr.bf16.mxu0 0
    %784 = vmatpush1.bf16.msra.mxu0 0
    %785 = vmatprep.subr.bf16.mxu0 0
    %786 = vmatpush1.bf16.msra.mxu0 0
    %787 = vmatprep.subr.bf16.mxu0 0
    %788 = vmatpush1.bf16.msra.mxu0 0
    %789 = vmatprep.subr.bf16.mxu0 0
    %790 = vmatpush1.bf16.msra.mxu0 0
    %791 = vmatprep.subr.bf16.mxu0 0
    %792 = vmatpush1.bf16.msra.mxu0 0
    %793 = vmatprep.subr.bf16.mxu0 0
    %794 = vmatpush1.bf16.msra.mxu0 0
    %795 = vmatprep.subr.bf16.mxu0 0
    %796 = vmatpush1.bf16.msra.mxu0 %v779
    %797 = vmatprep.subr.bf16.mxu0 0
    %798 = vmatpush2.bf16.msra.mxu0 0
    %799 = vmatprep.subr.bf16.mxu0 0
    %800 = vmatpush2.bf16.msra.mxu0 0
    %801 = vmatprep.subr.bf16.mxu0 0
    %802 = vmatpush2.bf16.msra.mxu0 0
    %803 = vmatprep.subr.bf16.mxu0 0
    %804 = vmatpush2.bf16.msra.mxu0 0
    %805 = vmatprep.subr.bf16.mxu0 0
    %806 = vmatpush2.bf16.msra.mxu0 0
    %807 = vmatprep.subr.bf16.mxu0 0
    %808 = vmatpush2.bf16.msra.mxu0 0
    %809 = vmatprep.subr.bf16.mxu0 0
    %810 = vmatpush2.bf16.msra.mxu0 0
    %811 = vmatprep.subr.bf16.mxu0 0
    %812 = vmatpush2.bf16.msra.mxu0 0
    %813 = vmatprep.mubr.bf16.mxu0 0
    %814 = vmatmul.mubr.bf16.gmra.mxu0 %v776
    %v815 = vpop.f32.mrf.mxu0
    %v816 = vadd.f32 0.0, %v815
    %v817 = vpop.f32.mrf.mxu0
    %v818 = vpop.f32.mrf.mxu0
    %v819 = vadd.f32 0.0, %v818
    %v820 = vpop.f32.mrf.mxu0
    %821 = vdwg.mxu0
    %822 = vxpose.xlu0.c.b16.start [1/8] %v462, 128
    %823 = vxpose.xlu0.c.b16.cont [2/8] 0, 128
    %824 = vxpose.xlu0.c.b16.cont [3/8] 0, 128
    %825 = vxpose.xlu0.c.b16.cont [4/8] 0, 128
    %826 = vxpose.xlu0.c.b16.cont [5/8] 0, 128
    %827 = vxpose.xlu0.c.b16.cont [6/8] 0, 128
    %828 = vxpose.xlu0.c.b16.cont [7/8] 0, 128
    %829 = vxpose.xlu0.c.b16.end [8/8] 0, 128
    %v830 = vpop.trf.xlu0
    %v831 = vpop.trf.xlu0
    %v832 = vpop.trf.xlu0
    %v833 = vpop.trf.xlu0
    %v834 = vpop.trf.xlu0
    %v835 = vpop.trf.xlu0
    %v836 = vpop.trf.xlu0
    %v837 = vpop.trf.xlu0
    %v839 = vsel %vm521, %v830, 0
    %v842 = vsel %vm525, %v478, 0
    %844 = vmatprep.subr.bf16.mxu0 0
    %845 = vmatpush1.bf16.msra.mxu0 0
    %846 = vmatprep.subr.bf16.mxu0 0
    %847 = vmatpush1.bf16.msra.mxu0 0
    %848 = vmatprep.subr.bf16.mxu0 0
    %849 = vmatpush1.bf16.msra.mxu0 0
    %850 = vmatprep.subr.bf16.mxu0 0
    %851 = vmatpush1.bf16.msra.mxu0 0
    %852 = vmatprep.subr.bf16.mxu0 0
    %853 = vmatpush1.bf16.msra.mxu0 0
    %854 = vmatprep.subr.bf16.mxu0 0
    %855 = vmatpush1.bf16.msra.mxu0 0
    %856 = vmatprep.subr.bf16.mxu0 0
    %857 = vmatpush1.bf16.msra.mxu0 0
    %858 = vmatprep.subr.bf16.mxu0 0
    %859 = vmatpush1.bf16.msra.mxu0 %v842
    %860 = vmatprep.subr.bf16.mxu0 0
    %861 = vmatpush2.bf16.msra.mxu0 0
    %862 = vmatprep.subr.bf16.mxu0 0
    %863 = vmatpush2.bf16.msra.mxu0 0
    %864 = vmatprep.subr.bf16.mxu0 0
    %865 = vmatpush2.bf16.msra.mxu0 0
    %866 = vmatprep.subr.bf16.mxu0 0
    %867 = vmatpush2.bf16.msra.mxu0 0
    %868 = vmatprep.subr.bf16.mxu0 0
    %869 = vmatpush2.bf16.msra.mxu0 0
    %870 = vmatprep.subr.bf16.mxu0 0
    %871 = vmatpush2.bf16.msra.mxu0 0
    %872 = vmatprep.subr.bf16.mxu0 0
    %873 = vmatpush2.bf16.msra.mxu0 0
    %874 = vmatprep.subr.bf16.mxu0 0
    %875 = vmatpush2.bf16.msra.mxu0 0
    %876 = vmatprep.mubr.bf16.mxu0 0
    %877 = vmatmul.mubr.bf16.gmra.mxu0 %v839
    %v878 = vpop.f32.mrf.mxu0
    %v879 = vadd.f32 0.0, %v878
    %v880 = vpop.f32.mrf.mxu0
    %v881 = vpop.f32.mrf.mxu0
    %v882 = vadd.f32 0.0, %v881
    %v883 = vpop.f32.mrf.mxu0
    %884 = vdwg.mxu0
    %885 = vxpose.xlu0.c.b16.start [1/8] %v463, 128
    %886 = vxpose.xlu0.c.b16.cont [2/8] 0, 128
    %887 = vxpose.xlu0.c.b16.cont [3/8] 0, 128
    %888 = vxpose.xlu0.c.b16.cont [4/8] 0, 128
    %889 = vxpose.xlu0.c.b16.cont [5/8] 0, 128
    %890 = vxpose.xlu0.c.b16.cont [6/8] 0, 128
    %891 = vxpose.xlu0.c.b16.cont [7/8] 0, 128
    %892 = vxpose.xlu0.c.b16.end [8/8] 0, 128
    %v893 = vpop.trf.xlu0
    %v894 = vpop.trf.xlu0
    %v895 = vpop.trf.xlu0
    %v896 = vpop.trf.xlu0
    %v897 = vpop.trf.xlu0
    %v898 = vpop.trf.xlu0
    %v899 = vpop.trf.xlu0
    %v900 = vpop.trf.xlu0
    %v902 = vsel %vm521, %v893, 0
    %v905 = vsel %vm525, %v479, 0
    %907 = vmatprep.subr.bf16.mxu0 0
    %908 = vmatpush1.bf16.msra.mxu0 0
    %909 = vmatprep.subr.bf16.mxu0 0
    %910 = vmatpush1.bf16.msra.mxu0 0
    %911 = vmatprep.subr.bf16.mxu0 0
    %912 = vmatpush1.bf16.msra.mxu0 0
    %913 = vmatprep.subr.bf16.mxu0 0
    %914 = vmatpush1.bf16.msra.mxu0 0
    %915 = vmatprep.subr.bf16.mxu0 0
    %916 = vmatpush1.bf16.msra.mxu0 0
    %917 = vmatprep.subr.bf16.mxu0 0
    %918 = vmatpush1.bf16.msra.mxu0 0
    %919 = vmatprep.subr.bf16.mxu0 0
    %920 = vmatpush1.bf16.msra.mxu0 0
    %921 = vmatprep.subr.bf16.mxu0 0
    %922 = vmatpush1.bf16.msra.mxu0 %v905
    %923 = vmatprep.subr.bf16.mxu0 0
    %924 = vmatpush2.bf16.msra.mxu0 0
    %925 = vmatprep.subr.bf16.mxu0 0
    %926 = vmatpush2.bf16.msra.mxu0 0
    %927 = vmatprep.subr.bf16.mxu0 0
    %928 = vmatpush2.bf16.msra.mxu0 0
    %929 = vmatprep.subr.bf16.mxu0 0
    %930 = vmatpush2.bf16.msra.mxu0 0
    %931 = vmatprep.subr.bf16.mxu0 0
    %932 = vmatpush2.bf16.msra.mxu0 0
    %933 = vmatprep.subr.bf16.mxu0 0
    %934 = vmatpush2.bf16.msra.mxu0 0
    %935 = vmatprep.subr.bf16.mxu0 0
    %936 = vmatpush2.bf16.msra.mxu0 0
    %937 = vmatprep.subr.bf16.mxu0 0
    %938 = vmatpush2.bf16.msra.mxu0 0
    %939 = vmatprep.mubr.bf16.mxu0 0
    %940 = vmatmul.mubr.bf16.gmra.mxu0 %v902
    %v941 = vpop.f32.mrf.mxu0
    %v942 = vadd.f32 0.0, %v941
    %v943 = vpop.f32.mrf.mxu0
    %v944 = vpop.f32.mrf.mxu0
    %v945 = vadd.f32 0.0, %v944
    %v946 = vpop.f32.mrf.mxu0
    %947 = vdwg.mxu0
    %948 = vxpose.xlu0.c.b16.start [1/8] %v464, 128
    %949 = vxpose.xlu0.c.b16.cont [2/8] 0, 128
    %950 = vxpose.xlu0.c.b16.cont [3/8] 0, 128
    %951 = vxpose.xlu0.c.b16.cont [4/8] 0, 128
    %952 = vxpose.xlu0.c.b16.cont [5/8] 0, 128
    %953 = vxpose.xlu0.c.b16.cont [6/8] 0, 128
    %954 = vxpose.xlu0.c.b16.cont [7/8] 0, 128
    %955 = vxpose.xlu0.c.b16.end [8/8] 0, 128
    %v956 = vpop.trf.xlu0
    %v957 = vpop.trf.xlu0
    %v958 = vpop.trf.xlu0
    %v959 = vpop.trf.xlu0
    %v960 = vpop.trf.xlu0
    %v961 = vpop.trf.xlu0
    %v962 = vpop.trf.xlu0
    %v963 = vpop.trf.xlu0
    %v965 = vsel %vm521, %v956, 0
    %v968 = vsel %vm525, %v480, 0
    %970 = vmatprep.subr.bf16.mxu0 0
    %971 = vmatpush1.bf16.msra.mxu0 0
    %972 = vmatprep.subr.bf16.mxu0 0
    %973 = vmatpush1.bf16.msra.mxu0 0
    %974 = vmatprep.subr.bf16.mxu0 0
    %975 = vmatpush1.bf16.msra.mxu0 0
    %976 = vmatprep.subr.bf16.mxu0 0
    %977 = vmatpush1.bf16.msra.mxu0 0
    %978 = vmatprep.subr.bf16.mxu0 0
    %979 = vmatpush1.bf16.msra.mxu0 0
    %980 = vmatprep.subr.bf16.mxu0 0
    %981 = vmatpush1.bf16.msra.mxu0 0
    %982 = vmatprep.subr.bf16.mxu0 0
    %983 = vmatpush1.bf16.msra.mxu0 0
    %984 = vmatprep.subr.bf16.mxu0 0
    %985 = vmatpush1.bf16.msra.mxu0 %v968
    %986 = vmatprep.subr.bf16.mxu0 0
    %987 = vmatpush2.bf16.msra.mxu0 0
    %988 = vmatprep.subr.bf16.mxu0 0
    %989 = vmatpush2.bf16.msra.mxu0 0
    %990 = vmatprep.subr.bf16.mxu0 0
    %991 = vmatpush2.bf16.msra.mxu0 0
    %992 = vmatprep.subr.bf16.mxu0 0
    %993 = vmatpush2.bf16.msra.mxu0 0
    %994 = vmatprep.subr.bf16.mxu0 0
    %995 = vmatpush2.bf16.msra.mxu0 0
    %996 = vmatprep.subr.bf16.mxu0 0
    %997 = vmatpush2.bf16.msra.mxu0 0
    %998 = vmatprep.subr.bf16.mxu0 0
    %999 = vmatpush2.bf16.msra.mxu0 0
    %1000 = vmatprep.subr.bf16.mxu0 0
    %1001 = vmatpush2.bf16.msra.mxu0 0
    %1002 = vmatprep.mubr.bf16.mxu0 0
    %1003 = vmatmul.mubr.bf16.gmra.mxu0 %v965
    %v1004 = vpop.f32.mrf.mxu0
    %v1005 = vadd.f32 0.0, %v1004
    %v1006 = vpop.f32.mrf.mxu0
    %v1007 = vpop.f32.mrf.mxu0
    %v1008 = vadd.f32 0.0, %v1007
    %v1009 = vpop.f32.mrf.mxu0
    %1010 = vdwg.mxu0
    %1011 = vxpose.xlu0.c.b16.start [1/8] %v465, 128
    %1012 = vxpose.xlu0.c.b16.cont [2/8] 0, 128
    %1013 = vxpose.xlu0.c.b16.cont [3/8] 0, 128
    %1014 = vxpose.xlu0.c.b16.cont [4/8] 0, 128
    %1015 = vxpose.xlu0.c.b16.cont [5/8] 0, 128
    %1016 = vxpose.xlu0.c.b16.cont [6/8] 0, 128
    %1017 = vxpose.xlu0.c.b16.cont [7/8] 0, 128
    %1018 = vxpose.xlu0.c.b16.end [8/8] 0, 128
    %v1019 = vpop.trf.xlu0
    %v1020 = vpop.trf.xlu0
    %v1021 = vpop.trf.xlu0
    %v1022 = vpop.trf.xlu0
    %v1023 = vpop.trf.xlu0
    %v1024 = vpop.trf.xlu0
    %v1025 = vpop.trf.xlu0
    %v1026 = vpop.trf.xlu0
    %v1028 = vsel %vm521, %v1019, 0
    %v1031 = vsel %vm525, %v481, 0
    %1033 = vmatprep.subr.bf16.mxu0 0
    %1034 = vmatpush1.bf16.msra.mxu0 0
    %1035 = vmatprep.subr.bf16.mxu0 0
    %1036 = vmatpush1.bf16.msra.mxu0 0
    %1037 = vmatprep.subr.bf16.mxu0 0
    %1038 = vmatpush1.bf16.msra.mxu0 0
    %1039 = vmatprep.subr.bf16.mxu0 0
    %1040 = vmatpush1.bf16.msra.mxu0 0
    %1041 = vmatprep.subr.bf16.mxu0 0
    %1042 = vmatpush1.bf16.msra.mxu0 0
    %1043 = vmatprep.subr.bf16.mxu0 0
    %1044 = vmatpush1.bf16.msra.mxu0 0
    %1045 = vmatprep.subr.bf16.mxu0 0
    %1046 = vmatpush1.bf16.msra.mxu0 0
    %1047 = vmatprep.subr.bf16.mxu0 0
    %1048 = vmatpush1.bf16.msra.mxu0 %v1031
    %1049 = vmatprep.subr.bf16.mxu0 0
    %1050 = vmatpush2.bf16.msra.mxu0 0
    %1051 = vmatprep.subr.bf16.mxu0 0
    %1052 = vmatpush2.bf16.msra.mxu0 0
    %1053 = vmatprep.subr.bf16.mxu0 0
    %1054 = vmatpush2.bf16.msra.mxu0 0
    %1055 = vmatprep.subr.bf16.mxu0 0
    %1056 = vmatpush2.bf16.msra.mxu0 0
    %1057 = vmatprep.subr.bf16.mxu0 0
    %1058 = vmatpush2.bf16.msra.mxu0 0
    %1059 = vmatprep.subr.bf16.mxu0 0
    %1060 = vmatpush2.bf16.msra.mxu0 0
    %1061 = vmatprep.subr.bf16.mxu0 0
    %1062 = vmatpush2.bf16.msra.mxu0 0
    %1063 = vmatprep.subr.bf16.mxu0 0
    %1064 = vmatpush2.bf16.msra.mxu0 0
    %1065 = vmatprep.mubr.bf16.mxu0 0
    %1066 = vmatmul.mubr.bf16.gmra.mxu0 %v1028
    %v1067 = vpop.f32.mrf.mxu0
    %v1068 = vadd.f32 0.0, %v1067
    %v1069 = vpop.f32.mrf.mxu0
    %v1070 = vpop.f32.mrf.mxu0
    %v1071 = vadd.f32 0.0, %v1070
    %v1072 = vpop.f32.mrf.mxu0
    %1073 = vdwg.mxu0
    %1074 = vxpose.xlu0.c.b16.start [1/8] %v466, 128
    %1075 = vxpose.xlu0.c.b16.cont [2/8] 0, 128
    %1076 = vxpose.xlu0.c.b16.cont [3/8] 0, 128
    %1077 = vxpose.xlu0.c.b16.cont [4/8] 0, 128
    %1078 = vxpose.xlu0.c.b16.cont [5/8] 0, 128
    %1079 = vxpose.xlu0.c.b16.cont [6/8] 0, 128
    %1080 = vxpose.xlu0.c.b16.cont [7/8] 0, 128
    %1081 = vxpose.xlu0.c.b16.end [8/8] 0, 128
    %v1082 = vpop.trf.xlu0
    %v1083 = vpop.trf.xlu0
    %v1084 = vpop.trf.xlu0
    %v1085 = vpop.trf.xlu0
    %v1086 = vpop.trf.xlu0
    %v1087 = vpop.trf.xlu0
    %v1088 = vpop.trf.xlu0
    %v1089 = vpop.trf.xlu0
    %v1091 = vsel %vm521, %v1082, 0
    %v1094 = vsel %vm525, %v482, 0
    %1096 = vmatprep.subr.bf16.mxu0 0
    %1097 = vmatpush1.bf16.msra.mxu0 0
    %1098 = vmatprep.subr.bf16.mxu0 0
    %1099 = vmatpush1.bf16.msra.mxu0 0
    %1100 = vmatprep.subr.bf16.mxu0 0
    %1101 = vmatpush1.bf16.msra.mxu0 0
    %1102 = vmatprep.subr.bf16.mxu0 0
    %1103 = vmatpush1.bf16.msra.mxu0 0
    %1104 = vmatprep.subr.bf16.mxu0 0
    %1105 = vmatpush1.bf16.msra.mxu0 0
    %1106 = vmatprep.subr.bf16.mxu0 0
    %1107 = vmatpush1.bf16.msra.mxu0 0
    %1108 = vmatprep.subr.bf16.mxu0 0
    %1109 = vmatpush1.bf16.msra.mxu0 0
    %1110 = vmatprep.subr.bf16.mxu0 0
    %1111 = vmatpush1.bf16.msra.mxu0 %v1094
    %1112 = vmatprep.subr.bf16.mxu0 0
    %1113 = vmatpush2.bf16.msra.mxu0 0
    %1114 = vmatprep.subr.bf16.mxu0 0
    %1115 = vmatpush2.bf16.msra.mxu0 0
    %1116 = vmatprep.subr.bf16.mxu0 0
    %1117 = vmatpush2.bf16.msra.mxu0 0
    %1118 = vmatprep.subr.bf16.mxu0 0
    %1119 = vmatpush2.bf16.msra.mxu0 0
    %1120 = vmatprep.subr.bf16.mxu0 0
    %1121 = vmatpush2.bf16.msra.mxu0 0
    %1122 = vmatprep.subr.bf16.mxu0 0
    %1123 = vmatpush2.bf16.msra.mxu0 0
    %1124 = vmatprep.subr.bf16.mxu0 0
    %1125 = vmatpush2.bf16.msra.mxu0 0
    %1126 = vmatprep.subr.bf16.mxu0 0
    %1127 = vmatpush2.bf16.msra.mxu0 0
    %1128 = vmatprep.mubr.bf16.mxu0 0
    %1129 = vmatmul.mubr.bf16.gmra.mxu0 %v1091
    %v1130 = vpop.f32.mrf.mxu0
    %v1131 = vadd.f32 0.0, %v1130
    %v1132 = vpop.f32.mrf.mxu0
    %v1133 = vpop.f32.mrf.mxu0
    %v1134 = vadd.f32 0.0, %v1133
    %v1135 = vpop.f32.mrf.mxu0
    %1136 = vdwg.mxu0
    %1137 = vxpose.xlu0.c.b16.start [1/8] %v467, 128
    %1138 = vxpose.xlu0.c.b16.cont [2/8] 0, 128
    %1139 = vxpose.xlu0.c.b16.cont [3/8] 0, 128
    %1140 = vxpose.xlu0.c.b16.cont [4/8] 0, 128
    %1141 = vxpose.xlu0.c.b16.cont [5/8] 0, 128
    %1142 = vxpose.xlu0.c.b16.cont [6/8] 0, 128
    %1143 = vxpose.xlu0.c.b16.cont [7/8] 0, 128
    %1144 = vxpose.xlu0.c.b16.end [8/8] 0, 128
    %v1145 = vpop.trf.xlu0
    %v1146 = vpop.trf.xlu0
    %v1147 = vpop.trf.xlu0
    %v1148 = vpop.trf.xlu0
    %v1149 = vpop.trf.xlu0
    %v1150 = vpop.trf.xlu0
    %v1151 = vpop.trf.xlu0
    %v1152 = vpop.trf.xlu0
    %v1154 = vsel %vm521, %v1145, 0
    %v1157 = vsel %vm525, %v483, 0
    %1159 = vmatprep.subr.bf16.mxu0 0
    %1160 = vmatpush1.bf16.msra.mxu0 0
    %1161 = vmatprep.subr.bf16.mxu0 0
    %1162 = vmatpush1.bf16.msra.mxu0 0
    %1163 = vmatprep.subr.bf16.mxu0 0
    %1164 = vmatpush1.bf16.msra.mxu0 0
    %1165 = vmatprep.subr.bf16.mxu0 0
    %1166 = vmatpush1.bf16.msra.mxu0 0
    %1167 = vmatprep.subr.bf16.mxu0 0
    %1168 = vmatpush1.bf16.msra.mxu0 0
    %1169 = vmatprep.subr.bf16.mxu0 0
    %1170 = vmatpush1.bf16.msra.mxu0 0
    %1171 = vmatprep.subr.bf16.mxu0 0
    %1172 = vmatpush1.bf16.msra.mxu0 0
    %1173 = vmatprep.subr.bf16.mxu0 0
    %1174 = vmatpush1.bf16.msra.mxu0 %v1157
    %1175 = vmatprep.subr.bf16.mxu0 0
    %1176 = vmatpush2.bf16.msra.mxu0 0
    %1177 = vmatprep.subr.bf16.mxu0 0
    %1178 = vmatpush2.bf16.msra.mxu0 0
    %1179 = vmatprep.subr.bf16.mxu0 0
    %1180 = vmatpush2.bf16.msra.mxu0 0
    %1181 = vmatprep.subr.bf16.mxu0 0
    %1182 = vmatpush2.bf16.msra.mxu0 0
    %1183 = vmatprep.subr.bf16.mxu0 0
    %1184 = vmatpush2.bf16.msra.mxu0 0
    %1185 = vmatprep.subr.bf16.mxu0 0
    %1186 = vmatpush2.bf16.msra.mxu0 0
    %1187 = vmatprep.subr.bf16.mxu0 0
    %1188 = vmatpush2.bf16.msra.mxu0 0
    %1189 = vmatprep.subr.bf16.mxu0 0
    %1190 = vmatpush2.bf16.msra.mxu0 0
    %1191 = vmatprep.mubr.bf16.mxu0 0
    %1192 = vmatmul.mubr.bf16.gmra.mxu0 %v1154
    %v1193 = vpop.f32.mrf.mxu0
    %v1194 = vadd.f32 0.0, %v1193
    %v1195 = vpop.f32.mrf.mxu0
    %v1196 = vpop.f32.mrf.mxu0
    %v1197 = vadd.f32 0.0, %v1196
    %v1198 = vpop.f32.mrf.mxu0
    %1199 = vdwg.mxu0
    %1200 = vxpose.xlu0.c.b16.start [1/8] %v468, 128
    %1201 = vxpose.xlu0.c.b16.cont [2/8] 0, 128
    %1202 = vxpose.xlu0.c.b16.cont [3/8] 0, 128
    %1203 = vxpose.xlu0.c.b16.cont [4/8] 0, 128
    %1204 = vxpose.xlu0.c.b16.cont [5/8] 0, 128
    %1205 = vxpose.xlu0.c.b16.cont [6/8] 0, 128
    %1206 = vxpose.xlu0.c.b16.cont [7/8] 0, 128
    %1207 = vxpose.xlu0.c.b16.end [8/8] 0, 128
    %v1208 = vpop.trf.xlu0
    %v1209 = vpop.trf.xlu0
    %v1210 = vpop.trf.xlu0
    %v1211 = vpop.trf.xlu0
    %v1212 = vpop.trf.xlu0
    %v1213 = vpop.trf.xlu0
    %v1214 = vpop.trf.xlu0
    %v1215 = vpop.trf.xlu0
    %v1217 = vsel %vm521, %v1208, 0
    %v1220 = vsel %vm525, %v484, 0
    %1222 = vmatprep.subr.bf16.mxu0 0
    %1223 = vmatpush1.bf16.msra.mxu0 0
    %1224 = vmatprep.subr.bf16.mxu0 0
    %1225 = vmatpush1.bf16.msra.mxu0 0
    %1226 = vmatprep.subr.bf16.mxu0 0
    %1227 = vmatpush1.bf16.msra.mxu0 0
    %1228 = vmatprep.subr.bf16.mxu0 0
    %1229 = vmatpush1.bf16.msra.mxu0 0
    %1230 = vmatprep.subr.bf16.mxu0 0
    %1231 = vmatpush1.bf16.msra.mxu0 0
    %1232 = vmatprep.subr.bf16.mxu0 0
    %1233 = vmatpush1.bf16.msra.mxu0 0
    %1234 = vmatprep.subr.bf16.mxu0 0
    %1235 = vmatpush1.bf16.msra.mxu0 0
    %1236 = vmatprep.subr.bf16.mxu0 0
    %1237 = vmatpush1.bf16.msra.mxu0 %v1220
    %1238 = vmatprep.subr.bf16.mxu0 0
    %1239 = vmatpush2.bf16.msra.mxu0 0
    %1240 = vmatprep.subr.bf16.mxu0 0
    %1241 = vmatpush2.bf16.msra.mxu0 0
    %1242 = vmatprep.subr.bf16.mxu0 0
    %1243 = vmatpush2.bf16.msra.mxu0 0
    %1244 = vmatprep.subr.bf16.mxu0 0
    %1245 = vmatpush2.bf16.msra.mxu0 0
    %1246 = vmatprep.subr.bf16.mxu0 0
    %1247 = vmatpush2.bf16.msra.mxu0 0
    %1248 = vmatprep.subr.bf16.mxu0 0
    %1249 = vmatpush2.bf16.msra.mxu0 0
    %1250 = vmatprep.subr.bf16.mxu0 0
    %1251 = vmatpush2.bf16.msra.mxu0 0
    %1252 = vmatprep.subr.bf16.mxu0 0
    %1253 = vmatpush2.bf16.msra.mxu0 0
    %1254 = vmatprep.mubr.bf16.mxu0 0
    %1255 = vmatmul.mubr.bf16.gmra.mxu0 %v1217
    %v1256 = vpop.f32.mrf.mxu0
    %v1257 = vadd.f32 0.0, %v1256
    %v1258 = vpop.f32.mrf.mxu0
    %v1259 = vpop.f32.mrf.mxu0
    %v1260 = vadd.f32 0.0, %v1259
    %v1261 = vpop.f32.mrf.mxu0
    %1262 = vdwg.mxu0
    %1263 = vxpose.xlu0.c.b16.start [1/8] %v469, 128
    %1264 = vxpose.xlu0.c.b16.cont [2/8] 0, 128
    %1265 = vxpose.xlu0.c.b16.cont [3/8] 0, 128
    %1266 = vxpose.xlu0.c.b16.cont [4/8] 0, 128
    %1267 = vxpose.xlu0.c.b16.cont [5/8] 0, 128
    %1268 = vxpose.xlu0.c.b16.cont [6/8] 0, 128
    %1269 = vxpose.xlu0.c.b16.cont [7/8] 0, 128
    %1270 = vxpose.xlu0.c.b16.end [8/8] 0, 128
    %v1271 = vpop.trf.xlu0
    %v1272 = vpop.trf.xlu0
    %v1273 = vpop.trf.xlu0
    %v1274 = vpop.trf.xlu0
    %v1275 = vpop.trf.xlu0
    %v1276 = vpop.trf.xlu0
    %v1277 = vpop.trf.xlu0
    %v1278 = vpop.trf.xlu0
    %v1280 = vsel %vm521, %v1271, 0
    %v1283 = vsel %vm525, %v485, 0
    %1285 = vmatprep.subr.bf16.mxu0 0
    %1286 = vmatpush1.bf16.msra.mxu0 0
    %1287 = vmatprep.subr.bf16.mxu0 0
    %1288 = vmatpush1.bf16.msra.mxu0 0
    %1289 = vmatprep.subr.bf16.mxu0 0
    %1290 = vmatpush1.bf16.msra.mxu0 0
    %1291 = vmatprep.subr.bf16.mxu0 0
    %1292 = vmatpush1.bf16.msra.mxu0 0
    %1293 = vmatprep.subr.bf16.mxu0 0
    %1294 = vmatpush1.bf16.msra.mxu0 0
    %1295 = vmatprep.subr.bf16.mxu0 0
    %1296 = vmatpush1.bf16.msra.mxu0 0
    %1297 = vmatprep.subr.bf16.mxu0 0
    %1298 = vmatpush1.bf16.msra.mxu0 0
    %1299 = vmatprep.subr.bf16.mxu0 0
    %1300 = vmatpush1.bf16.msra.mxu0 %v1283
    %1301 = vmatprep.subr.bf16.mxu0 0
    %1302 = vmatpush2.bf16.msra.mxu0 0
    %1303 = vmatprep.subr.bf16.mxu0 0
    %1304 = vmatpush2.bf16.msra.mxu0 0
    %1305 = vmatprep.subr.bf16.mxu0 0
    %1306 = vmatpush2.bf16.msra.mxu0 0
    %1307 = vmatprep.subr.bf16.mxu0 0
    %1308 = vmatpush2.bf16.msra.mxu0 0
    %1309 = vmatprep.subr.bf16.mxu0 0
    %1310 = vmatpush2.bf16.msra.mxu0 0
    %1311 = vmatprep.subr.bf16.mxu0 0
    %1312 = vmatpush2.bf16.msra.mxu0 0
    %1313 = vmatprep.subr.bf16.mxu0 0
    %1314 = vmatpush2.bf16.msra.mxu0 0
    %1315 = vmatprep.subr.bf16.mxu0 0
    %1316 = vmatpush2.bf16.msra.mxu0 0
    %1317 = vmatprep.mubr.bf16.mxu0 0
    %1318 = vmatmul.mubr.bf16.gmra.mxu0 %v1280
    %v1319 = vpop.f32.mrf.mxu0
    %v1320 = vadd.f32 0.0, %v1319
    %v1321 = vpop.f32.mrf.mxu0
    %v1322 = vpop.f32.mrf.mxu0
    %v1323 = vadd.f32 0.0, %v1322
    %v1324 = vpop.f32.mrf.mxu0
    %1325 = vdwg.mxu0
    %1326 = vxpose.xlu0.c.b16.start [1/8] %v470, 128
    %1327 = vxpose.xlu0.c.b16.cont [2/8] 0, 128
    %1328 = vxpose.xlu0.c.b16.cont [3/8] 0, 128
    %1329 = vxpose.xlu0.c.b16.cont [4/8] 0, 128
    %1330 = vxpose.xlu0.c.b16.cont [5/8] 0, 128
    %1331 = vxpose.xlu0.c.b16.cont [6/8] 0, 128
    %1332 = vxpose.xlu0.c.b16.cont [7/8] 0, 128
    %1333 = vxpose.xlu0.c.b16.end [8/8] 0, 128
    %v1334 = vpop.trf.xlu0
    %v1335 = vpop.trf.xlu0
    %v1336 = vpop.trf.xlu0
    %v1337 = vpop.trf.xlu0
    %v1338 = vpop.trf.xlu0
    %v1339 = vpop.trf.xlu0
    %v1340 = vpop.trf.xlu0
    %v1341 = vpop.trf.xlu0
    %v1343 = vsel %vm521, %v1334, 0
    %v1346 = vsel %vm525, %v486, 0
    %1348 = vmatprep.subr.bf16.mxu0 0
    %1349 = vmatpush1.bf16.msra.mxu0 0
    %1350 = vmatprep.subr.bf16.mxu0 0
    %1351 = vmatpush1.bf16.msra.mxu0 0
    %1352 = vmatprep.subr.bf16.mxu0 0
    %1353 = vmatpush1.bf16.msra.mxu0 0
    %1354 = vmatprep.subr.bf16.mxu0 0
    %1355 = vmatpush1.bf16.msra.mxu0 0
    %1356 = vmatprep.subr.bf16.mxu0 0
    %1357 = vmatpush1.bf16.msra.mxu0 0
    %1358 = vmatprep.subr.bf16.mxu0 0
    %1359 = vmatpush1.bf16.msra.mxu0 0
    %1360 = vmatprep.subr.bf16.mxu0 0
    %1361 = vmatpush1.bf16.msra.mxu0 0
    %1362 = vmatprep.subr.bf16.mxu0 0
    %1363 = vmatpush1.bf16.msra.mxu0 %v1346
    %1364 = vmatprep.subr.bf16.mxu0 0
    %1365 = vmatpush2.bf16.msra.mxu0 0
    %1366 = vmatprep.subr.bf16.mxu0 0
    %1367 = vmatpush2.bf16.msra.mxu0 0
    %1368 = vmatprep.subr.bf16.mxu0 0
    %1369 = vmatpush2.bf16.msra.mxu0 0
    %1370 = vmatprep.subr.bf16.mxu0 0
    %1371 = vmatpush2.bf16.msra.mxu0 0
    %1372 = vmatprep.subr.bf16.mxu0 0
    %1373 = vmatpush2.bf16.msra.mxu0 0
    %1374 = vmatprep.subr.bf16.mxu0 0
    %1375 = vmatpush2.bf16.msra.mxu0 0
    %1376 = vmatprep.subr.bf16.mxu0 0
    %1377 = vmatpush2.bf16.msra.mxu0 0
    %1378 = vmatprep.subr.bf16.mxu0 0
    %1379 = vmatpush2.bf16.msra.mxu0 0
    %1380 = vmatprep.mubr.bf16.mxu0 0
    %1381 = vmatmul.mubr.bf16.gmra.mxu0 %v1343
    %v1382 = vpop.f32.mrf.mxu0
    %v1383 = vadd.f32 0.0, %v1382
    %v1384 = vpop.f32.mrf.mxu0
    %v1385 = vpop.f32.mrf.mxu0
    %v1386 = vadd.f32 0.0, %v1385
    %v1387 = vpop.f32.mrf.mxu0
    %1388 = vdwg.mxu0
    %1389 = vxpose.xlu0.c.b16.start [1/8] %v471, 128
    %1390 = vxpose.xlu0.c.b16.cont [2/8] 0, 128
    %1391 = vxpose.xlu0.c.b16.cont [3/8] 0, 128
    %1392 = vxpose.xlu0.c.b16.cont [4/8] 0, 128
    %1393 = vxpose.xlu0.c.b16.cont [5/8] 0, 128
    %1394 = vxpose.xlu0.c.b16.cont [6/8] 0, 128
    %1395 = vxpose.xlu0.c.b16.cont [7/8] 0, 128
    %1396 = vxpose.xlu0.c.b16.end [8/8] 0, 128
    %v1397 = vpop.trf.xlu0
    %v1398 = vpop.trf.xlu0
    %v1399 = vpop.trf.xlu0
    %v1400 = vpop.trf.xlu0
    %v1401 = vpop.trf.xlu0
    %v1402 = vpop.trf.xlu0
    %v1403 = vpop.trf.xlu0
    %v1404 = vpop.trf.xlu0
    %v1406 = vsel %vm521, %v1397, 0
    %v1409 = vsel %vm525, %v487, 0
    %1411 = vmatprep.subr.bf16.mxu0 0
    %1412 = vmatpush1.bf16.msra.mxu0 0
    %1413 = vmatprep.subr.bf16.mxu0 0
    %1414 = vmatpush1.bf16.msra.mxu0 0
    %1415 = vmatprep.subr.bf16.mxu0 0
    %1416 = vmatpush1.bf16.msra.mxu0 0
    %1417 = vmatprep.subr.bf16.mxu0 0
    %1418 = vmatpush1.bf16.msra.mxu0 0
    %1419 = vmatprep.subr.bf16.mxu0 0
    %1420 = vmatpush1.bf16.msra.mxu0 0
    %1421 = vmatprep.subr.bf16.mxu0 0
    %1422 = vmatpush1.bf16.msra.mxu0 0
    %1423 = vmatprep.subr.bf16.mxu0 0
    %1424 = vmatpush1.bf16.msra.mxu0 0
    %1425 = vmatprep.subr.bf16.mxu0 0
    %1426 = vmatpush1.bf16.msra.mxu0 %v1409
    %1427 = vmatprep.subr.bf16.mxu0 0
    %1428 = vmatpush2.bf16.msra.mxu0 0
    %1429 = vmatprep.subr.bf16.mxu0 0
    %1430 = vmatpush2.bf16.msra.mxu0 0
    %1431 = vmatprep.subr.bf16.mxu0 0
    %1432 = vmatpush2.bf16.msra.mxu0 0
    %1433 = vmatprep.subr.bf16.mxu0 0
    %1434 = vmatpush2.bf16.msra.mxu0 0
    %1435 = vmatprep.subr.bf16.mxu0 0
    %1436 = vmatpush2.bf16.msra.mxu0 0
    %1437 = vmatprep.subr.bf16.mxu0 0
    %1438 = vmatpush2.bf16.msra.mxu0 0
    %1439 = vmatprep.subr.bf16.mxu0 0
    %1440 = vmatpush2.bf16.msra.mxu0 0
    %1441 = vmatprep.subr.bf16.mxu0 0
    %1442 = vmatpush2.bf16.msra.mxu0 0
    %1443 = vmatprep.mubr.bf16.mxu0 0
    %1444 = vmatmul.mubr.bf16.gmra.mxu0 %v1406
    %v1445 = vpop.f32.mrf.mxu0
    %v1446 = vadd.f32 0.0, %v1445
    %v1447 = vpop.f32.mrf.mxu0
    %v1448 = vpop.f32.mrf.mxu0
    %v1449 = vadd.f32 0.0, %v1448
    %v1450 = vpop.f32.mrf.mxu0
    %1451 = vdwg.mxu0
    %1452 = vxpose.xlu0.c.b16.start [1/8] %v472, 128
    %1453 = vxpose.xlu0.c.b16.cont [2/8] 0, 128
    %1454 = vxpose.xlu0.c.b16.cont [3/8] 0, 128
    %1455 = vxpose.xlu0.c.b16.cont [4/8] 0, 128
    %1456 = vxpose.xlu0.c.b16.cont [5/8] 0, 128
    %1457 = vxpose.xlu0.c.b16.cont [6/8] 0, 128
    %1458 = vxpose.xlu0.c.b16.cont [7/8] 0, 128
    %1459 = vxpose.xlu0.c.b16.end [8/8] 0, 128
    %v1460 = vpop.trf.xlu0
    %v1461 = vpop.trf.xlu0
    %v1462 = vpop.trf.xlu0
    %v1463 = vpop.trf.xlu0
    %v1464 = vpop.trf.xlu0
    %v1465 = vpop.trf.xlu0
    %v1466 = vpop.trf.xlu0
    %v1467 = vpop.trf.xlu0
    %v1469 = vsel %vm521, %v1460, 0
    %v1472 = vsel %vm525, %v488, 0
    %1474 = vmatprep.subr.bf16.mxu0 0
    %1475 = vmatpush1.bf16.msra.mxu0 0
    %1476 = vmatprep.subr.bf16.mxu0 0
    %1477 = vmatpush1.bf16.msra.mxu0 0
    %1478 = vmatprep.subr.bf16.mxu0 0
    %1479 = vmatpush1.bf16.msra.mxu0 0
    %1480 = vmatprep.subr.bf16.mxu0 0
    %1481 = vmatpush1.bf16.msra.mxu0 0
    %1482 = vmatprep.subr.bf16.mxu0 0
    %1483 = vmatpush1.bf16.msra.mxu0 0
    %1484 = vmatprep.subr.bf16.mxu0 0
    %1485 = vmatpush1.bf16.msra.mxu0 0
    %1486 = vmatprep.subr.bf16.mxu0 0
    %1487 = vmatpush1.bf16.msra.mxu0 0
    %1488 = vmatprep.subr.bf16.mxu0 0
    %1489 = vmatpush1.bf16.msra.mxu0 %v1472
    %1490 = vmatprep.subr.bf16.mxu0 0
    %1491 = vmatpush2.bf16.msra.mxu0 0
    %1492 = vmatprep.subr.bf16.mxu0 0
    %1493 = vmatpush2.bf16.msra.mxu0 0
    %1494 = vmatprep.subr.bf16.mxu0 0
    %1495 = vmatpush2.bf16.msra.mxu0 0
    %1496 = vmatprep.subr.bf16.mxu0 0
    %1497 = vmatpush2.bf16.msra.mxu0 0
    %1498 = vmatprep.subr.bf16.mxu0 0
    %1499 = vmatpush2.bf16.msra.mxu0 0
    %1500 = vmatprep.subr.bf16.mxu0 0
    %1501 = vmatpush2.bf16.msra.mxu0 0
    %1502 = vmatprep.subr.bf16.mxu0 0
    %1503 = vmatpush2.bf16.msra.mxu0 0
    %1504 = vmatprep.subr.bf16.mxu0 0
    %1505 = vmatpush2.bf16.msra.mxu0 0
    %1506 = vmatprep.mubr.bf16.mxu0 0
    %1507 = vmatmul.mubr.bf16.gmra.mxu0 %v1469
    %v1508 = vpop.f32.mrf.mxu0
    %v1509 = vadd.f32 0.0, %v1508
    %v1510 = vpop.f32.mrf.mxu0
    %v1511 = vpop.f32.mrf.mxu0
    %v1512 = vadd.f32 0.0, %v1511
    %v1513 = vpop.f32.mrf.mxu0
    %1514 = vdwg.mxu0
    %v1515 = vmul.f32 %v564, 0.35355338
    %v1516 = vmul.f32 %v567, 0.35355338
    %v1517 = vmul.f32 %v627, 0.35355338
    %v1518 = vmul.f32 %v630, 0.35355338
    %v1519 = vmul.f32 %v690, 0.35355338
    %v1520 = vmul.f32 %v693, 0.35355338
    %v1521 = vmul.f32 %v753, 0.35355338
    %v1522 = vmul.f32 %v756, 0.35355338
    %v1523 = vmul.f32 %v816, 0.35355338
    %v1524 = vmul.f32 %v819, 0.35355338
    %v1525 = vmul.f32 %v879, 0.35355338
    %v1526 = vmul.f32 %v882, 0.35355338
    %v1527 = vmul.f32 %v942, 0.35355338
    %v1528 = vmul.f32 %v945, 0.35355338
    %v1529 = vmul.f32 %v1005, 0.35355338
    %v1530 = vmul.f32 %v1008, 0.35355338
    %v1531 = vmul.f32 %v1068, 0.35355338
    %v1532 = vmul.f32 %v1071, 0.35355338
    %v1533 = vmul.f32 %v1131, 0.35355338
    %v1534 = vmul.f32 %v1134, 0.35355338
    %v1535 = vmul.f32 %v1194, 0.35355338
    %v1536 = vmul.f32 %v1197, 0.35355338
    %v1537 = vmul.f32 %v1257, 0.35355338
    %v1538 = vmul.f32 %v1260, 0.35355338
    %v1539 = vmul.f32 %v1320, 0.35355338
    %v1540 = vmul.f32 %v1323, 0.35355338
    %v1541 = vmul.f32 %v1383, 0.35355338
    %v1542 = vmul.f32 %v1386, 0.35355338
    %v1543 = vmul.f32 %v1446, 0.35355338
    %v1544 = vmul.f32 %v1449, 0.35355338
    %v1545 = vmul.f32 %v1509, 0.35355338
    %v1546 = vmul.f32 %v1512, 0.35355338
    %vm1547 = vcmask 130048
    %v1548 = vsel %vm1547, %v1515, -inf
    %1549 = vmax.xlane.f32.xlu0 %v1548
    %v1550 = vpop.xlane.xlu0 %1549
    %v1551 = vsel %vm1547, %v1516, -inf
    %1552 = vmax.xlane.f32.xlu0 %v1551
    %v1553 = vpop.xlane.xlu0 %1552
    %v1554 = vsel %vm1547, %v1517, -inf
    %1555 = vmax.xlane.f32.xlu0 %v1554
    %v1556 = vpop.xlane.xlu0 %1555
    %v1557 = vsel %vm1547, %v1518, -inf
    %1558 = vmax.xlane.f32.xlu0 %v1557
    %v1559 = vpop.xlane.xlu0 %1558
    %v1560 = vsel %vm1547, %v1519, -inf
    %1561 = vmax.xlane.f32.xlu0 %v1560
    %v1562 = vpop.xlane.xlu0 %1561
    %v1563 = vsel %vm1547, %v1520, -inf
    %1564 = vmax.xlane.f32.xlu0 %v1563
    %v1565 = vpop.xlane.xlu0 %1564
    %v1566 = vsel %vm1547, %v1521, -inf
    %1567 = vmax.xlane.f32.xlu0 %v1566
    %v1568 = vpop.xlane.xlu0 %1567
    %v1569 = vsel %vm1547, %v1522, -inf
    %1570 = vmax.xlane.f32.xlu0 %v1569
    %v1571 = vpop.xlane.xlu0 %1570
    %v1572 = vsel %vm1547, %v1523, -inf
    %1573 = vmax.xlane.f32.xlu0 %v1572
    %v1574 = vpop.xlane.xlu0 %1573
    %v1575 = vsel %vm1547, %v1524, -inf
    %1576 = vmax.xlane.f32.xlu0 %v1575
    %v1577 = vpop.xlane.xlu0 %1576
    %v1578 = vsel %vm1547, %v1525, -inf
    %1579 = vmax.xlane.f32.xlu0 %v1578
    %v1580 = vpop.xlane.xlu0 %1579
    %v1581 = vsel %vm1547, %v1526, -inf
    %1582 = vmax.xlane.f32.xlu0 %v1581
    %v1583 = vpop.xlane.xlu0 %1582
    %v1584 = vsel %vm1547, %v1527, -inf
    %1585 = vmax.xlane.f32.xlu0 %v1584
    %v1586 = vpop.xlane.xlu0 %1585
    %v1587 = vsel %vm1547, %v1528, -inf
    %1588 = vmax.xlane.f32.xlu0 %v1587
    %v1589 = vpop.xlane.xlu0 %1588
    %v1590 = vsel %vm1547, %v1529, -inf
    %1591 = vmax.xlane.f32.xlu0 %v1590
    %v1592 = vpop.xlane.xlu0 %1591
    %v1593 = vsel %vm1547, %v1530, -inf
    %1594 = vmax.xlane.f32.xlu0 %v1593
    %v1595 = vpop.xlane.xlu0 %1594
    %v1596 = vsel %vm1547, %v1531, -inf
    %1597 = vmax.xlane.f32.xlu0 %v1596
    %v1598 = vpop.xlane.xlu0 %1597
    %v1599 = vsel %vm1547, %v1532, -inf
    %1600 = vmax.xlane.f32.xlu0 %v1599
    %v1601 = vpop.xlane.xlu0 %1600
    %v1602 = vsel %vm1547, %v1533, -inf
    %1603 = vmax.xlane.f32.xlu0 %v1602
    %v1604 = vpop.xlane.xlu0 %1603
    %v1605 = vsel %vm1547, %v1534, -inf
    %1606 = vmax.xlane.f32.xlu0 %v1605
    %v1607 = vpop.xlane.xlu0 %1606
    %v1608 = vsel %vm1547, %v1535, -inf
    %1609 = vmax.xlane.f32.xlu0 %v1608
    %v1610 = vpop.xlane.xlu0 %1609
    %v1611 = vsel %vm1547, %v1536, -inf
    %1612 = vmax.xlane.f32.xlu0 %v1611
    %v1613 = vpop.xlane.xlu0 %1612
    %v1614 = vsel %vm1547, %v1537, -inf
    %1615 = vmax.xlane.f32.xlu0 %v1614
    %v1616 = vpop.xlane.xlu0 %1615
    %v1617 = vsel %vm1547, %v1538, -inf
    %1618 = vmax.xlane.f32.xlu0 %v1617
    %v1619 = vpop.xlane.xlu0 %1618
    %v1620 = vsel %vm1547, %v1539, -inf
    %1621 = vmax.xlane.f32.xlu0 %v1620
    %v1622 = vpop.xlane.xlu0 %1621
    %v1623 = vsel %vm1547, %v1540, -inf
    %1624 = vmax.xlane.f32.xlu0 %v1623
    %v1625 = vpop.xlane.xlu0 %1624
    %v1626 = vsel %vm1547, %v1541, -inf
    %1627 = vmax.xlane.f32.xlu0 %v1626
    %v1628 = vpop.xlane.xlu0 %1627
    %v1629 = vsel %vm1547, %v1542, -inf
    %1630 = vmax.xlane.f32.xlu0 %v1629
    %v1631 = vpop.xlane.xlu0 %1630
    %v1632 = vsel %vm1547, %v1543, -inf
    %1633 = vmax.xlane.f32.xlu0 %v1632
    %v1634 = vpop.xlane.xlu0 %1633
    %v1635 = vsel %vm1547, %v1544, -inf
    %1636 = vmax.xlane.f32.xlu0 %v1635
    %v1637 = vpop.xlane.xlu0 %1636
    %v1638 = vsel %vm1547, %v1545, -inf
    %1639 = vmax.xlane.f32.xlu0 %v1638
    %v1640 = vpop.xlane.xlu0 %1639
    %v1641 = vsel %vm1547, %v1546, -inf
    %1642 = vmax.xlane.f32.xlu0 %v1641
    %v1643 = vpop.xlane.xlu0 %1642
    %v1644 = vsub.f32 %v1515, %v1550
    %v1645 = vsub.f32 %v1516, %v1553
    %v1646 = vsub.f32 %v1517, %v1556
    %v1647 = vsub.f32 %v1518, %v1559
    %v1648 = vsub.f32 %v1519, %v1562
    %v1649 = vsub.f32 %v1520, %v1565
    %v1650 = vsub.f32 %v1521, %v1568
    %v1651 = vsub.f32 %v1522, %v1571
    %v1652 = vsub.f32 %v1523, %v1574
    %v1653 = vsub.f32 %v1524, %v1577
    %v1654 = vsub.f32 %v1525, %v1580
    %v1655 = vsub.f32 %v1526, %v1583
    %v1656 = vsub.f32 %v1527, %v1586
    %v1657 = vsub.f32 %v1528, %v1589
    %v1658 = vsub.f32 %v1529, %v1592
    %v1659 = vsub.f32 %v1530, %v1595
    %v1660 = vsub.f32 %v1531, %v1598
    %v1661 = vsub.f32 %v1532, %v1601
    %v1662 = vsub.f32 %v1533, %v1604
    %v1663 = vsub.f32 %v1534, %v1607
    %v1664 = vsub.f32 %v1535, %v1610
    %v1665 = vsub.f32 %v1536, %v1613
    %v1666 = vsub.f32 %v1537, %v1616
    %v1667 = vsub.f32 %v1538, %v1619
    %v1668 = vsub.f32 %v1539, %v1622
    %v1669 = vsub.f32 %v1540, %v1625
    %v1670 = vsub.f32 %v1541, %v1628
    %v1671 = vsub.f32 %v1542, %v1631
    %v1672 = vsub.f32 %v1543, %v1634
    %v1673 = vsub.f32 %v1544, %v1637
    %v1674 = vsub.f32 %v1545, %v1640
    %v1675 = vsub.f32 %v1546, %v1643
    %v1676 = vmul.f32 %v1644, 1.442695
    %v1677 = vpow.pop %v1676
    %v1678 = vmul.f32 %v1645, 1.442695
    %v1679 = vpow.pop %v1678
    %v1680 = vmul.f32 %v1646, 1.442695
    %v1681 = vpow.pop %v1680
    %v1682 = vmul.f32 %v1647, 1.442695
    %v1683 = vpow.pop %v1682
    %v1684 = vmul.f32 %v1648, 1.442695
    %v1685 = vpow.pop %v1684
    %v1686 = vmul.f32 %v1649, 1.442695
    %v1687 = vpow.pop %v1686
    %v1688 = vmul.f32 %v1650, 1.442695
    %v1689 = vpow.pop %v1688
    %v1690 = vmul.f32 %v1651, 1.442695
    %v1691 = vpow.pop %v1690
    %v1692 = vmul.f32 %v1652, 1.442695
    %v1693 = vpow.pop %v1692
    %v1694 = vmul.f32 %v1653, 1.442695
    %v1695 = vpow.pop %v1694
    %v1696 = vmul.f32 %v1654, 1.442695
    %v1697 = vpow.pop %v1696
    %v1698 = vmul.f32 %v1655, 1.442695
    %v1699 = vpow.pop %v1698
    %v1700 = vmul.f32 %v1656, 1.442695
    %v1701 = vpow.pop %v1700
    %v1702 = vmul.f32 %v1657, 1.442695
    %v1703 = vpow.pop %v1702
    %v1704 = vmul.f32 %v1658, 1.442695
    %v1705 = vpow.pop %v1704
    %v1706 = vmul.f32 %v1659, 1.442695
    %v1707 = vpow.pop %v1706
    %v1708 = vmul.f32 %v1660, 1.442695
    %v1709 = vpow.pop %v1708
    %v1710 = vmul.f32 %v1661, 1.442695
    %v1711 = vpow.pop %v1710
    %v1712 = vmul.f32 %v1662, 1.442695
    %v1713 = vpow.pop %v1712
    %v1714 = vmul.f32 %v1663, 1.442695
    %v1715 = vpow.pop %v1714
    %v1716 = vmul.f32 %v1664, 1.442695
    %v1717 = vpow.pop %v1716
    %v1718 = vmul.f32 %v1665, 1.442695
    %v1719 = vpow.pop %v1718
    %v1720 = vmul.f32 %v1666, 1.442695
    %v1721 = vpow.pop %v1720
    %v1722 = vmul.f32 %v1667, 1.442695
    %v1723 = vpow.pop %v1722
    %v1724 = vmul.f32 %v1668, 1.442695
    %v1725 = vpow.pop %v1724
    %v1726 = vmul.f32 %v1669, 1.442695
    %v1727 = vpow.pop %v1726
    %v1728 = vmul.f32 %v1670, 1.442695
    %v1729 = vpow.pop %v1728
    %v1730 = vmul.f32 %v1671, 1.442695
    %v1731 = vpow.pop %v1730
    %v1732 = vmul.f32 %v1672, 1.442695
    %v1733 = vpow.pop %v1732
    %v1734 = vmul.f32 %v1673, 1.442695
    %v1735 = vpow.pop %v1734
    %v1736 = vmul.f32 %v1674, 1.442695
    %v1737 = vpow.pop %v1736
    %v1738 = vmul.f32 %v1675, 1.442695
    %v1739 = vpow.pop %v1738
    %v1740 = vsel %vm1547, %v1677, 0.0
    %1741 = vadd.xlane.f32.xlu0 %v1740
    %v1742 = vpop.xlane.xlu0 %1741
    %v1743 = vsel %vm1547, %v1679, 0.0
    %1744 = vadd.xlane.f32.xlu0 %v1743
    %v1745 = vpop.xlane.xlu0 %1744
    %v1746 = vsel %vm1547, %v1681, 0.0
    %1747 = vadd.xlane.f32.xlu0 %v1746
    %v1748 = vpop.xlane.xlu0 %1747
    %v1749 = vsel %vm1547, %v1683, 0.0
    %1750 = vadd.xlane.f32.xlu0 %v1749
    %v1751 = vpop.xlane.xlu0 %1750
    %v1752 = vsel %vm1547, %v1685, 0.0
    %1753 = vadd.xlane.f32.xlu0 %v1752
    %v1754 = vpop.xlane.xlu0 %1753
    %v1755 = vsel %vm1547, %v1687, 0.0
    %1756 = vadd.xlane.f32.xlu0 %v1755
    %v1757 = vpop.xlane.xlu0 %1756
    %v1758 = vsel %vm1547, %v1689, 0.0
    %1759 = vadd.xlane.f32.xlu0 %v1758
    %v1760 = vpop.xlane.xlu0 %1759
    %v1761 = vsel %vm1547, %v1691, 0.0
    %1762 = vadd.xlane.f32.xlu0 %v1761
    %v1763 = vpop.xlane.xlu0 %1762
    %v1764 = vsel %vm1547, %v1693, 0.0
    %1765 = vadd.xlane.f32.xlu0 %v1764
    %v1766 = vpop.xlane.xlu0 %1765
    %v1767 = vsel %vm1547, %v1695, 0.0
    %1768 = vadd.xlane.f32.xlu0 %v1767
    %v1769 = vpop.xlane.xlu0 %1768
    %v1770 = vsel %vm1547, %v1697, 0.0
    %1771 = vadd.xlane.f32.xlu0 %v1770
    %v1772 = vpop.xlane.xlu0 %1771
    %v1773 = vsel %vm1547, %v1699, 0.0
    %1774 = vadd.xlane.f32.xlu0 %v1773
    %v1775 = vpop.xlane.xlu0 %1774
    %v1776 = vsel %vm1547, %v1701, 0.0
    %1777 = vadd.xlane.f32.xlu0 %v1776
    %v1778 = vpop.xlane.xlu0 %1777
    %v1779 = vsel %vm1547, %v1703, 0.0
    %1780 = vadd.xlane.f32.xlu0 %v1779
    %v1781 = vpop.xlane.xlu0 %1780
    %v1782 = vsel %vm1547, %v1705, 0.0
    %1783 = vadd.xlane.f32.xlu0 %v1782
    %v1784 = vpop.xlane.xlu0 %1783
    %v1785 = vsel %vm1547, %v1707, 0.0
    %1786 = vadd.xlane.f32.xlu0 %v1785
    %v1787 = vpop.xlane.xlu0 %1786
    %v1788 = vsel %vm1547, %v1709, 0.0
    %1789 = vadd.xlane.f32.xlu0 %v1788
    %v1790 = vpop.xlane.xlu0 %1789
    %v1791 = vsel %vm1547, %v1711, 0.0
    %1792 = vadd.xlane.f32.xlu0 %v1791
    %v1793 = vpop.xlane.xlu0 %1792
    %v1794 = vsel %vm1547, %v1713, 0.0
    %1795 = vadd.xlane.f32.xlu0 %v1794
    %v1796 = vpop.xlane.xlu0 %1795
    %v1797 = vsel %vm1547, %v1715, 0.0
    %1798 = vadd.xlane.f32.xlu0 %v1797
    %v1799 = vpop.xlane.xlu0 %1798
    %v1800 = vsel %vm1547, %v1717, 0.0
    %1801 = vadd.xlane.f32.xlu0 %v1800
    %v1802 = vpop.xlane.xlu0 %1801
    %v1803 = vsel %vm1547, %v1719, 0.0
    %1804 = vadd.xlane.f32.xlu0 %v1803
    %v1805 = vpop.xlane.xlu0 %1804
    %v1806 = vsel %vm1547, %v1721, 0.0
    %1807 = vadd.xlane.f32.xlu0 %v1806
    %v1808 = vpop.xlane.xlu0 %1807
    %v1809 = vsel %vm1547, %v1723, 0.0
    %1810 = vadd.xlane.f32.xlu0 %v1809
    %v1811 = vpop.xlane.xlu0 %1810
    %v1812 = vsel %vm1547, %v1725, 0.0
    %1813 = vadd.xlane.f32.xlu0 %v1812
    %v1814 = vpop.xlane.xlu0 %1813
    %v1815 = vsel %vm1547, %v1727, 0.0
    %1816 = vadd.xlane.f32.xlu0 %v1815
    %v1817 = vpop.xlane.xlu0 %1816
    %v1818 = vsel %vm1547, %v1729, 0.0
    %1819 = vadd.xlane.f32.xlu0 %v1818
    %v1820 = vpop.xlane.xlu0 %1819
    %v1821 = vsel %vm1547, %v1731, 0.0
    %1822 = vadd.xlane.f32.xlu0 %v1821
    %v1823 = vpop.xlane.xlu0 %1822
    %v1824 = vsel %vm1547, %v1733, 0.0
    %1825 = vadd.xlane.f32.xlu0 %v1824
    %v1826 = vpop.xlane.xlu0 %1825
    %v1827 = vsel %vm1547, %v1735, 0.0
    %1828 = vadd.xlane.f32.xlu0 %v1827
    %v1829 = vpop.xlane.xlu0 %1828
    %v1830 = vsel %vm1547, %v1737, 0.0
    %1831 = vadd.xlane.f32.xlu0 %v1830
    %v1832 = vpop.xlane.xlu0 %1831
    %v1833 = vsel %vm1547, %v1739, 0.0
    %1834 = vadd.xlane.f32.xlu0 %v1833
    %v1835 = vpop.xlane.xlu0 %1834
    %v1836 = vrcp.pop %v1742
    %v1837 = vrcp.pop %v1745
    %v1838 = vrcp.pop %v1748
    %v1839 = vrcp.pop %v1751
    %v1840 = vrcp.pop %v1754
    %v1841 = vrcp.pop %v1757
    %v1842 = vrcp.pop %v1760
    %v1843 = vrcp.pop %v1763
    %v1844 = vrcp.pop %v1766
    %v1845 = vrcp.pop %v1769
    %v1846 = vrcp.pop %v1772
    %v1847 = vrcp.pop %v1775
    %v1848 = vrcp.pop %v1778
    %v1849 = vrcp.pop %v1781
    %v1850 = vrcp.pop %v1784
    %v1851 = vrcp.pop %v1787
    %v1852 = vrcp.pop %v1790
    %v1853 = vrcp.pop %v1793
    %v1854 = vrcp.pop %v1796
    %v1855 = vrcp.pop %v1799
    %v1856 = vrcp.pop %v1802
    %v1857 = vrcp.pop %v1805
    %v1858 = vrcp.pop %v1808
    %v1859 = vrcp.pop %v1811
    %v1860 = vrcp.pop %v1814
    %v1861 = vrcp.pop %v1817
    %v1862 = vrcp.pop %v1820
    %v1863 = vrcp.pop %v1823
    %v1864 = vrcp.pop %v1826
    %v1865 = vrcp.pop %v1829
    %v1866 = vrcp.pop %v1832
    %v1867 = vrcp.pop %v1835
    %v1868 = vmul.f32 %v1677, %v1836
    %v1869 = vmul.f32 %v1679, %v1837
    %v1870 = vmul.f32 %v1681, %v1838
    %v1871 = vmul.f32 %v1683, %v1839
    %v1872 = vmul.f32 %v1685, %v1840
    %v1873 = vmul.f32 %v1687, %v1841
    %v1874 = vmul.f32 %v1689, %v1842
    %v1875 = vmul.f32 %v1691, %v1843
    %v1876 = vmul.f32 %v1693, %v1844
    %v1877 = vmul.f32 %v1695, %v1845
    %v1878 = vmul.f32 %v1697, %v1846
    %v1879 = vmul.f32 %v1699, %v1847
    %v1880 = vmul.f32 %v1701, %v1848
    %v1881 = vmul.f32 %v1703, %v1849
    %v1882 = vmul.f32 %v1705, %v1850
    %v1883 = vmul.f32 %v1707, %v1851
    %v1884 = vmul.f32 %v1709, %v1852
    %v1885 = vmul.f32 %v1711, %v1853
    %v1886 = vmul.f32 %v1713, %v1854
    %v1887 = vmul.f32 %v1715, %v1855
    %v1888 = vmul.f32 %v1717, %v1856
    %v1889 = vmul.f32 %v1719, %v1857
    %v1890 = vmul.f32 %v1721, %v1858
    %v1891 = vmul.f32 %v1723, %v1859
    %v1892 = vmul.f32 %v1725, %v1860
    %v1893 = vmul.f32 %v1727, %v1861
    %v1894 = vmul.f32 %v1729, %v1862
    %v1895 = vmul.f32 %v1731, %v1863
    %v1896 = vmul.f32 %v1733, %v1864
    %v1897 = vmul.f32 %v1735, %v1865
    %v1898 = vmul.f32 %v1737, %v1866
    %v1899 = vmul.f32 %v1739, %v1867
    %v1900 = vpack.c.bf16 %v1869, %v1868
    %v1901 = vpack.c.bf16 %v1871, %v1870
    %v1902 = vpack.c.bf16 %v1873, %v1872
    %v1903 = vpack.c.bf16 %v1875, %v1874
    %v1904 = vpack.c.bf16 %v1877, %v1876
    %v1905 = vpack.c.bf16 %v1879, %v1878
    %v1906 = vpack.c.bf16 %v1881, %v1880
    %v1907 = vpack.c.bf16 %v1883, %v1882
    %v1908 = vpack.c.bf16 %v1885, %v1884
    %v1909 = vpack.c.bf16 %v1887, %v1886
    %v1910 = vpack.c.bf16 %v1889, %v1888
    %v1911 = vpack.c.bf16 %v1891, %v1890
    %v1912 = vpack.c.bf16 %v1893, %v1892
    %v1913 = vpack.c.bf16 %v1895, %v1894
    %v1914 = vpack.c.bf16 %v1897, %v1896
    %v1915 = vpack.c.bf16 %v1899, %v1898
    %v1917 = vsel %vm1547, %v489, 0
    %v1920 = vsel %vm1547, %v1900, 0
    %1922 = vmatprep.subr.bf16.mxu0 0
    %1923 = vmatpush1.bf16.xpose.msra.mxu0 0
    %1924 = vmatprep.subr.bf16.mxu0 0
    %1925 = vmatpush1.bf16.xpose.msra.mxu0 0
    %1926 = vmatprep.subr.bf16.mxu0 0
    %1927 = vmatpush1.bf16.xpose.msra.mxu0 0
    %1928 = vmatprep.subr.bf16.mxu0 0
    %1929 = vmatpush1.bf16.xpose.msra.mxu0 0
    %1930 = vmatprep.subr.bf16.mxu0 0
    %1931 = vmatpush1.bf16.xpose.msra.mxu0 0
    %1932 = vmatprep.subr.bf16.mxu0 0
    %1933 = vmatpush1.bf16.xpose.msra.mxu0 0
    %1934 = vmatprep.subr.bf16.mxu0 0
    %1935 = vmatpush1.bf16.xpose.msra.mxu0 0
    %1936 = vmatprep.subr.bf16.mxu0 0
    %1937 = vmatpush1.bf16.xpose.msra.mxu0 %v1920
    %1938 = vmatprep.subr.bf16.mxu0 0
    %1939 = vmatpush2.bf16.xpose.msra.mxu0 0
    %1940 = vmatprep.subr.bf16.mxu0 0
    %1941 = vmatpush2.bf16.xpose.msra.mxu0 0
    %1942 = vmatprep.subr.bf16.mxu0 0
    %1943 = vmatpush2.bf16.xpose.msra.mxu0 0
    %1944 = vmatprep.subr.bf16.mxu0 0
    %1945 = vmatpush2.bf16.xpose.msra.mxu0 0
    %1946 = vmatprep.subr.bf16.mxu0 0
    %1947 = vmatpush2.bf16.xpose.msra.mxu0 0
    %1948 = vmatprep.subr.bf16.mxu0 0
    %1949 = vmatpush2.bf16.xpose.msra.mxu0 0
    %1950 = vmatprep.subr.bf16.mxu0 0
    %1951 = vmatpush2.bf16.xpose.msra.mxu0 0
    %1952 = vmatprep.subr.bf16.mxu0 0
    %1953 = vmatpush2.bf16.xpose.msra.mxu0 0
    %1954 = vmatprep.mubr.bf16.mxu0 0
    %1955 = vmatmul.mubr.bf16.gmra.mxu0 %v1917
    %v1956 = vpop.f32.mrf.mxu0
    %v1957 = vadd.f32 0.0, %v1956
    %v1958 = vpop.f32.mrf.mxu0
    %v1959 = vpop.f32.mrf.mxu0
    %v1960 = vpop.f32.mrf.mxu0
    %1961 = vdwg.mxu0
    %v1963 = vsel %vm1547, %v490, 0
    %v1966 = vsel %vm1547, %v1901, 0
    %1968 = vmatprep.subr.bf16.mxu0 0
    %1969 = vmatpush1.bf16.xpose.msra.mxu0 0
    %1970 = vmatprep.subr.bf16.mxu0 0
    %1971 = vmatpush1.bf16.xpose.msra.mxu0 0
    %1972 = vmatprep.subr.bf16.mxu0 0
    %1973 = vmatpush1.bf16.xpose.msra.mxu0 0
    %1974 = vmatprep.subr.bf16.mxu0 0
    %1975 = vmatpush1.bf16.xpose.msra.mxu0 0
    %1976 = vmatprep.subr.bf16.mxu0 0
    %1977 = vmatpush1.bf16.xpose.msra.mxu0 0
    %1978 = vmatprep.subr.bf16.mxu0 0
    %1979 = vmatpush1.bf16.xpose.msra.mxu0 0
    %1980 = vmatprep.subr.bf16.mxu0 0
    %1981 = vmatpush1.bf16.xpose.msra.mxu0 0
    %1982 = vmatprep.subr.bf16.mxu0 0
    %1983 = vmatpush1.bf16.xpose.msra.mxu0 %v1966
    %1984 = vmatprep.subr.bf16.mxu0 0
    %1985 = vmatpush2.bf16.xpose.msra.mxu0 0
    %1986 = vmatprep.subr.bf16.mxu0 0
    %1987 = vmatpush2.bf16.xpose.msra.mxu0 0
    %1988 = vmatprep.subr.bf16.mxu0 0
    %1989 = vmatpush2.bf16.xpose.msra.mxu0 0
    %1990 = vmatprep.subr.bf16.mxu0 0
    %1991 = vmatpush2.bf16.xpose.msra.mxu0 0
    %1992 = vmatprep.subr.bf16.mxu0 0
    %1993 = vmatpush2.bf16.xpose.msra.mxu0 0
    %1994 = vmatprep.subr.bf16.mxu0 0
    %1995 = vmatpush2.bf16.xpose.msra.mxu0 0
    %1996 = vmatprep.subr.bf16.mxu0 0
    %1997 = vmatpush2.bf16.xpose.msra.mxu0 0
    %1998 = vmatprep.subr.bf16.mxu0 0
    %1999 = vmatpush2.bf16.xpose.msra.mxu0 0
    %2000 = vmatprep.mubr.bf16.mxu0 0
    %2001 = vmatmul.mubr.bf16.gmra.mxu0 %v1963
    %v2002 = vpop.f32.mrf.mxu0
    %v2003 = vadd.f32 0.0, %v2002
    %v2004 = vpop.f32.mrf.mxu0
    %v2005 = vpop.f32.mrf.mxu0
    %v2006 = vpop.f32.mrf.mxu0
    %2007 = vdwg.mxu0
    %v2009 = vsel %vm1547, %v491, 0
    %v2012 = vsel %vm1547, %v1902, 0
    %2014 = vmatprep.subr.bf16.mxu0 0
    %2015 = vmatpush1.bf16.xpose.msra.mxu0 0
    %2016 = vmatprep.subr.bf16.mxu0 0
    %2017 = vmatpush1.bf16.xpose.msra.mxu0 0
    %2018 = vmatprep.subr.bf16.mxu0 0
    %2019 = vmatpush1.bf16.xpose.msra.mxu0 0
    %2020 = vmatprep.subr.bf16.mxu0 0
    %2021 = vmatpush1.bf16.xpose.msra.mxu0 0
    %2022 = vmatprep.subr.bf16.mxu0 0
    %2023 = vmatpush1.bf16.xpose.msra.mxu0 0
    %2024 = vmatprep.subr.bf16.mxu0 0
    %2025 = vmatpush1.bf16.xpose.msra.mxu0 0
    %2026 = vmatprep.subr.bf16.mxu0 0
    %2027 = vmatpush1.bf16.xpose.msra.mxu0 0
    %2028 = vmatprep.subr.bf16.mxu0 0
    %2029 = vmatpush1.bf16.xpose.msra.mxu0 %v2012
    %2030 = vmatprep.subr.bf16.mxu0 0
    %2031 = vmatpush2.bf16.xpose.msra.mxu0 0
    %2032 = vmatprep.subr.bf16.mxu0 0
    %2033 = vmatpush2.bf16.xpose.msra.mxu0 0
    %2034 = vmatprep.subr.bf16.mxu0 0
    %2035 = vmatpush2.bf16.xpose.msra.mxu0 0
    %2036 = vmatprep.subr.bf16.mxu0 0
    %2037 = vmatpush2.bf16.xpose.msra.mxu0 0
    %2038 = vmatprep.subr.bf16.mxu0 0
    %2039 = vmatpush2.bf16.xpose.msra.mxu0 0
    %2040 = vmatprep.subr.bf16.mxu0 0
    %2041 = vmatpush2.bf16.xpose.msra.mxu0 0
    %2042 = vmatprep.subr.bf16.mxu0 0
    %2043 = vmatpush2.bf16.xpose.msra.mxu0 0
    %2044 = vmatprep.subr.bf16.mxu0 0
    %2045 = vmatpush2.bf16.xpose.msra.mxu0 0
    %2046 = vmatprep.mubr.bf16.mxu0 0
    %2047 = vmatmul.mubr.bf16.gmra.mxu0 %v2009
    %v2048 = vpop.f32.mrf.mxu0
    %v2049 = vadd.f32 0.0, %v2048
    %v2050 = vpop.f32.mrf.mxu0
    %v2051 = vpop.f32.mrf.mxu0
    %v2052 = vpop.f32.mrf.mxu0
    %2053 = vdwg.mxu0
    %v2055 = vsel %vm1547, %v492, 0
    %v2058 = vsel %vm1547, %v1903, 0
    %2060 = vmatprep.subr.bf16.mxu0 0
    %2061 = vmatpush1.bf16.xpose.msra.mxu0 0
    %2062 = vmatprep.subr.bf16.mxu0 0
    %2063 = vmatpush1.bf16.xpose.msra.mxu0 0
    %2064 = vmatprep.subr.bf16.mxu0 0
    %2065 = vmatpush1.bf16.xpose.msra.mxu0 0
    %2066 = vmatprep.subr.bf16.mxu0 0
    %2067 = vmatpush1.bf16.xpose.msra.mxu0 0
    %2068 = vmatprep.subr.bf16.mxu0 0
    %2069 = vmatpush1.bf16.xpose.msra.mxu0 0
    %2070 = vmatprep.subr.bf16.mxu0 0
    %2071 = vmatpush1.bf16.xpose.msra.mxu0 0
    %2072 = vmatprep.subr.bf16.mxu0 0
    %2073 = vmatpush1.bf16.xpose.msra.mxu0 0
    %2074 = vmatprep.subr.bf16.mxu0 0
    %2075 = vmatpush1.bf16.xpose.msra.mxu0 %v2058
    %2076 = vmatprep.subr.bf16.mxu0 0
    %2077 = vmatpush2.bf16.xpose.msra.mxu0 0
    %2078 = vmatprep.subr.bf16.mxu0 0
    %2079 = vmatpush2.bf16.xpose.msra.mxu0 0
    %2080 = vmatprep.subr.bf16.mxu0 0
    %2081 = vmatpush2.bf16.xpose.msra.mxu0 0
    %2082 = vmatprep.subr.bf16.mxu0 0
    %2083 = vmatpush2.bf16.xpose.msra.mxu0 0
    %2084 = vmatprep.subr.bf16.mxu0 0
    %2085 = vmatpush2.bf16.xpose.msra.mxu0 0
    %2086 = vmatprep.subr.bf16.mxu0 0
    %2087 = vmatpush2.bf16.xpose.msra.mxu0 0
    %2088 = vmatprep.subr.bf16.mxu0 0
    %2089 = vmatpush2.bf16.xpose.msra.mxu0 0
    %2090 = vmatprep.subr.bf16.mxu0 0
    %2091 = vmatpush2.bf16.xpose.msra.mxu0 0
    %2092 = vmatprep.mubr.bf16.mxu0 0
    %2093 = vmatmul.mubr.bf16.gmra.mxu0 %v2055
    %v2094 = vpop.f32.mrf.mxu0
    %v2095 = vadd.f32 0.0, %v2094
    %v2096 = vpop.f32.mrf.mxu0
    %v2097 = vpop.f32.mrf.mxu0
    %v2098 = vpop.f32.mrf.mxu0
    %2099 = vdwg.mxu0
    %v2101 = vsel %vm1547, %v493, 0
    %v2104 = vsel %vm1547, %v1904, 0
    %2106 = vmatprep.subr.bf16.mxu0 0
    %2107 = vmatpush1.bf16.xpose.msra.mxu0 0
    %2108 = vmatprep.subr.bf16.mxu0 0
    %2109 = vmatpush1.bf16.xpose.msra.mxu0 0
    %2110 = vmatprep.subr.bf16.mxu0 0
    %2111 = vmatpush1.bf16.xpose.msra.mxu0 0
    %2112 = vmatprep.subr.bf16.mxu0 0
    %2113 = vmatpush1.bf16.xpose.msra.mxu0 0
    %2114 = vmatprep.subr.bf16.mxu0 0
    %2115 = vmatpush1.bf16.xpose.msra.mxu0 0
    %2116 = vmatprep.subr.bf16.mxu0 0
    %2117 = vmatpush1.bf16.xpose.msra.mxu0 0
    %2118 = vmatprep.subr.bf16.mxu0 0
    %2119 = vmatpush1.bf16.xpose.msra.mxu0 0
    %2120 = vmatprep.subr.bf16.mxu0 0
    %2121 = vmatpush1.bf16.xpose.msra.mxu0 %v2104
    %2122 = vmatprep.subr.bf16.mxu0 0
    %2123 = vmatpush2.bf16.xpose.msra.mxu0 0
    %2124 = vmatprep.subr.bf16.mxu0 0
    %2125 = vmatpush2.bf16.xpose.msra.mxu0 0
    %2126 = vmatprep.subr.bf16.mxu0 0
    %2127 = vmatpush2.bf16.xpose.msra.mxu0 0
    %2128 = vmatprep.subr.bf16.mxu0 0
    %2129 = vmatpush2.bf16.xpose.msra.mxu0 0
    %2130 = vmatprep.subr.bf16.mxu0 0
    %2131 = vmatpush2.bf16.xpose.msra.mxu0 0
    %2132 = vmatprep.subr.bf16.mxu0 0
    %2133 = vmatpush2.bf16.xpose.msra.mxu0 0
    %2134 = vmatprep.subr.bf16.mxu0 0
    %2135 = vmatpush2.bf16.xpose.msra.mxu0 0
    %2136 = vmatprep.subr.bf16.mxu0 0
    %2137 = vmatpush2.bf16.xpose.msra.mxu0 0
    %2138 = vmatprep.mubr.bf16.mxu0 0
    %2139 = vmatmul.mubr.bf16.gmra.mxu0 %v2101
    %v2140 = vpop.f32.mrf.mxu0
    %v2141 = vadd.f32 0.0, %v2140
    %v2142 = vpop.f32.mrf.mxu0
    %v2143 = vpop.f32.mrf.mxu0
    %v2144 = vpop.f32.mrf.mxu0
    %2145 = vdwg.mxu0
    %v2147 = vsel %vm1547, %v494, 0
    %v2150 = vsel %vm1547, %v1905, 0
    %2152 = vmatprep.subr.bf16.mxu0 0
    %2153 = vmatpush1.bf16.xpose.msra.mxu0 0
    %2154 = vmatprep.subr.bf16.mxu0 0
    %2155 = vmatpush1.bf16.xpose.msra.mxu0 0
    %2156 = vmatprep.subr.bf16.mxu0 0
    %2157 = vmatpush1.bf16.xpose.msra.mxu0 0
    %2158 = vmatprep.subr.bf16.mxu0 0
    %2159 = vmatpush1.bf16.xpose.msra.mxu0 0
    %2160 = vmatprep.subr.bf16.mxu0 0
    %2161 = vmatpush1.bf16.xpose.msra.mxu0 0
    %2162 = vmatprep.subr.bf16.mxu0 0
    %2163 = vmatpush1.bf16.xpose.msra.mxu0 0
    %2164 = vmatprep.subr.bf16.mxu0 0
    %2165 = vmatpush1.bf16.xpose.msra.mxu0 0
    %2166 = vmatprep.subr.bf16.mxu0 0
    %2167 = vmatpush1.bf16.xpose.msra.mxu0 %v2150
    %2168 = vmatprep.subr.bf16.mxu0 0
    %2169 = vmatpush2.bf16.xpose.msra.mxu0 0
    %2170 = vmatprep.subr.bf16.mxu0 0
    %2171 = vmatpush2.bf16.xpose.msra.mxu0 0
    %2172 = vmatprep.subr.bf16.mxu0 0
    %2173 = vmatpush2.bf16.xpose.msra.mxu0 0
    %2174 = vmatprep.subr.bf16.mxu0 0
    %2175 = vmatpush2.bf16.xpose.msra.mxu0 0
    %2176 = vmatprep.subr.bf16.mxu0 0
    %2177 = vmatpush2.bf16.xpose.msra.mxu0 0
    %2178 = vmatprep.subr.bf16.mxu0 0
    %2179 = vmatpush2.bf16.xpose.msra.mxu0 0
    %2180 = vmatprep.subr.bf16.mxu0 0
    %2181 = vmatpush2.bf16.xpose.msra.mxu0 0
    %2182 = vmatprep.subr.bf16.mxu0 0
    %2183 = vmatpush2.bf16.xpose.msra.mxu0 0
    %2184 = vmatprep.mubr.bf16.mxu0 0
    %2185 = vmatmul.mubr.bf16.gmra.mxu0 %v2147
    %v2186 = vpop.f32.mrf.mxu0
    %v2187 = vadd.f32 0.0, %v2186
    %v2188 = vpop.f32.mrf.mxu0
    %v2189 = vpop.f32.mrf.mxu0
    %v2190 = vpop.f32.mrf.mxu0
    %2191 = vdwg.mxu0
    %v2193 = vsel %vm1547, %v495, 0
    %v2196 = vsel %vm1547, %v1906, 0
    %2198 = vmatprep.subr.bf16.mxu0 0
    %2199 = vmatpush1.bf16.xpose.msra.mxu0 0
    %2200 = vmatprep.subr.bf16.mxu0 0
    %2201 = vmatpush1.bf16.xpose.msra.mxu0 0
    %2202 = vmatprep.subr.bf16.mxu0 0
    %2203 = vmatpush1.bf16.xpose.msra.mxu0 0
    %2204 = vmatprep.subr.bf16.mxu0 0
    %2205 = vmatpush1.bf16.xpose.msra.mxu0 0
    %2206 = vmatprep.subr.bf16.mxu0 0
    %2207 = vmatpush1.bf16.xpose.msra.mxu0 0
    %2208 = vmatprep.subr.bf16.mxu0 0
    %2209 = vmatpush1.bf16.xpose.msra.mxu0 0
    %2210 = vmatprep.subr.bf16.mxu0 0
    %2211 = vmatpush1.bf16.xpose.msra.mxu0 0
    %2212 = vmatprep.subr.bf16.mxu0 0
    %2213 = vmatpush1.bf16.xpose.msra.mxu0 %v2196
    %2214 = vmatprep.subr.bf16.mxu0 0
    %2215 = vmatpush2.bf16.xpose.msra.mxu0 0
    %2216 = vmatprep.subr.bf16.mxu0 0
    %2217 = vmatpush2.bf16.xpose.msra.mxu0 0
    %2218 = vmatprep.subr.bf16.mxu0 0
    %2219 = vmatpush2.bf16.xpose.msra.mxu0 0
    %2220 = vmatprep.subr.bf16.mxu0 0
    %2221 = vmatpush2.bf16.xpose.msra.mxu0 0
    %2222 = vmatprep.subr.bf16.mxu0 0
    %2223 = vmatpush2.bf16.xpose.msra.mxu0 0
    %2224 = vmatprep.subr.bf16.mxu0 0
    %2225 = vmatpush2.bf16.xpose.msra.mxu0 0
    %2226 = vmatprep.subr.bf16.mxu0 0
    %2227 = vmatpush2.bf16.xpose.msra.mxu0 0
    %2228 = vmatprep.subr.bf16.mxu0 0
    %2229 = vmatpush2.bf16.xpose.msra.mxu0 0
    %2230 = vmatprep.mubr.bf16.mxu0 0
    %2231 = vmatmul.mubr.bf16.gmra.mxu0 %v2193
    %v2232 = vpop.f32.mrf.mxu0
    %v2233 = vadd.f32 0.0, %v2232
    %v2234 = vpop.f32.mrf.mxu0
    %v2235 = vpop.f32.mrf.mxu0
    %v2236 = vpop.f32.mrf.mxu0
    %2237 = vdwg.mxu0
    %v2239 = vsel %vm1547, %v496, 0
    %v2242 = vsel %vm1547, %v1907, 0
    %2244 = vmatprep.subr.bf16.mxu0 0
    %2245 = vmatpush1.bf16.xpose.msra.mxu0 0
    %2246 = vmatprep.subr.bf16.mxu0 0
    %2247 = vmatpush1.bf16.xpose.msra.mxu0 0
    %2248 = vmatprep.subr.bf16.mxu0 0
    %2249 = vmatpush1.bf16.xpose.msra.mxu0 0
    %2250 = vmatprep.subr.bf16.mxu0 0
    %2251 = vmatpush1.bf16.xpose.msra.mxu0 0
    %2252 = vmatprep.subr.bf16.mxu0 0
    %2253 = vmatpush1.bf16.xpose.msra.mxu0 0
    %2254 = vmatprep.subr.bf16.mxu0 0
    %2255 = vmatpush1.bf16.xpose.msra.mxu0 0
    %2256 = vmatprep.subr.bf16.mxu0 0
    %2257 = vmatpush1.bf16.xpose.msra.mxu0 0
    %2258 = vmatprep.subr.bf16.mxu0 0
    %2259 = vmatpush1.bf16.xpose.msra.mxu0 %v2242
    %2260 = vmatprep.subr.bf16.mxu0 0
    %2261 = vmatpush2.bf16.xpose.msra.mxu0 0
    %2262 = vmatprep.subr.bf16.mxu0 0
    %2263 = vmatpush2.bf16.xpose.msra.mxu0 0
    %2264 = vmatprep.subr.bf16.mxu0 0
    %2265 = vmatpush2.bf16.xpose.msra.mxu0 0
    %2266 = vmatprep.subr.bf16.mxu0 0
    %2267 = vmatpush2.bf16.xpose.msra.mxu0 0
    %2268 = vmatprep.subr.bf16.mxu0 0
    %2269 = vmatpush2.bf16.xpose.msra.mxu0 0
    %2270 = vmatprep.subr.bf16.mxu0 0
    %2271 = vmatpush2.bf16.xpose.msra.mxu0 0
    %2272 = vmatprep.subr.bf16.mxu0 0
    %2273 = vmatpush2.bf16.xpose.msra.mxu0 0
    %2274 = vmatprep.subr.bf16.mxu0 0
    %2275 = vmatpush2.bf16.xpose.msra.mxu0 0
    %2276 = vmatprep.mubr.bf16.mxu0 0
    %2277 = vmatmul.mubr.bf16.gmra.mxu0 %v2239
    %v2278 = vpop.f32.mrf.mxu0
    %v2279 = vadd.f32 0.0, %v2278
    %v2280 = vpop.f32.mrf.mxu0
    %v2281 = vpop.f32.mrf.mxu0
    %v2282 = vpop.f32.mrf.mxu0
    %2283 = vdwg.mxu0
    %v2285 = vsel %vm1547, %v497, 0
    %v2288 = vsel %vm1547, %v1908, 0
    %2290 = vmatprep.subr.bf16.mxu0 0
    %2291 = vmatpush1.bf16.xpose.msra.mxu0 0
    %2292 = vmatprep.subr.bf16.mxu0 0
    %2293 = vmatpush1.bf16.xpose.msra.mxu0 0
    %2294 = vmatprep.subr.bf16.mxu0 0
    %2295 = vmatpush1.bf16.xpose.msra.mxu0 0
    %2296 = vmatprep.subr.bf16.mxu0 0
    %2297 = vmatpush1.bf16.xpose.msra.mxu0 0
    %2298 = vmatprep.subr.bf16.mxu0 0
    %2299 = vmatpush1.bf16.xpose.msra.mxu0 0
    %2300 = vmatprep.subr.bf16.mxu0 0
    %2301 = vmatpush1.bf16.xpose.msra.mxu0 0
    %2302 = vmatprep.subr.bf16.mxu0 0
    %2303 = vmatpush1.bf16.xpose.msra.mxu0 0
    %2304 = vmatprep.subr.bf16.mxu0 0
    %2305 = vmatpush1.bf16.xpose.msra.mxu0 %v2288
    %2306 = vmatprep.subr.bf16.mxu0 0
    %2307 = vmatpush2.bf16.xpose.msra.mxu0 0
    %2308 = vmatprep.subr.bf16.mxu0 0
    %2309 = vmatpush2.bf16.xpose.msra.mxu0 0
    %2310 = vmatprep.subr.bf16.mxu0 0
    %2311 = vmatpush2.bf16.xpose.msra.mxu0 0
    %2312 = vmatprep.subr.bf16.mxu0 0
    %2313 = vmatpush2.bf16.xpose.msra.mxu0 0
    %2314 = vmatprep.subr.bf16.mxu0 0
    %2315 = vmatpush2.bf16.xpose.msra.mxu0 0
    %2316 = vmatprep.subr.bf16.mxu0 0
    %2317 = vmatpush2.bf16.xpose.msra.mxu0 0
    %2318 = vmatprep.subr.bf16.mxu0 0
    %2319 = vmatpush2.bf16.xpose.msra.mxu0 0
    %2320 = vmatprep.subr.bf16.mxu0 0
    %2321 = vmatpush2.bf16.xpose.msra.mxu0 0
    %2322 = vmatprep.mubr.bf16.mxu0 0
    %2323 = vmatmul.mubr.bf16.gmra.mxu0 %v2285
    %v2324 = vpop.f32.mrf.mxu0
    %v2325 = vadd.f32 0.0, %v2324
    %v2326 = vpop.f32.mrf.mxu0
    %v2327 = vpop.f32.mrf.mxu0
    %v2328 = vpop.f32.mrf.mxu0
    %2329 = vdwg.mxu0
    %v2331 = vsel %vm1547, %v498, 0
    %v2334 = vsel %vm1547, %v1909, 0
    %2336 = vmatprep.subr.bf16.mxu0 0
    %2337 = vmatpush1.bf16.xpose.msra.mxu0 0
    %2338 = vmatprep.subr.bf16.mxu0 0
    %2339 = vmatpush1.bf16.xpose.msra.mxu0 0
    %2340 = vmatprep.subr.bf16.mxu0 0
    %2341 = vmatpush1.bf16.xpose.msra.mxu0 0
    %2342 = vmatprep.subr.bf16.mxu0 0
    %2343 = vmatpush1.bf16.xpose.msra.mxu0 0
    %2344 = vmatprep.subr.bf16.mxu0 0
    %2345 = vmatpush1.bf16.xpose.msra.mxu0 0
    %2346 = vmatprep.subr.bf16.mxu0 0
    %2347 = vmatpush1.bf16.xpose.msra.mxu0 0
    %2348 = vmatprep.subr.bf16.mxu0 0
    %2349 = vmatpush1.bf16.xpose.msra.mxu0 0
    %2350 = vmatprep.subr.bf16.mxu0 0
    %2351 = vmatpush1.bf16.xpose.msra.mxu0 %v2334
    %2352 = vmatprep.subr.bf16.mxu0 0
    %2353 = vmatpush2.bf16.xpose.msra.mxu0 0
    %2354 = vmatprep.subr.bf16.mxu0 0
    %2355 = vmatpush2.bf16.xpose.msra.mxu0 0
    %2356 = vmatprep.subr.bf16.mxu0 0
    %2357 = vmatpush2.bf16.xpose.msra.mxu0 0
    %2358 = vmatprep.subr.bf16.mxu0 0
    %2359 = vmatpush2.bf16.xpose.msra.mxu0 0
    %2360 = vmatprep.subr.bf16.mxu0 0
    %2361 = vmatpush2.bf16.xpose.msra.mxu0 0
    %2362 = vmatprep.subr.bf16.mxu0 0
    %2363 = vmatpush2.bf16.xpose.msra.mxu0 0
    %2364 = vmatprep.subr.bf16.mxu0 0
    %2365 = vmatpush2.bf16.xpose.msra.mxu0 0
    %2366 = vmatprep.subr.bf16.mxu0 0
    %2367 = vmatpush2.bf16.xpose.msra.mxu0 0
    %2368 = vmatprep.mubr.bf16.mxu0 0
    %2369 = vmatmul.mubr.bf16.gmra.mxu0 %v2331
    %v2370 = vpop.f32.mrf.mxu0
    %v2371 = vadd.f32 0.0, %v2370
    %v2372 = vpop.f32.mrf.mxu0
    %v2373 = vpop.f32.mrf.mxu0
    %v2374 = vpop.f32.mrf.mxu0
    %2375 = vdwg.mxu0
    %v2377 = vsel %vm1547, %v499, 0
    %v2380 = vsel %vm1547, %v1910, 0
    %2382 = vmatprep.subr.bf16.mxu0 0
    %2383 = vmatpush1.bf16.xpose.msra.mxu0 0
    %2384 = vmatprep.subr.bf16.mxu0 0
    %2385 = vmatpush1.bf16.xpose.msra.mxu0 0
    %2386 = vmatprep.subr.bf16.mxu0 0
    %2387 = vmatpush1.bf16.xpose.msra.mxu0 0
    %2388 = vmatprep.subr.bf16.mxu0 0
    %2389 = vmatpush1.bf16.xpose.msra.mxu0 0
    %2390 = vmatprep.subr.bf16.mxu0 0
    %2391 = vmatpush1.bf16.xpose.msra.mxu0 0
    %2392 = vmatprep.subr.bf16.mxu0 0
    %2393 = vmatpush1.bf16.xpose.msra.mxu0 0
    %2394 = vmatprep.subr.bf16.mxu0 0
    %2395 = vmatpush1.bf16.xpose.msra.mxu0 0
    %2396 = vmatprep.subr.bf16.mxu0 0
    %2397 = vmatpush1.bf16.xpose.msra.mxu0 %v2380
    %2398 = vmatprep.subr.bf16.mxu0 0
    %2399 = vmatpush2.bf16.xpose.msra.mxu0 0
    %2400 = vmatprep.subr.bf16.mxu0 0
    %2401 = vmatpush2.bf16.xpose.msra.mxu0 0
    %2402 = vmatprep.subr.bf16.mxu0 0
    %2403 = vmatpush2.bf16.xpose.msra.mxu0 0
    %2404 = vmatprep.subr.bf16.mxu0 0
    %2405 = vmatpush2.bf16.xpose.msra.mxu0 0
    %2406 = vmatprep.subr.bf16.mxu0 0
    %2407 = vmatpush2.bf16.xpose.msra.mxu0 0
    %2408 = vmatprep.subr.bf16.mxu0 0
    %2409 = vmatpush2.bf16.xpose.msra.mxu0 0
    %2410 = vmatprep.subr.bf16.mxu0 0
    %2411 = vmatpush2.bf16.xpose.msra.mxu0 0
    %2412 = vmatprep.subr.bf16.mxu0 0
    %2413 = vmatpush2.bf16.xpose.msra.mxu0 0
    %2414 = vmatprep.mubr.bf16.mxu0 0
    %2415 = vmatmul.mubr.bf16.gmra.mxu0 %v2377
    %v2416 = vpop.f32.mrf.mxu0
    %v2417 = vadd.f32 0.0, %v2416
    %v2418 = vpop.f32.mrf.mxu0
    %v2419 = vpop.f32.mrf.mxu0
    %v2420 = vpop.f32.mrf.mxu0
    %2421 = vdwg.mxu0
    %v2423 = vsel %vm1547, %v500, 0
    %v2426 = vsel %vm1547, %v1911, 0
    %2428 = vmatprep.subr.bf16.mxu0 0
    %2429 = vmatpush1.bf16.xpose.msra.mxu0 0
    %2430 = vmatprep.subr.bf16.mxu0 0
    %2431 = vmatpush1.bf16.xpose.msra.mxu0 0
    %2432 = vmatprep.subr.bf16.mxu0 0
    %2433 = vmatpush1.bf16.xpose.msra.mxu0 0
    %2434 = vmatprep.subr.bf16.mxu0 0
    %2435 = vmatpush1.bf16.xpose.msra.mxu0 0
    %2436 = vmatprep.subr.bf16.mxu0 0
    %2437 = vmatpush1.bf16.xpose.msra.mxu0 0
    %2438 = vmatprep.subr.bf16.mxu0 0
    %2439 = vmatpush1.bf16.xpose.msra.mxu0 0
    %2440 = vmatprep.subr.bf16.mxu0 0
    %2441 = vmatpush1.bf16.xpose.msra.mxu0 0
    %2442 = vmatprep.subr.bf16.mxu0 0
    %2443 = vmatpush1.bf16.xpose.msra.mxu0 %v2426
    %2444 = vmatprep.subr.bf16.mxu0 0
    %2445 = vmatpush2.bf16.xpose.msra.mxu0 0
    %2446 = vmatprep.subr.bf16.mxu0 0
    %2447 = vmatpush2.bf16.xpose.msra.mxu0 0
    %2448 = vmatprep.subr.bf16.mxu0 0
    %2449 = vmatpush2.bf16.xpose.msra.mxu0 0
    %2450 = vmatprep.subr.bf16.mxu0 0
    %2451 = vmatpush2.bf16.xpose.msra.mxu0 0
    %2452 = vmatprep.subr.bf16.mxu0 0
    %2453 = vmatpush2.bf16.xpose.msra.mxu0 0
    %2454 = vmatprep.subr.bf16.mxu0 0
    %2455 = vmatpush2.bf16.xpose.msra.mxu0 0
    %2456 = vmatprep.subr.bf16.mxu0 0
    %2457 = vmatpush2.bf16.xpose.msra.mxu0 0
    %2458 = vmatprep.subr.bf16.mxu0 0
    %2459 = vmatpush2.bf16.xpose.msra.mxu0 0
    %2460 = vmatprep.mubr.bf16.mxu0 0
    %2461 = vmatmul.mubr.bf16.gmra.mxu0 %v2423
    %v2462 = vpop.f32.mrf.mxu0
    %v2463 = vadd.f32 0.0, %v2462
    %v2464 = vpop.f32.mrf.mxu0
    %v2465 = vpop.f32.mrf.mxu0
    %v2466 = vpop.f32.mrf.mxu0
    %2467 = vdwg.mxu0
    %v2469 = vsel %vm1547, %v501, 0
    %v2472 = vsel %vm1547, %v1912, 0
    %2474 = vmatprep.subr.bf16.mxu0 0
    %2475 = vmatpush1.bf16.xpose.msra.mxu0 0
    %2476 = vmatprep.subr.bf16.mxu0 0
    %2477 = vmatpush1.bf16.xpose.msra.mxu0 0
    %2478 = vmatprep.subr.bf16.mxu0 0
    %2479 = vmatpush1.bf16.xpose.msra.mxu0 0
    %2480 = vmatprep.subr.bf16.mxu0 0
    %2481 = vmatpush1.bf16.xpose.msra.mxu0 0
    %2482 = vmatprep.subr.bf16.mxu0 0
    %2483 = vmatpush1.bf16.xpose.msra.mxu0 0
    %2484 = vmatprep.subr.bf16.mxu0 0
    %2485 = vmatpush1.bf16.xpose.msra.mxu0 0
    %2486 = vmatprep.subr.bf16.mxu0 0
    %2487 = vmatpush1.bf16.xpose.msra.mxu0 0
    %2488 = vmatprep.subr.bf16.mxu0 0
    %2489 = vmatpush1.bf16.xpose.msra.mxu0 %v2472
    %2490 = vmatprep.subr.bf16.mxu0 0
    %2491 = vmatpush2.bf16.xpose.msra.mxu0 0
    %2492 = vmatprep.subr.bf16.mxu0 0
    %2493 = vmatpush2.bf16.xpose.msra.mxu0 0
    %2494 = vmatprep.subr.bf16.mxu0 0
    %2495 = vmatpush2.bf16.xpose.msra.mxu0 0
    %2496 = vmatprep.subr.bf16.mxu0 0
    %2497 = vmatpush2.bf16.xpose.msra.mxu0 0
    %2498 = vmatprep.subr.bf16.mxu0 0
    %2499 = vmatpush2.bf16.xpose.msra.mxu0 0
    %2500 = vmatprep.subr.bf16.mxu0 0
    %2501 = vmatpush2.bf16.xpose.msra.mxu0 0
    %2502 = vmatprep.subr.bf16.mxu0 0
    %2503 = vmatpush2.bf16.xpose.msra.mxu0 0
    %2504 = vmatprep.subr.bf16.mxu0 0
    %2505 = vmatpush2.bf16.xpose.msra.mxu0 0
    %2506 = vmatprep.mubr.bf16.mxu0 0
    %2507 = vmatmul.mubr.bf16.gmra.mxu0 %v2469
    %v2508 = vpop.f32.mrf.mxu0
    %v2509 = vadd.f32 0.0, %v2508
    %v2510 = vpop.f32.mrf.mxu0
    %v2511 = vpop.f32.mrf.mxu0
    %v2512 = vpop.f32.mrf.mxu0
    %2513 = vdwg.mxu0
    %v2515 = vsel %vm1547, %v502, 0
    %v2518 = vsel %vm1547, %v1913, 0
    %2520 = vmatprep.subr.bf16.mxu0 0
    %2521 = vmatpush1.bf16.xpose.msra.mxu0 0
    %2522 = vmatprep.subr.bf16.mxu0 0
    %2523 = vmatpush1.bf16.xpose.msra.mxu0 0
    %2524 = vmatprep.subr.bf16.mxu0 0
    %2525 = vmatpush1.bf16.xpose.msra.mxu0 0
    %2526 = vmatprep.subr.bf16.mxu0 0
    %2527 = vmatpush1.bf16.xpose.msra.mxu0 0
    %2528 = vmatprep.subr.bf16.mxu0 0
    %2529 = vmatpush1.bf16.xpose.msra.mxu0 0
    %2530 = vmatprep.subr.bf16.mxu0 0
    %2531 = vmatpush1.bf16.xpose.msra.mxu0 0
    %2532 = vmatprep.subr.bf16.mxu0 0
    %2533 = vmatpush1.bf16.xpose.msra.mxu0 0
    %2534 = vmatprep.subr.bf16.mxu0 0
    %2535 = vmatpush1.bf16.xpose.msra.mxu0 %v2518
    %2536 = vmatprep.subr.bf16.mxu0 0
    %2537 = vmatpush2.bf16.xpose.msra.mxu0 0
    %2538 = vmatprep.subr.bf16.mxu0 0
    %2539 = vmatpush2.bf16.xpose.msra.mxu0 0
    %2540 = vmatprep.subr.bf16.mxu0 0
    %2541 = vmatpush2.bf16.xpose.msra.mxu0 0
    %2542 = vmatprep.subr.bf16.mxu0 0
    %2543 = vmatpush2.bf16.xpose.msra.mxu0 0
    %2544 = vmatprep.subr.bf16.mxu0 0
    %2545 = vmatpush2.bf16.xpose.msra.mxu0 0
    %2546 = vmatprep.subr.bf16.mxu0 0
    %2547 = vmatpush2.bf16.xpose.msra.mxu0 0
    %2548 = vmatprep.subr.bf16.mxu0 0
    %2549 = vmatpush2.bf16.xpose.msra.mxu0 0
    %2550 = vmatprep.subr.bf16.mxu0 0
    %2551 = vmatpush2.bf16.xpose.msra.mxu0 0
    %2552 = vmatprep.mubr.bf16.mxu0 0
    %2553 = vmatmul.mubr.bf16.gmra.mxu0 %v2515
    %v2554 = vpop.f32.mrf.mxu0
    %v2555 = vadd.f32 0.0, %v2554
    %v2556 = vpop.f32.mrf.mxu0
    %v2557 = vpop.f32.mrf.mxu0
    %v2558 = vpop.f32.mrf.mxu0
    %2559 = vdwg.mxu0
    %v2561 = vsel %vm1547, %v503, 0
    %v2564 = vsel %vm1547, %v1914, 0
    %2566 = vmatprep.subr.bf16.mxu0 0
    %2567 = vmatpush1.bf16.xpose.msra.mxu0 0
    %2568 = vmatprep.subr.bf16.mxu0 0
    %2569 = vmatpush1.bf16.xpose.msra.mxu0 0
    %2570 = vmatprep.subr.bf16.mxu0 0
    %2571 = vmatpush1.bf16.xpose.msra.mxu0 0
    %2572 = vmatprep.subr.bf16.mxu0 0
    %2573 = vmatpush1.bf16.xpose.msra.mxu0 0
    %2574 = vmatprep.subr.bf16.mxu0 0
    %2575 = vmatpush1.bf16.xpose.msra.mxu0 0
    %2576 = vmatprep.subr.bf16.mxu0 0
    %2577 = vmatpush1.bf16.xpose.msra.mxu0 0
    %2578 = vmatprep.subr.bf16.mxu0 0
    %2579 = vmatpush1.bf16.xpose.msra.mxu0 0
    %2580 = vmatprep.subr.bf16.mxu0 0
    %2581 = vmatpush1.bf16.xpose.msra.mxu0 %v2564
    %2582 = vmatprep.subr.bf16.mxu0 0
    %2583 = vmatpush2.bf16.xpose.msra.mxu0 0
    %2584 = vmatprep.subr.bf16.mxu0 0
    %2585 = vmatpush2.bf16.xpose.msra.mxu0 0
    %2586 = vmatprep.subr.bf16.mxu0 0
    %2587 = vmatpush2.bf16.xpose.msra.mxu0 0
    %2588 = vmatprep.subr.bf16.mxu0 0
    %2589 = vmatpush2.bf16.xpose.msra.mxu0 0
    %2590 = vmatprep.subr.bf16.mxu0 0
    %2591 = vmatpush2.bf16.xpose.msra.mxu0 0
    %2592 = vmatprep.subr.bf16.mxu0 0
    %2593 = vmatpush2.bf16.xpose.msra.mxu0 0
    %2594 = vmatprep.subr.bf16.mxu0 0
    %2595 = vmatpush2.bf16.xpose.msra.mxu0 0
    %2596 = vmatprep.subr.bf16.mxu0 0
    %2597 = vmatpush2.bf16.xpose.msra.mxu0 0
    %2598 = vmatprep.mubr.bf16.mxu0 0
    %2599 = vmatmul.mubr.bf16.gmra.mxu0 %v2561
    %v2600 = vpop.f32.mrf.mxu0
    %v2601 = vadd.f32 0.0, %v2600
    %v2602 = vpop.f32.mrf.mxu0
    %v2603 = vpop.f32.mrf.mxu0
    %v2604 = vpop.f32.mrf.mxu0
    %2605 = vdwg.mxu0
    %v2607 = vsel %vm1547, %v504, 0
    %v2610 = vsel %vm1547, %v1915, 0
    %2612 = vmatprep.subr.bf16.mxu0 0
    %2613 = vmatpush1.bf16.xpose.msra.mxu0 0
    %2614 = vmatprep.subr.bf16.mxu0 0
    %2615 = vmatpush1.bf16.xpose.msra.mxu0 0
    %2616 = vmatprep.subr.bf16.mxu0 0
    %2617 = vmatpush1.bf16.xpose.msra.mxu0 0
    %2618 = vmatprep.subr.bf16.mxu0 0
    %2619 = vmatpush1.bf16.xpose.msra.mxu0 0
    %2620 = vmatprep.subr.bf16.mxu0 0
    %2621 = vmatpush1.bf16.xpose.msra.mxu0 0
    %2622 = vmatprep.subr.bf16.mxu0 0
    %2623 = vmatpush1.bf16.xpose.msra.mxu0 0
    %2624 = vmatprep.subr.bf16.mxu0 0
    %2625 = vmatpush1.bf16.xpose.msra.mxu0 0
    %2626 = vmatprep.subr.bf16.mxu0 0
    %2627 = vmatpush1.bf16.xpose.msra.mxu0 %v2610
    %2628 = vmatprep.subr.bf16.mxu0 0
    %2629 = vmatpush2.bf16.xpose.msra.mxu0 0
    %2630 = vmatprep.subr.bf16.mxu0 0
    %2631 = vmatpush2.bf16.xpose.msra.mxu0 0
    %2632 = vmatprep.subr.bf16.mxu0 0
    %2633 = vmatpush2.bf16.xpose.msra.mxu0 0
    %2634 = vmatprep.subr.bf16.mxu0 0
    %2635 = vmatpush2.bf16.xpose.msra.mxu0 0
    %2636 = vmatprep.subr.bf16.mxu0 0
    %2637 = vmatpush2.bf16.xpose.msra.mxu0 0
    %2638 = vmatprep.subr.bf16.mxu0 0
    %2639 = vmatpush2.bf16.xpose.msra.mxu0 0
    %2640 = vmatprep.subr.bf16.mxu0 0
    %2641 = vmatpush2.bf16.xpose.msra.mxu0 0
    %2642 = vmatprep.subr.bf16.mxu0 0
    %2643 = vmatpush2.bf16.xpose.msra.mxu0 0
    %2644 = vmatprep.mubr.bf16.mxu0 0
    %2645 = vmatmul.mubr.bf16.gmra.mxu0 %v2607
    %v2646 = vpop.f32.mrf.mxu0
    %v2647 = vadd.f32 0.0, %v2646
    %v2648 = vpop.f32.mrf.mxu0
    %v2649 = vpop.f32.mrf.mxu0
    %v2650 = vpop.f32.mrf.mxu0
    %2651 = vdwg.mxu0
    %2652 = vxpose.xlu0.b32.start [1/16] %v1957, 128
    %2653 = vxpose.xlu0.b32.cont [2/16] %v2003, 128
    %2654 = vxpose.xlu0.b32.cont [3/16] %v2049, 128
    %2655 = vxpose.xlu0.b32.cont [4/16] %v2095, 128
    %2656 = vxpose.xlu0.b32.cont [5/16] %v2141, 128
    %2657 = vxpose.xlu0.b32.cont [6/16] %v2187, 128
    %2658 = vxpose.xlu0.b32.cont [7/16] %v2233, 128
    %2659 = vxpose.xlu0.b32.cont [8/16] %v2279, 128
    %2660 = vxpose.xlu0.b32.cont [9/16] 0.0, 128
    %2661 = vxpose.xlu0.b32.cont [10/16] 0.0, 128
    %2662 = vxpose.xlu0.b32.cont [11/16] 0.0, 128
    %2663 = vxpose.xlu0.b32.cont [12/16] 0.0, 128
    %2664 = vxpose.xlu0.b32.cont [13/16] 0.0, 128
    %2665 = vxpose.xlu0.b32.cont [14/16] 0.0, 128
    %2666 = vxpose.xlu0.b32.cont [15/16] 0.0, 128
    %2667 = vxpose.xlu0.b32.end [16/16] 0.0, 128
    %v2668 = vpop.trf.xlu0
    %v2669 = vpop.trf.xlu0
    %v2670 = vpop.trf.xlu0
    %v2671 = vpop.trf.xlu0
    %v2672 = vpop.trf.xlu0
    %v2673 = vpop.trf.xlu0
    %v2674 = vpop.trf.xlu0
    %v2675 = vpop.trf.xlu0
    %v2676 = vpop.trf.xlu0
    %v2677 = vpop.trf.xlu0
    %v2678 = vpop.trf.xlu0
    %v2679 = vpop.trf.xlu0
    %v2680 = vpop.trf.xlu0
    %v2681 = vpop.trf.xlu0
    %v2682 = vpop.trf.xlu0
    %v2683 = vpop.trf.xlu0
    %2684 = vxpose.xlu0.b32.start [1/16] %v2325, 128
    %2685 = vxpose.xlu0.b32.cont [2/16] %v2371, 128
    %2686 = vxpose.xlu0.b32.cont [3/16] %v2417, 128
    %2687 = vxpose.xlu0.b32.cont [4/16] %v2463, 128
    %2688 = vxpose.xlu0.b32.cont [5/16] %v2509, 128
    %2689 = vxpose.xlu0.b32.cont [6/16] %v2555, 128
    %2690 = vxpose.xlu0.b32.cont [7/16] %v2601, 128
    %2691 = vxpose.xlu0.b32.cont [8/16] %v2647, 128
    %2692 = vxpose.xlu0.b32.cont [9/16] 0.0, 128
    %2693 = vxpose.xlu0.b32.cont [10/16] 0.0, 128
    %2694 = vxpose.xlu0.b32.cont [11/16] 0.0, 128
    %2695 = vxpose.xlu0.b32.cont [12/16] 0.0, 128
    %2696 = vxpose.xlu0.b32.cont [13/16] 0.0, 128
    %2697 = vxpose.xlu0.b32.cont [14/16] 0.0, 128
    %2698 = vxpose.xlu0.b32.cont [15/16] 0.0, 128
    %2699 = vxpose.xlu0.b32.end [16/16] 0.0, 128
    %v2700 = vpop.trf.xlu0
    %v2701 = vpop.trf.xlu0
    %v2702 = vpop.trf.xlu0
    %v2703 = vpop.trf.xlu0
    %v2704 = vpop.trf.xlu0
    %v2705 = vpop.trf.xlu0
    %v2706 = vpop.trf.xlu0
    %v2707 = vpop.trf.xlu0
    %v2708 = vpop.trf.xlu0
    %v2709 = vpop.trf.xlu0
    %v2710 = vpop.trf.xlu0
    %v2711 = vpop.trf.xlu0
    %v2712 = vpop.trf.xlu0
    %v2713 = vpop.trf.xlu0
    %v2714 = vpop.trf.xlu0
    %v2715 = vpop.trf.xlu0
    %v2716 = vpack.c.bf16 %v2669, %v2668
    %v2717 = vpack.c.bf16 %v2701, %v2700
    %v2718 = vlaneseq
    %v2719 = vshrl.u32 %v2718, 7
    %v2720 = vsub.s32 2, %v2719
    %v2721 = vrot.slane %v113, %v2720
    %v2730 = vunpack.c.l.b16 %v114
    %v2731 = vunpack.c.l.b16 %v115
    %v2732 = vunpack.c.l.b16 %v116
    %v2733 = vunpack.c.l.b16 %v117
    %v2734 = vunpack.c.l.b16 %v118
    %v2735 = vunpack.c.l.b16 %v119
    %v2736 = vunpack.c.l.b16 %v120
    %v2737 = vunpack.c.l.b16 %v121
    %v2738 = vpack.c.b16 %v2731, %v2730
    %v2739 = vpack.c.b16 %v2733, %v2732
    %v2740 = vpack.c.b16 %v2735, %v2734
    %v2741 = vpack.c.b16 %v2737, %v2736
    %v2747 = vsel %vm138, %v2716, 0
    %v2750 = vsel %vm138, %v2717, 0
    %2752 = vmatprep.subr.bf16.mxu0 0
    %2753 = vmatpush1.bf16.msra.mxu0 0
    %2754 = vmatprep.subr.bf16.mxu0 0
    %2755 = vmatpush1.bf16.msra.mxu0 0
    %2756 = vmatprep.subr.bf16.mxu0 0
    %2757 = vmatpush1.bf16.msra.mxu0 0
    %2758 = vmatprep.subr.bf16.mxu0 0
    %2759 = vmatpush1.bf16.msra.mxu0 0
    %2760 = vmatprep.subr.bf16.mxu0 0
    %2761 = vmatpush1.bf16.msra.mxu0 %v2741
    %2762 = vmatprep.subr.bf16.mxu0 0
    %2763 = vmatpush1.bf16.msra.mxu0 %v2740
    %2764 = vmatprep.subr.bf16.mxu0 0
    %2765 = vmatpush1.bf16.msra.mxu0 %v2739
    %2766 = vmatprep.subr.bf16.mxu0 0
    %2767 = vmatpush1.bf16.msra.mxu0 %v2738
    %2768 = vmatprep.subr.bf16.mxu0 0
    %2769 = vmatpush2.bf16.msra.mxu0 0
    %2770 = vmatprep.subr.bf16.mxu0 0
    %2771 = vmatpush2.bf16.msra.mxu0 0
    %2772 = vmatprep.subr.bf16.mxu0 0
    %2773 = vmatpush2.bf16.msra.mxu0 0
    %2774 = vmatprep.subr.bf16.mxu0 0
    %2775 = vmatpush2.bf16.msra.mxu0 0
    %2776 = vmatprep.subr.bf16.mxu0 0
    %2777 = vmatpush2.bf16.msra.mxu0 0
    %2778 = vmatprep.subr.bf16.mxu0 0
    %2779 = vmatpush2.bf16.msra.mxu0 0
    %2780 = vmatprep.subr.bf16.mxu0 0
    %2781 = vmatpush2.bf16.msra.mxu0 0
    %2782 = vmatprep.subr.bf16.mxu0 0
    %2783 = vmatpush2.bf16.msra.mxu0 0
    %2784 = vmatprep.mubr.bf16.mxu0 0
    %2785 = vmatmul.mubr.bf16.gmra.mxu0 %v2747
    %v2786 = vpop.f32.mrf.mxu0
    %v2787 = vadd.f32 %v2721, %v2786
    %v2788 = vpop.f32.mrf.mxu0
    %v2789 = vpop.f32.mrf.mxu0
    %v2790 = vadd.f32 %v2721, %v2789
    %v2791 = vpop.f32.mrf.mxu0
    %2792 = vmatprep.mubr.bf16.mxu0 0
    %2793 = vmatmul.mubr.bf16.gmra.mxu0 %v2750
    %v2794 = vpop.f32.mrf.mxu0
    %v2795 = vadd.f32 %v2721, %v2794
    %v2796 = vpop.f32.mrf.mxu0
    %v2797 = vpop.f32.mrf.mxu0
    %v2798 = vadd.f32 %v2721, %v2797
    %v2799 = vpop.f32.mrf.mxu0
    %2800 = vdwg.mxu0
    %v2801 = vadd.f32 %v2787, %v65
    %v2802 = vadd.f32 %v2790, %v66
    %v2803 = vadd.f32 %v2795, %v97
    %v2804 = vadd.f32 %v2798, %v98
    %v2805 = vsel %vm138, %v2801, 0.0
    %2806 = vadd.xlane.f32.xlu0 %v2805
    %v2807 = vpop.xlane.xlu0 %2806
    %v2808 = vsel %vm138, %v2802, 0.0
    %2809 = vadd.xlane.f32.xlu0 %v2808
    %v2810 = vpop.xlane.xlu0 %2809
    %v2811 = vsel %vm138, %v2803, 0.0
    %2812 = vadd.xlane.f32.xlu0 %v2811
    %v2813 = vpop.xlane.xlu0 %2812
    %v2814 = vsel %vm138, %v2804, 0.0
    %2815 = vadd.xlane.f32.xlu0 %v2814
    %v2816 = vpop.xlane.xlu0 %2815
    %v2817 = vmul.f32 %v2807, %v151
    %v2818 = vmul.f32 %v2810, %v151
    %v2819 = vmul.f32 %v2813, %v151
    %v2820 = vmul.f32 %v2816, %v151
    %v2821 = vsub.f32 %v2801, %v2817
    %v2822 = vsub.f32 %v2802, %v2818
    %v2823 = vsub.f32 %v2803, %v2819
    %v2824 = vsub.f32 %v2804, %v2820
    %v2825 = vmul.f32 %v2821, %v2821
    %v2826 = vmul.f32 %v2822, %v2822
    %v2827 = vmul.f32 %v2823, %v2823
    %v2828 = vmul.f32 %v2824, %v2824
    %v2829 = vsel %vm138, %v2825, 0.0
    %2830 = vadd.xlane.f32.xlu0 %v2829
    %v2831 = vpop.xlane.xlu0 %2830
    %v2832 = vsel %vm138, %v2826, 0.0
    %2833 = vadd.xlane.f32.xlu0 %v2832
    %v2834 = vpop.xlane.xlu0 %2833
    %v2835 = vsel %vm138, %v2827, 0.0
    %2836 = vadd.xlane.f32.xlu0 %v2835
    %v2837 = vpop.xlane.xlu0 %2836
    %v2838 = vsel %vm138, %v2828, 0.0
    %2839 = vadd.xlane.f32.xlu0 %v2838
    %v2840 = vpop.xlane.xlu0 %2839
    %v2841 = vmul.f32 %v2831, %v151
    %v2842 = vmul.f32 %v2834, %v151
    %v2843 = vmul.f32 %v2837, %v151
    %v2844 = vmul.f32 %v2840, %v151
    %v2845 = vadd.f32 %v2841, 1e-05
    %v2846 = vadd.f32 %v2842, 1e-05
    %v2847 = vadd.f32 %v2843, 1e-05
    %v2848 = vadd.f32 %v2844, 1e-05
    %v2849 = vrsqrt.pop %v2845
    %v2850 = vrsqrt.pop %v2846
    %v2851 = vrsqrt.pop %v2847
    %v2852 = vrsqrt.pop %v2848
    %v2853 = vmul.f32 %v2821, %v2849
    %v2854 = vmul.f32 %v2822, %v2850
    %v2855 = vmul.f32 %v2823, %v2851
    %v2856 = vmul.f32 %v2824, %v2852
    %v2857 = vlaneseq
    %v2858 = vshrl.u32 %v2857, 7
    %v2859 = vsub.s32 3, %v2858
    %v2860 = vrot.slane %v113, %v2859
    %v2861 = vmul.f32 %v2853, %v2860
    %v2862 = vmul.f32 %v2854, %v2860
    %v2863 = vmul.f32 %v2855, %v2860
    %v2864 = vmul.f32 %v2856, %v2860
    %v2865 = vlaneseq
    %v2866 = vshrl.u32 %v2865, 7
    %v2867 = vsub.s32 4, %v2866
    %v2868 = vrot.slane %v113, %v2867
    %v2869 = vadd.f32 %v2861, %v2868
    %v2870 = vadd.f32 %v2862, %v2868
    %v2871 = vadd.f32 %v2863, %v2868
    %v2872 = vadd.f32 %v2864, %v2868
    %v2873 = vpack.c.bf16 %v2870, %v2869
    %v2874 = vpack.c.bf16 %v2872, %v2871
    %v2875 = vlaneseq
    %v2876 = vshrl.u32 %v2875, 7
    %v2877 = vsub.s32 5, %v2876
    %v2878 = vrot.slane %v113, %v2877
    %v2887 = vunpack.c.l.b16 %v122
    %v2888 = vunpack.c.l.b16 %v123
    %v2889 = vunpack.c.l.b16 %v124
    %v2890 = vunpack.c.l.b16 %v125
    %v2891 = vunpack.c.l.b16 %v126
    %v2892 = vunpack.c.l.b16 %v127
    %v2893 = vunpack.c.l.b16 %v128
    %v2894 = vunpack.c.l.b16 %v129
    %v2895 = vpack.c.b16 %v2888, %v2887
    %v2896 = vpack.c.b16 %v2890, %v2889
    %v2897 = vpack.c.b16 %v2892, %v2891
    %v2898 = vpack.c.b16 %v2894, %v2893
    %v2904 = vsel %vm138, %v2873, 0
    %v2907 = vsel %vm138, %v2874, 0
    %2909 = vmatprep.subr.bf16.mxu0 0
    %2910 = vmatpush1.bf16.msra.mxu0 0
    %2911 = vmatprep.subr.bf16.mxu0 0
    %2912 = vmatpush1.bf16.msra.mxu0 0
    %2913 = vmatprep.subr.bf16.mxu0 0
    %2914 = vmatpush1.bf16.msra.mxu0 0
    %2915 = vmatprep.subr.bf16.mxu0 0
    %2916 = vmatpush1.bf16.msra.mxu0 0
    %2917 = vmatprep.subr.bf16.mxu0 0
    %2918 = vmatpush1.bf16.msra.mxu0 %v2898
    %2919 = vmatprep.subr.bf16.mxu0 0
    %2920 = vmatpush1.bf16.msra.mxu0 %v2897
    %2921 = vmatprep.subr.bf16.mxu0 0
    %2922 = vmatpush1.bf16.msra.mxu0 %v2896
    %2923 = vmatprep.subr.bf16.mxu0 0
    %2924 = vmatpush1.bf16.msra.mxu0 %v2895
    %2925 = vmatprep.subr.bf16.mxu0 0
    %2926 = vmatpush2.bf16.msra.mxu0 0
    %2927 = vmatprep.subr.bf16.mxu0 0
    %2928 = vmatpush2.bf16.msra.mxu0 0
    %2929 = vmatprep.subr.bf16.mxu0 0
    %2930 = vmatpush2.bf16.msra.mxu0 0
    %2931 = vmatprep.subr.bf16.mxu0 0
    %2932 = vmatpush2.bf16.msra.mxu0 0
    %2933 = vmatprep.subr.bf16.mxu0 0
    %2934 = vmatpush2.bf16.msra.mxu0 0
    %2935 = vmatprep.subr.bf16.mxu0 0
    %2936 = vmatpush2.bf16.msra.mxu0 0
    %2937 = vmatprep.subr.bf16.mxu0 0
    %2938 = vmatpush2.bf16.msra.mxu0 0
    %2939 = vmatprep.subr.bf16.mxu0 0
    %2940 = vmatpush2.bf16.msra.mxu0 0
    %2941 = vmatprep.mubr.bf16.mxu0 0
    %2942 = vmatmul.mubr.bf16.gmra.mxu0 %v2904
    %v2943 = vpop.f32.mrf.mxu0
    %v2944 = vadd.f32 %v2878, %v2943
    %v2945 = vpop.f32.mrf.mxu0
    %v2946 = vpop.f32.mrf.mxu0
    %v2947 = vadd.f32 %v2878, %v2946
    %v2948 = vpop.f32.mrf.mxu0
    %2949 = vmatprep.mubr.bf16.mxu0 0
    %2950 = vmatmul.mubr.bf16.gmra.mxu0 %v2907
    %v2951 = vpop.f32.mrf.mxu0
    %v2952 = vadd.f32 %v2878, %v2951
    %v2953 = vpop.f32.mrf.mxu0
    %v2954 = vpop.f32.mrf.mxu0
    %v2955 = vadd.f32 %v2878, %v2954
    %v2956 = vpop.f32.mrf.mxu0
    %2957 = vdwg.mxu0
    %v2958 = vmul.f32 %v2944, 0.5
    %v2959 = vmul.f32 %v2947, 0.5
    %v2960 = vmul.f32 %v2952, 0.5
    %v2961 = vmul.f32 %v2955, 0.5
    %v2962 = vmul.f32 %v2944, 0.70710677
    %v2963 = vmul.f32 %v2947, 0.70710677
    %v2964 = vmul.f32 %v2952, 0.70710677
    %v2965 = vmul.f32 %v2955, 0.70710677
    %v2966 = verf.f32.pop %v2962
    %v2967 = verf.f32.pop %v2963
    %v2968 = verf.f32.pop %v2964
    %v2969 = verf.f32.pop %v2965
    %v2970 = vadd.f32 %v2966, 1.0
    %v2971 = vadd.f32 %v2967, 1.0
    %v2972 = vadd.f32 %v2968, 1.0
    %v2973 = vadd.f32 %v2969, 1.0
    %v2974 = vmul.f32 %v2958, %v2970
    %v2975 = vmul.f32 %v2959, %v2971
    %v2976 = vmul.f32 %v2960, %v2972
    %v2977 = vmul.f32 %v2961, %v2973
    %v2978 = vpack.c.bf16 %v2975, %v2974
    %v2979 = vpack.c.bf16 %v2977, %v2976
    %v2980 = vlaneseq
    %v2981 = vshrl.u32 %v2980, 7
    %v2982 = vsub.s32 6, %v2981
    %v2983 = vrot.slane %v113, %v2982
    %v2992 = vunpack.c.l.b16 %v130
    %v2993 = vunpack.c.l.b16 %v131
    %v2994 = vunpack.c.l.b16 %v132
    %v2995 = vunpack.c.l.b16 %v133
    %v2996 = vunpack.c.l.b16 %v134
    %v2997 = vunpack.c.l.b16 %v135
    %v2998 = vunpack.c.l.b16 %v136
    %v2999 = vunpack.c.l.b16 %v137
    %v3000 = vpack.c.b16 %v2993, %v2992
    %v3001 = vpack.c.b16 %v2995, %v2994
    %v3002 = vpack.c.b16 %v2997, %v2996
    %v3003 = vpack.c.b16 %v2999, %v2998
    %v3009 = vsel %vm138, %v2978, 0
    %v3012 = vsel %vm138, %v2979, 0
    %3014 = vmatprep.subr.bf16.mxu0 0
    %3015 = vmatpush1.bf16.msra.mxu0 0
    %3016 = vmatprep.subr.bf16.mxu0 0
    %3017 = vmatpush1.bf16.msra.mxu0 0
    %3018 = vmatprep.subr.bf16.mxu0 0
    %3019 = vmatpush1.bf16.msra.mxu0 0
    %3020 = vmatprep.subr.bf16.mxu0 0
    %3021 = vmatpush1.bf16.msra.mxu0 0
    %3022 = vmatprep.subr.bf16.mxu0 0
    %3023 = vmatpush1.bf16.msra.mxu0 %v3003
    %3024 = vmatprep.subr.bf16.mxu0 0
    %3025 = vmatpush1.bf16.msra.mxu0 %v3002
    %3026 = vmatprep.subr.bf16.mxu0 0
    %3027 = vmatpush1.bf16.msra.mxu0 %v3001
    %3028 = vmatprep.subr.bf16.mxu0 0
    %3029 = vmatpush1.bf16.msra.mxu0 %v3000
    %3030 = vmatprep.subr.bf16.mxu0 0
    %3031 = vmatpush2.bf16.msra.mxu0 0
    %3032 = vmatprep.subr.bf16.mxu0 0
    %3033 = vmatpush2.bf16.msra.mxu0 0
    %3034 = vmatprep.subr.bf16.mxu0 0
    %3035 = vmatpush2.bf16.msra.mxu0 0
    %3036 = vmatprep.subr.bf16.mxu0 0
    %3037 = vmatpush2.bf16.msra.mxu0 0
    %3038 = vmatprep.subr.bf16.mxu0 0
    %3039 = vmatpush2.bf16.msra.mxu0 0
    %3040 = vmatprep.subr.bf16.mxu0 0
    %3041 = vmatpush2.bf16.msra.mxu0 0
    %3042 = vmatprep.subr.bf16.mxu0 0
    %3043 = vmatpush2.bf16.msra.mxu0 0
    %3044 = vmatprep.subr.bf16.mxu0 0
    %3045 = vmatpush2.bf16.msra.mxu0 0
    %3046 = vmatprep.mubr.bf16.mxu0 0
    %3047 = vmatmul.mubr.bf16.gmra.mxu0 %v3009
    %v3048 = vpop.f32.mrf.mxu0
    %v3049 = vadd.f32 %v2983, %v3048
    %v3050 = vpop.f32.mrf.mxu0
    %v3051 = vpop.f32.mrf.mxu0
    %v3052 = vadd.f32 %v2983, %v3051
    %v3053 = vpop.f32.mrf.mxu0
    %3054 = vmatprep.mubr.bf16.mxu0 0
    %3055 = vmatmul.mubr.bf16.gmra.mxu0 %v3012
    %v3056 = vpop.f32.mrf.mxu0
    %v3057 = vadd.f32 %v2983, %v3056
    %v3058 = vpop.f32.mrf.mxu0
    %v3059 = vpop.f32.mrf.mxu0
    %v3060 = vadd.f32 %v2983, %v3059
    %v3061 = vpop.f32.mrf.mxu0
    %3062 = vdwg.mxu0
    %v3063 = vadd.f32 %v3049, %v2801
    %v3064 = vadd.f32 %v3052, %v2802
    %v3065 = vadd.f32 %v3057, %v2803
    %v3066 = vadd.f32 %v3060, %v2804
    %3067 = vxpose.xlu0.b32.start [1/16] %v3063, 128
    %3068 = vxpose.xlu0.b32.cont [2/16] %v3064, 128
    %3069 = vxpose.xlu0.b32.cont [3/16] 0.0, 128
    %3070 = vxpose.xlu0.b32.cont [4/16] 0.0, 128
    %3071 = vxpose.xlu0.b32.cont [5/16] 0.0, 128
    %3072 = vxpose.xlu0.b32.cont [6/16] 0.0, 128
    %3073 = vxpose.xlu0.b32.cont [7/16] 0.0, 128
    %3074 = vxpose.xlu0.b32.cont [8/16] 0.0, 128
    %3075 = vxpose.xlu0.b32.cont [9/16] 0.0, 128
    %3076 = vxpose.xlu0.b32.cont [10/16] 0.0, 128
    %3077 = vxpose.xlu0.b32.cont [11/16] 0.0, 128
    %3078 = vxpose.xlu0.b32.cont [12/16] 0.0, 128
    %3079 = vxpose.xlu0.b32.cont [13/16] 0.0, 128
    %3080 = vxpose.xlu0.b32.cont [14/16] 0.0, 128
    %3081 = vxpose.xlu0.b32.cont [15/16] 0.0, 128
    %3082 = vxpose.xlu0.b32.end [16/16] 0.0, 128
    %v3083 = vpop.trf.xlu0
    %v3084 = vpop.trf.xlu0
    %v3085 = vpop.trf.xlu0
    %v3086 = vpop.trf.xlu0
    %v3087 = vpop.trf.xlu0
    %v3088 = vpop.trf.xlu0
    %v3089 = vpop.trf.xlu0
    %v3090 = vpop.trf.xlu0
    %v3091 = vpop.trf.xlu0
    %v3092 = vpop.trf.xlu0
    %v3093 = vpop.trf.xlu0
    %v3094 = vpop.trf.xlu0
    %v3095 = vpop.trf.xlu0
    %v3096 = vpop.trf.xlu0
    %v3097 = vpop.trf.xlu0
    %v3098 = vpop.trf.xlu0
    %3099 = vxpose.xlu0.b32.start [1/16] %v3065, 128
    %3100 = vxpose.xlu0.b32.cont [2/16] %v3066, 128
    %3101 = vxpose.xlu0.b32.cont [3/16] 0.0, 128
    %3102 = vxpose.xlu0.b32.cont [4/16] 0.0, 128
    %3103 = vxpose.xlu0.b32.cont [5/16] 0.0, 128
    %3104 = vxpose.xlu0.b32.cont [6/16] 0.0, 128
    %3105 = vxpose.xlu0.b32.cont [7/16] 0.0, 128
    %3106 = vxpose.xlu0.b32.cont [8/16] 0.0, 128
    %3107 = vxpose.xlu0.b32.cont [9/16] 0.0, 128
    %3108 = vxpose.xlu0.b32.cont [10/16] 0.0, 128
    %3109 = vxpose.xlu0.b32.cont [11/16] 0.0, 128
    %3110 = vxpose.xlu0.b32.cont [12/16] 0.0, 128
    %3111 = vxpose.xlu0.b32.cont [13/16] 0.0, 128
    %3112 = vxpose.xlu0.b32.cont [14/16] 0.0, 128
    %3113 = vxpose.xlu0.b32.cont [15/16] 0.0, 128
    %3114 = vxpose.xlu0.b32.end [16/16] 0.0, 128
    %v3115 = vpop.trf.xlu0
    %v3116 = vpop.trf.xlu0
    %v3117 = vpop.trf.xlu0
    %v3118 = vpop.trf.xlu0
    %v3119 = vpop.trf.xlu0
    %v3120 = vpop.trf.xlu0
    %v3121 = vpop.trf.xlu0
    %v3122 = vpop.trf.xlu0
    %v3123 = vpop.trf.xlu0
    %v3124 = vpop.trf.xlu0
    %v3125 = vpop.trf.xlu0
    %v3126 = vpop.trf.xlu0
    %v3127 = vpop.trf.xlu0
    %v3128 = vpop.trf.xlu0
    %v3129 = vpop.trf.xlu0
    %v3130 = vpop.trf.xlu0
    %3131 = vst.msk [vmem:[%s5] sm:$0xff] %vm1547, %v3083
    %3132 = vst.msk [vmem:[%s5 + $0x8] sm:$0xff] %vm1547, %v3084
    %3133 = vst.msk [vmem:[%s5 + $0x10] sm:$0xff] %vm1547, %v3085
    %3134 = vst.msk [vmem:[%s5 + $0x18] sm:$0xff] %vm1547, %v3086
    %3135 = vst.msk [vmem:[%s5 + $0x20] sm:$0xff] %vm1547, %v3087
    %3136 = vst.msk [vmem:[%s5 + $0x28] sm:$0xff] %vm1547, %v3088
    %3137 = vst.msk [vmem:[%s5 + $0x30] sm:$0xff] %vm1547, %v3089
    %3138 = vst.msk [vmem:[%s5 + $0x38] sm:$0xff] %vm1547, %v3090
    %3139 = vst.msk [vmem:[%s5 + $0x40] sm:$0xff] %vm1547, %v3115
    %3140 = vst.msk [vmem:[%s5 + $0x48] sm:$0xff] %vm1547, %v3116
    %3141 = vst.msk [vmem:[%s5 + $0x50] sm:$0xff] %vm1547, %v3117
    %3142 = vst.msk [vmem:[%s5 + $0x58] sm:$0xff] %vm1547, %v3118
    %3143 = vst.msk [vmem:[%s5 + $0x60] sm:$0xff] %vm1547, %v3119
    %3144 = vst.msk [vmem:[%s5 + $0x68] sm:$0xff] %vm1547, %v3120
    %3145 = vst.msk [vmem:[%s5 + $0x70] sm:$0xff] %vm1547, %v3121
    %3146 = vst.msk [vmem:[%s5 + $0x78] sm:$0xff] %vm1547, %v3122
    // Predicated region
    $region26: #{tpu_custom_call.1} parent=1 // pred_check
      _
    $region27: #{tpu_custom_call.1} parent=1 // pred_check_branch
      %3148 = sbr.rel (0) target = $region29
    $region28: #{tpu_custom_call.1} parent=1 // pred_region
      _
    $region29: #{tpu_custom_call.1} parent=1 // pred_fallthru
      _
    // Predicated region
    $region30: #{tpu_custom_call.1} parent=1 // pred_check
      _
    $region31: #{tpu_custom_call.1} parent=1 // pred_check_branch
      %3150 = sbr.rel (0) target = $region33
    $region32: #{tpu_custom_call.1} parent=1 // pred_region
      _
    $region33: #{tpu_custom_call.1} parent=1 // pred_fallthru
      _
    %3151 = vsyncpa [#allocation3], 1

</llo_original>
